<compile_context>
chip_gen: v6e
topology: v6e:2x2x1
jax: 0.10.0
libtpu: 0.0.40
codegen_flags: <defaults>
</compile_context>

<pallas_src>
import jax
import jax.numpy as jnp
from jax.experimental import pallas as pl
from jax.experimental.pallas import tpu as pltpu

LATENT_DIM = 20
IMAGE_SIZE = 784
IMAGE_PAD = 896              # 7 * 128 -> lane-aligned final matmul (padded cols never stored)
NUM_CLASSES = 10
H1 = 512
H2 = 256
MUVAR_DIM = 2 * LATENT_DIM   # fused mu|logvar head width


def _round_up(n, m):
    return ((n + m - 1) // m) * m


def _cvae_kernel(
    x_ref, c_ref, eps_ref,                           # batch-tiled (TB, F) inputs
    w1x_ref, w1c_ref, b1_ref,                        # encoder[0], concat split into x/c parts
    w2_ref, b2_ref,                                  # encoder[2]
    wmulv_ref, bmulv_ref,                            # fused fc_mu | fc_logvar head
    w3z_ref, w3c_ref, b3_ref,                        # decoder[0], concat split into z/c parts
    w4_ref, b4_ref, w5_ref, b5_ref,                  # decoder[2], decoder[4]
    recon_ref, muvar_ref,                            # outputs
):
    f32, bf16 = jnp.float32, jnp.bfloat16

    x = x_ref[...].astype(bf16)
    c = c_ref[...].astype(bf16)

    # ----- encoder -----
    # cat([x, c]) @ W1 + b1  ==  x @ W1x + c @ W1c + b1   (K=10 dot done in-kernel)
    h1 = (jnp.dot(x, w1x_ref[...], preferred_element_type=f32)
          + jnp.dot(c, w1c_ref[...], preferred_element_type=f32)
          + b1_ref[...])
    h1 = jnp.maximum(h1, 0.0)

    h2 = jnp.dot(h1.astype(bf16), w2_ref[...], preferred_element_type=f32) + b2_ref[...]
    h2 = jnp.maximum(h2, 0.0)

    # fused mu/logvar head: one (256, 40) matmul, one store.
    muvar = (jnp.dot(h2.astype(bf16), wmulv_ref[...], preferred_element_type=f32)
             + bmulv_ref[...])
    mu = muvar[:, :LATENT_DIM]
    logvar = muvar[:, LATENT_DIM:]

    # ----- reparameterize (f32) -----
    std = jnp.exp(0.5 * logvar)
    z = mu + eps_ref[...] * std

    # ----- decoder -----
    # cat([z, c]) @ W3 + b3  ==  z @ W3z + c @ W3c + b3
    d1 = (jnp.dot(z.astype(bf16), w3z_ref[...], preferred_element_type=f32)
          + jnp.dot(c, w3c_ref[...], preferred_element_type=f32)
          + b3_ref[...])
    d1 = jnp.maximum(d1, 0.0)

    d2 = jnp.dot(d1.astype(bf16), w4_ref[...], preferred_element_type=f32) + b4_ref[...]
    d2 = jnp.maximum(d2, 0.0)

    logits = jnp.dot(d2.astype(bf16), w5_ref[...], preferred_element_type=f32) + b5_ref[...]

    # Store only the real 784 columns (padded 784..895 never touch HBM).
    recon_ref[...] = jax.nn.sigmoid(logits[:, :IMAGE_SIZE])
    muvar_ref[...] = muvar


def init_params(key):
    """PyTorch-Linear-style init U(-1/sqrt(fan_in), 1/sqrt(fan_in)), repacked for the kernel."""
    def linear(key, fan_in, fan_out):
        kw, kb = jax.random.split(key)
        bound = 1.0 / jnp.sqrt(jnp.float32(fan_in))
        w = jax.random.uniform(kw, (fan_in, fan_out), jnp.float32, -bound, bound)
        b = jax.random.uniform(kb, (1, fan_out), jnp.float32, -bound, bound)
        return w, b

    keys = jax.random.split(key, 7)
    w1, b1 = linear(keys[0], IMAGE_SIZE + NUM_CLASSES, H1)   # encoder[0]
    w2, b2 = linear(keys[1], H1, H2)                         # encoder[2]
    wmu, bmu = linear(keys[2], H2, LATENT_DIM)               # fc_mu
    wlv, blv = linear(keys[3], H2, LATENT_DIM)               # fc_logvar
    w3, b3 = linear(keys[4], LATENT_DIM + NUM_CLASSES, H2)   # decoder[0]
    w4, b4 = linear(keys[5], H2, H1)                         # decoder[2]
    w5, b5 = linear(keys[6], H1, IMAGE_SIZE)                 # decoder[4]

    bf16 = jnp.bfloat16
    # pad the final layer's output dim 784 -> 896 (zero cols; never stored by the kernel)
    w5p = jnp.zeros((H1, IMAGE_PAD), jnp.float32).at[:, :IMAGE_SIZE].set(w5)
    b5p = jnp.zeros((1, IMAGE_PAD), jnp.float32).at[:, :IMAGE_SIZE].set(b5)

    return dict(
        # kernel-resident weights (bf16) and biases (f32)
        w1x=w1[:IMAGE_SIZE].astype(bf16),
        w1c=w1[IMAGE_SIZE:].astype(bf16), b1=b1,
        w2=w2.astype(bf16), b2=b2,
        wmulv=jnp.concatenate([wmu, wlv], axis=1).astype(bf16),
        bmulv=jnp.concatenate([bmu, blv], axis=1),
        w3z=w3[:LATENT_DIM].astype(bf16),
        w3c=w3[LATENT_DIM:].astype(bf16), b3=b3,
        w4=w4.astype(bf16), b4=b4,
        w5=w5p.astype(bf16), b5=b5p,
    )


def _choose_tiling(B):
    """Pick (TB, B_pad, n_tiles): TB <= 512, sublane-aligned, minimal padding.
    For B >= 256 emit >= 2 tiles so v7x megacore shards the batch across both TCs."""
    TB_MAX = 512
    n_tiles = max(1, pl.cdiv(B, TB_MAX))
    if B >= 256:
        n_tiles = max(n_tiles, 2)
    TB = _round_up(pl.cdiv(B, n_tiles), 8)
    return TB, n_tiles * TB, n_tiles


@jax.jit
def cvae_forward(x, c, eps, params):
    """x: (B, 1, 28, 28) NCHW float32; c: (B, 10) one-hot; eps: (B, latent_dim)."""
    B = x.shape[0]
    x_flat = x.reshape(B, IMAGE_SIZE).astype(jnp.float32)
    c = c.astype(jnp.float32)
    eps = eps.astype(jnp.float32)

    TB, B_pad, n_tiles = _choose_tiling(B)
    if B_pad != B:
        pad = ((0, B_pad - B), (0, 0))
        x_flat = jnp.pad(x_flat, pad)
        c = jnp.pad(c, pad)
        eps = jnp.pad(eps, pad)

    grid = (n_tiles,)

    def row_spec(f):
        return pl.BlockSpec((TB, f), lambda i: (i, 0))

    def const_spec(shape):
        return pl.BlockSpec(shape, lambda i: (0, 0))   # resident across the grid

    in_specs = [
        row_spec(IMAGE_SIZE), row_spec(NUM_CLASSES), row_spec(LATENT_DIM),
        const_spec((IMAGE_SIZE, H1)), const_spec((NUM_CLASSES, H1)), const_spec((1, H1)),
        const_spec((H1, H2)), const_spec((1, H2)),
        const_spec((H2, MUVAR_DIM)), const_spec((1, MUVAR_DIM)),
        const_spec((LATENT_DIM, H2)), const_spec((NUM_CLASSES, H2)), const_spec((1, H2)),
        const_spec((H2, H1)), const_spec((1, H1)),
        const_spec((H1, IMAGE_PAD)), const_spec((1, IMAGE_PAD)),
    ]
    out_specs = (row_spec(IMAGE_SIZE), row_spec(MUVAR_DIM))

    recon_pad, muvar = pl.pallas_call(
        _cvae_kernel,
        grid=grid,
        in_specs=in_specs,
        out_specs=out_specs,
        out_shape=(
            jax.ShapeDtypeStruct((B_pad, IMAGE_SIZE), jnp.float32),
            jax.ShapeDtypeStruct((B_pad, MUVAR_DIM), jnp.float32),
        ),
        compiler_params=pltpu.CompilerParams(
            dimension_semantics=("parallel",),                 # shard batch tiles across TCs
            vmem_limit_bytes=(32 << 20) if TB > 256 else (24 << 20),
        ),
    )(
        x_flat, c, eps,
        params["w1x"], params["w1c"], params["b1"],
        params["w2"], params["b2"],
        params["wmulv"], params["bmulv"],
        params["w3z"], params["w3c"], params["b3"],
        params["w4"], params["b4"],
        params["w5"], params["b5"],
    )

    recon_x = recon_pad[:B].reshape(B, 1, 28, 28)   # matches .view(-1, 1, 28, 28); free metadata op
    mu = muvar[:B, :LATENT_DIM]
    logvar = muvar[:B, LATENT_DIM:]
    return recon_x, mu, logvar


def _reference_forward(x, c, eps, params):
    """Plain-JAX reference with identical (bf16-weight, f32-accumulate) numerics."""
    bf16, f32 = jnp.bfloat16, jnp.float32
    B = x.shape[0]
    xf = x.reshape(B, IMAGE_SIZE).astype(bf16)
    cb = c.astype(bf16)
    h1 = jnp.maximum(
        jnp.dot(xf, params["w1x"], preferred_element_type=f32)
        + jnp.dot(cb, params["w1c"], preferred_element_type=f32)
        + params["b1"], 0.0)
    h2 = jnp.maximum(
        jnp.dot(h1.astype(bf16), params["w2"], preferred_element_type=f32) + params["b2"], 0.0)
    muvar = jnp.dot(h2.astype(bf16), params["wmulv"], preferred_element_type=f32) + params["bmulv"]
    mu, logvar = muvar[:, :LATENT_DIM], muvar[:, LATENT_DIM:]
    z = mu + eps * jnp.exp(0.5 * logvar)
    d1 = jnp.maximum(
        jnp.dot(z.astype(bf16), params["w3z"], preferred_element_type=f32)
        + jnp.dot(cb, params["w3c"], preferred_element_type=f32)
        + params["b3"], 0.0)
    d2 = jnp.maximum(
        jnp.dot(d1.astype(bf16), params["w4"], preferred_element_type=f32) + params["b4"], 0.0)
    logits = jnp.dot(d2.astype(bf16), params["w5"], preferred_element_type=f32) + params["b5"]
    recon = jax.nn.sigmoid(logits[:, :IMAGE_SIZE]).reshape(B, 1, 28, 28)
    return recon, mu, logvar


if __name__ == "__main__":
    key = jax.random.PRNGKey(0)
    k_params, k_x, k_lbl, k_eps = jax.random.split(key, 4)

    params = init_params(k_params)

    B = 2
    # synthetic "MNIST" batch: NCHW images in [0, 1] and one-hot labels
    x = jax.random.uniform(k_x, (B, 1, 28, 28), jnp.float32)
    labels = jax.random.randint(k_lbl, (B,), 0, NUM_CLASSES)
    c = jax.nn.one_hot(labels, NUM_CLASSES, dtype=jnp.float32)
    # eps plays the role of torch.randn_like(std) — sampled in glue for determinism
    eps = jax.random.normal(k_eps, (B, LATENT_DIM), jnp.float32)

    recon_x, mu, logvar = cvae_forward(x, c, eps, params)
    jax.block_until_ready((recon_x, mu, logvar))

    # shape / sanity checks
    assert recon_x.shape == (B, 1, 28, 28)
    assert mu.shape == (B, LATENT_DIM)
    assert logvar.shape == (B, LATENT_DIM)
    assert bool(jnp.all(jnp.isfinite(recon_x)))
    assert bool(jnp.all((recon_x >= 0.0) & (recon_x <= 1.0)))

    # numeric check vs. plain-JAX reference (same bf16 weights, f32 accumulation)
    r_ref, mu_ref, lv_ref = _reference_forward(x, c, eps, params)
    assert bool(jnp.allclose(recon_x, r_ref, atol=5e-2))
    assert bool(jnp.allclose(mu, mu_ref, atol=5e-2))
    assert bool(jnp.allclose(logvar, lv_ref, atol=5e-2))

    print("KERNEL_OK")
</pallas_src>

<mosaic_0001>
module attributes {stable_mosaic.version = 11 : i64} {
  func.func @_cvae_kernel(%arg0: i32, %arg1: memref<8x784xf32, #tpu.memory_space<vmem>>, %arg2: memref<8x10xf32, #tpu.memory_space<vmem>>, %arg3: memref<8x20xf32, #tpu.memory_space<vmem>>, %arg4: memref<784x512xbf16, #tpu.memory_space<vmem>>, %arg5: memref<10x512xbf16, #tpu.memory_space<vmem>>, %arg6: memref<1x512xf32, #tpu.memory_space<vmem>>, %arg7: memref<512x256xbf16, #tpu.memory_space<vmem>>, %arg8: memref<1x256xf32, #tpu.memory_space<vmem>>, %arg9: memref<256x40xbf16, #tpu.memory_space<vmem>>, %arg10: memref<1x40xf32, #tpu.memory_space<vmem>>, %arg11: memref<20x256xbf16, #tpu.memory_space<vmem>>, %arg12: memref<10x256xbf16, #tpu.memory_space<vmem>>, %arg13: memref<1x256xf32, #tpu.memory_space<vmem>>, %arg14: memref<256x512xbf16, #tpu.memory_space<vmem>>, %arg15: memref<1x512xf32, #tpu.memory_space<vmem>>, %arg16: memref<512x896xbf16, #tpu.memory_space<vmem>>, %arg17: memref<1x896xf32, #tpu.memory_space<vmem>>, %arg18: memref<8x784xf32, #tpu.memory_space<vmem>>, %arg19: memref<8x40xf32, #tpu.memory_space<vmem>>) attributes {dimension_semantics = [#tpu.dimension_semantics<parallel>], iteration_bounds = array<i64: 1>, scalar_prefetch = 0 : i64, scratch_operands = 0 : i64, tpu.core_type = #tpu.core_type<tc>, window_params = [{transform_indices = @transform_0, window_bounds = array<i64: 8, 784>}, {transform_indices = @transform_1, window_bounds = array<i64: 8, 10>}, {transform_indices = @transform_2, window_bounds = array<i64: 8, 20>}, {pipeline_mode = #tpu.pipeline_mode<synchronous>, transform_indices = @transform_3, window_bounds = array<i64: 784, 512>}, {pipeline_mode = #tpu.pipeline_mode<synchronous>, transform_indices = @transform_4, window_bounds = array<i64: 10, 512>}, {pipeline_mode = #tpu.pipeline_mode<synchronous>, transform_indices = @transform_5, window_bounds = array<i64: 1, 512>}, {pipeline_mode = #tpu.pipeline_mode<synchronous>, transform_indices = @transform_6, window_bounds = array<i64: 512, 256>}, {pipeline_mode = #tpu.pipeline_mode<synchronous>, transform_indices = @transform_7, window_bounds = array<i64: 1, 256>}, {pipeline_mode = #tpu.pipeline_mode<synchronous>, transform_indices = @transform_8, window_bounds = array<i64: 256, 40>}, {pipeline_mode = #tpu.pipeline_mode<synchronous>, transform_indices = @transform_9, window_bounds = array<i64: 1, 40>}, {pipeline_mode = #tpu.pipeline_mode<synchronous>, transform_indices = @transform_10, window_bounds = array<i64: 20, 256>}, {pipeline_mode = #tpu.pipeline_mode<synchronous>, transform_indices = @transform_11, window_bounds = array<i64: 10, 256>}, {pipeline_mode = #tpu.pipeline_mode<synchronous>, transform_indices = @transform_12, window_bounds = array<i64: 1, 256>}, {pipeline_mode = #tpu.pipeline_mode<synchronous>, transform_indices = @transform_13, window_bounds = array<i64: 256, 512>}, {pipeline_mode = #tpu.pipeline_mode<synchronous>, transform_indices = @transform_14, window_bounds = array<i64: 1, 512>}, {pipeline_mode = #tpu.pipeline_mode<synchronous>, transform_indices = @transform_15, window_bounds = array<i64: 512, 896>}, {pipeline_mode = #tpu.pipeline_mode<synchronous>, transform_indices = @transform_16, window_bounds = array<i64: 1, 896>}, {transform_indices = @transform_17, window_bounds = array<i64: 8, 784>}, {transform_indices = @transform_18, window_bounds = array<i64: 8, 40>}]} {
    %c0 = arith.constant 0 : index
    %c0_0 = arith.constant 0 : index
    %0 = vector.load %arg1[%c0, %c0_0] : memref<8x784xf32, #tpu.memory_space<vmem>>, vector<8x784xf32>
    %1 = arith.truncf %0 : vector<8x784xf32> to vector<8x784xbf16>
    %c0_1 = arith.constant 0 : index
    %c0_2 = arith.constant 0 : index
    %2 = vector.load %arg2[%c0_1, %c0_2] : memref<8x10xf32, #tpu.memory_space<vmem>>, vector<8x10xf32>
    %3 = arith.truncf %2 : vector<8x10xf32> to vector<8x10xbf16>
    %c0_3 = arith.constant 0 : index
    %c0_4 = arith.constant 0 : index
    %4 = vector.load %arg4[%c0_3, %c0_4] : memref<784x512xbf16, #tpu.memory_space<vmem>>, vector<784x512xbf16>
    %cst = arith.constant dense<0.000000e+00> : vector<8x512xf32>
    %5 = tpu.matmul %1, %4, %cst {dimension_numbers = #tpu.dot_dimension_numbers<[1], [0], [0], [1], [0, 0, 1, 1], [], []>} : vector<8x784xbf16>, vector<784x512xbf16>, vector<8x512xf32> -> vector<8x512xf32>
    %c0_5 = arith.constant 0 : index
    %c0_6 = arith.constant 0 : index
    %6 = vector.load %arg5[%c0_5, %c0_6] : memref<10x512xbf16, #tpu.memory_space<vmem>>, vector<10x512xbf16>
    %cst_7 = arith.constant dense<0.000000e+00> : vector<8x512xf32>
    %7 = tpu.matmul %3, %6, %cst_7 {dimension_numbers = #tpu.dot_dimension_numbers<[1], [0], [0], [1], [0, 0, 1, 1], [], []>} : vector<8x10xbf16>, vector<10x512xbf16>, vector<8x512xf32> -> vector<8x512xf32>
    %8 = arith.addf %5, %7 : vector<8x512xf32>
    %c0_8 = arith.constant 0 : index
    %c0_9 = arith.constant 0 : index
    %9 = vector.load %arg6[%c0_8, %c0_9] : memref<1x512xf32, #tpu.memory_space<vmem>>, vector<1x512xf32>
    %10 = vector.broadcast %9 : vector<1x512xf32> to vector<8x512xf32>
    %11 = arith.addf %8, %10 : vector<8x512xf32>
    %cst_10 = arith.constant 0.000000e+00 : f32
    %12 = vector.broadcast %cst_10 : f32 to vector<8x512xf32>
    %13 = arith.maximumf %11, %12 : vector<8x512xf32>
    %14 = arith.truncf %13 : vector<8x512xf32> to vector<8x512xbf16>
    %c0_11 = arith.constant 0 : index
    %c0_12 = arith.constant 0 : index
    %15 = vector.load %arg7[%c0_11, %c0_12] : memref<512x256xbf16, #tpu.memory_space<vmem>>, vector<512x256xbf16>
    %cst_13 = arith.constant dense<0.000000e+00> : vector<8x256xf32>
    %16 = tpu.matmul %14, %15, %cst_13 {dimension_numbers = #tpu.dot_dimension_numbers<[1], [0], [0], [1], [0, 0, 1, 1], [], []>} : vector<8x512xbf16>, vector<512x256xbf16>, vector<8x256xf32> -> vector<8x256xf32>
    %c0_14 = arith.constant 0 : index
    %c0_15 = arith.constant 0 : index
    %17 = vector.load %arg8[%c0_14, %c0_15] : memref<1x256xf32, #tpu.memory_space<vmem>>, vector<1x256xf32>
    %18 = vector.broadcast %17 : vector<1x256xf32> to vector<8x256xf32>
    %19 = arith.addf %16, %18 : vector<8x256xf32>
    %cst_16 = arith.constant 0.000000e+00 : f32
    %20 = vector.broadcast %cst_16 : f32 to vector<8x256xf32>
    %21 = arith.maximumf %19, %20 : vector<8x256xf32>
    %22 = arith.truncf %21 : vector<8x256xf32> to vector<8x256xbf16>
    %c0_17 = arith.constant 0 : index
    %c0_18 = arith.constant 0 : index
    %23 = vector.load %arg9[%c0_17, %c0_18] : memref<256x40xbf16, #tpu.memory_space<vmem>>, vector<256x40xbf16>
    %cst_19 = arith.constant dense<0.000000e+00> : vector<8x40xf32>
    %24 = tpu.matmul %22, %23, %cst_19 {dimension_numbers = #tpu.dot_dimension_numbers<[1], [0], [0], [1], [0, 0, 1, 1], [], []>} : vector<8x256xbf16>, vector<256x40xbf16>, vector<8x40xf32> -> vector<8x40xf32>
    %c0_20 = arith.constant 0 : index
    %c0_21 = arith.constant 0 : index
    %25 = vector.load %arg10[%c0_20, %c0_21] : memref<1x40xf32, #tpu.memory_space<vmem>>, vector<1x40xf32>
    %26 = vector.broadcast %25 : vector<1x40xf32> to vector<8x40xf32>
    %27 = arith.addf %24, %26 : vector<8x40xf32>
    %28 = vector.extract_strided_slice %27 {offsets = [0, 0], sizes = [8, 20], strides = [1, 1]} : vector<8x40xf32> to vector<8x20xf32>
    %29 = vector.extract_strided_slice %27 {offsets = [0, 20], sizes = [8, 20], strides = [1, 1]} : vector<8x40xf32> to vector<8x20xf32>
    %cst_22 = arith.constant 5.000000e-01 : f32
    %30 = vector.broadcast %cst_22 : f32 to vector<8x20xf32>
    %31 = arith.mulf %30, %29 : vector<8x20xf32>
    %32 = math.exp %31 : vector<8x20xf32>
    %c0_23 = arith.constant 0 : index
    %c0_24 = arith.constant 0 : index
    %33 = vector.load %arg3[%c0_23, %c0_24] : memref<8x20xf32, #tpu.memory_space<vmem>>, vector<8x20xf32>
    %34 = arith.mulf %33, %32 : vector<8x20xf32>
    %35 = arith.addf %28, %34 : vector<8x20xf32>
    %36 = arith.truncf %35 : vector<8x20xf32> to vector<8x20xbf16>
    %c0_25 = arith.constant 0 : index
    %c0_26 = arith.constant 0 : index
    %37 = vector.load %arg11[%c0_25, %c0_26] : memref<20x256xbf16, #tpu.memory_space<vmem>>, vector<20x256xbf16>
    %cst_27 = arith.constant dense<0.000000e+00> : vector<8x256xf32>
    %38 = tpu.matmul %36, %37, %cst_27 {dimension_numbers = #tpu.dot_dimension_numbers<[1], [0], [0], [1], [0, 0, 1, 1], [], []>} : vector<8x20xbf16>, vector<20x256xbf16>, vector<8x256xf32> -> vector<8x256xf32>
    %c0_28 = arith.constant 0 : index
    %c0_29 = arith.constant 0 : index
    %39 = vector.load %arg12[%c0_28, %c0_29] : memref<10x256xbf16, #tpu.memory_space<vmem>>, vector<10x256xbf16>
    %cst_30 = arith.constant dense<0.000000e+00> : vector<8x256xf32>
    %40 = tpu.matmul %3, %39, %cst_30 {dimension_numbers = #tpu.dot_dimension_numbers<[1], [0], [0], [1], [0, 0, 1, 1], [], []>} : vector<8x10xbf16>, vector<10x256xbf16>, vector<8x256xf32> -> vector<8x256xf32>
    %41 = arith.addf %38, %40 : vector<8x256xf32>
    %c0_31 = arith.constant 0 : index
    %c0_32 = arith.constant 0 : index
    %42 = vector.load %arg13[%c0_31, %c0_32] : memref<1x256xf32, #tpu.memory_space<vmem>>, vector<1x256xf32>
    %43 = vector.broadcast %42 : vector<1x256xf32> to vector<8x256xf32>
    %44 = arith.addf %41, %43 : vector<8x256xf32>
    %cst_33 = arith.constant 0.000000e+00 : f32
    %45 = vector.broadcast %cst_33 : f32 to vector<8x256xf32>
    %46 = arith.maximumf %44, %45 : vector<8x256xf32>
    %47 = arith.truncf %46 : vector<8x256xf32> to vector<8x256xbf16>
    %c0_34 = arith.constant 0 : index
    %c0_35 = arith.constant 0 : index
    %48 = vector.load %arg14[%c0_34, %c0_35] : memref<256x512xbf16, #tpu.memory_space<vmem>>, vector<256x512xbf16>
    %cst_36 = arith.constant dense<0.000000e+00> : vector<8x512xf32>
    %49 = tpu.matmul %47, %48, %cst_36 {dimension_numbers = #tpu.dot_dimension_numbers<[1], [0], [0], [1], [0, 0, 1, 1], [], []>} : vector<8x256xbf16>, vector<256x512xbf16>, vector<8x512xf32> -> vector<8x512xf32>
    %c0_37 = arith.constant 0 : index
    %c0_38 = arith.constant 0 : index
    %50 = vector.load %arg15[%c0_37, %c0_38] : memref<1x512xf32, #tpu.memory_space<vmem>>, vector<1x512xf32>
    %51 = vector.broadcast %50 : vector<1x512xf32> to vector<8x512xf32>
    %52 = arith.addf %49, %51 : vector<8x512xf32>
    %cst_39 = arith.constant 0.000000e+00 : f32
    %53 = vector.broadcast %cst_39 : f32 to vector<8x512xf32>
    %54 = arith.maximumf %52, %53 : vector<8x512xf32>
    %55 = arith.truncf %54 : vector<8x512xf32> to vector<8x512xbf16>
    %c0_40 = arith.constant 0 : index
    %c0_41 = arith.constant 0 : index
    %56 = vector.load %arg16[%c0_40, %c0_41] : memref<512x896xbf16, #tpu.memory_space<vmem>>, vector<512x896xbf16>
    %cst_42 = arith.constant dense<0.000000e+00> : vector<8x896xf32>
    %57 = tpu.matmul %55, %56, %cst_42 {dimension_numbers = #tpu.dot_dimension_numbers<[1], [0], [0], [1], [0, 0, 1, 1], [], []>} : vector<8x512xbf16>, vector<512x896xbf16>, vector<8x896xf32> -> vector<8x896xf32>
    %c0_43 = arith.constant 0 : index
    %c0_44 = arith.constant 0 : index
    %58 = vector.load %arg17[%c0_43, %c0_44] : memref<1x896xf32, #tpu.memory_space<vmem>>, vector<1x896xf32>
    %59 = vector.broadcast %58 : vector<1x896xf32> to vector<8x896xf32>
    %60 = arith.addf %57, %59 : vector<8x896xf32>
    %61 = vector.extract_strided_slice %60 {offsets = [0, 0], sizes = [8, 784], strides = [1, 1]} : vector<8x896xf32> to vector<8x784xf32>
    %62 = arith.negf %61 : vector<8x784xf32>
    %63 = math.exp %62 : vector<8x784xf32>
    %cst_45 = arith.constant 1.000000e+00 : f32
    %64 = vector.broadcast %cst_45 : f32 to vector<8x784xf32>
    %65 = arith.addf %64, %63 : vector<8x784xf32>
    %66 = arith.divf %64, %65 : vector<8x784xf32>
    %c0_46 = arith.constant 0 : index
    %c0_47 = arith.constant 0 : index
    %67 = vector.load %arg18[%c0_46, %c0_47] : memref<8x784xf32, #tpu.memory_space<vmem>>, vector<8x784xf32>
    tpu.vector_store %arg18[%c0_46, %c0_47], %66 {strides = array<i32>} : memref<8x784xf32, #tpu.memory_space<vmem>>, vector<8x784xf32>,
    %c0_48 = arith.constant 0 : index
    %c0_49 = arith.constant 0 : index
    %68 = vector.load %arg19[%c0_48, %c0_49] : memref<8x40xf32, #tpu.memory_space<vmem>>, vector<8x40xf32>
    tpu.vector_store %arg19[%c0_48, %c0_49], %27 {strides = array<i32>} : memref<8x40xf32, #tpu.memory_space<vmem>>, vector<8x40xf32>,
    return
  }
  func.func @transform_0(%arg0: i32) -> (i32, i32) {
    %c0_i32 = arith.constant 0 : i32
    %c0_i32_0 = arith.constant 0 : i32
    return %arg0, %c0_i32 : i32, i32
  }
  func.func @transform_1(%arg0: i32) -> (i32, i32) {
    %c0_i32 = arith.constant 0 : i32
    %c0_i32_0 = arith.constant 0 : i32
    return %arg0, %c0_i32 : i32, i32
  }
  func.func @transform_2(%arg0: i32) -> (i32, i32) {
    %c0_i32 = arith.constant 0 : i32
    %c0_i32_0 = arith.constant 0 : i32
    return %arg0, %c0_i32 : i32, i32
  }
  func.func @transform_3(%arg0: i32) -> (i32, i32) {
    %c0_i32 = arith.constant 0 : i32
    %c0_i32_0 = arith.constant 0 : i32
    %c0_i32_1 = arith.constant 0 : i32
    return %c0_i32, %c0_i32_0 : i32, i32
  }
  func.func @transform_4(%arg0: i32) -> (i32, i32) {
    %c0_i32 = arith.constant 0 : i32
    %c0_i32_0 = arith.constant 0 : i32
    %c0_i32_1 = arith.constant 0 : i32
    return %c0_i32, %c0_i32_0 : i32, i32
  }
  func.func @transform_5(%arg0: i32) -> (i32, i32) {
    %c0_i32 = arith.constant 0 : i32
    %c0_i32_0 = arith.constant 0 : i32
    %c0_i32_1 = arith.constant 0 : i32
    return %c0_i32, %c0_i32_0 : i32, i32
  }
  func.func @transform_6(%arg0: i32) -> (i32, i32) {
    %c0_i32 = arith.constant 0 : i32
    %c0_i32_0 = arith.constant 0 : i32
    %c0_i32_1 = arith.constant 0 : i32
    return %c0_i32, %c0_i32_0 : i32, i32
  }
  func.func @transform_7(%arg0: i32) -> (i32, i32) {
    %c0_i32 = arith.constant 0 : i32
    %c0_i32_0 = arith.constant 0 : i32
    %c0_i32_1 = arith.constant 0 : i32
    return %c0_i32, %c0_i32_0 : i32, i32
  }
  func.func @transform_8(%arg0: i32) -> (i32, i32) {
    %c0_i32 = arith.constant 0 : i32
    %c0_i32_0 = arith.constant 0 : i32
    %c0_i32_1 = arith.constant 0 : i32
    return %c0_i32, %c0_i32_0 : i32, i32
  }
  func.func @transform_9(%arg0: i32) -> (i32, i32) {
    %c0_i32 = arith.constant 0 : i32
    %c0_i32_0 = arith.constant 0 : i32
    %c0_i32_1 = arith.constant 0 : i32
    return %c0_i32, %c0_i32_0 : i32, i32
  }
  func.func @transform_10(%arg0: i32) -> (i32, i32) {
    %c0_i32 = arith.constant 0 : i32
    %c0_i32_0 = arith.constant 0 : i32
    %c0_i32_1 = arith.constant 0 : i32
    return %c0_i32, %c0_i32_0 : i32, i32
  }
  func.func @transform_11(%arg0: i32) -> (i32, i32) {
    %c0_i32 = arith.constant 0 : i32
    %c0_i32_0 = arith.constant 0 : i32
    %c0_i32_1 = arith.constant 0 : i32
    return %c0_i32, %c0_i32_0 : i32, i32
  }
  func.func @transform_12(%arg0: i32) -> (i32, i32) {
    %c0_i32 = arith.constant 0 : i32
    %c0_i32_0 = arith.constant 0 : i32
    %c0_i32_1 = arith.constant 0 : i32
    return %c0_i32, %c0_i32_0 : i32, i32
  }
  func.func @transform_13(%arg0: i32) -> (i32, i32) {
    %c0_i32 = arith.constant 0 : i32
    %c0_i32_0 = arith.constant 0 : i32
    %c0_i32_1 = arith.constant 0 : i32
    return %c0_i32, %c0_i32_0 : i32, i32
  }
  func.func @transform_14(%arg0: i32) -> (i32, i32) {
    %c0_i32 = arith.constant 0 : i32
    %c0_i32_0 = arith.constant 0 : i32
    %c0_i32_1 = arith.constant 0 : i32
    return %c0_i32, %c0_i32_0 : i32, i32
  }
  func.func @transform_15(%arg0: i32) -> (i32, i32) {
    %c0_i32 = arith.constant 0 : i32
    %c0_i32_0 = arith.constant 0 : i32
    %c0_i32_1 = arith.constant 0 : i32
    return %c0_i32, %c0_i32_0 : i32, i32
  }
  func.func @transform_16(%arg0: i32) -> (i32, i32) {
    %c0_i32 = arith.constant 0 : i32
    %c0_i32_0 = arith.constant 0 : i32
    %c0_i32_1 = arith.constant 0 : i32
    return %c0_i32, %c0_i32_0 : i32, i32
  }
  func.func @transform_17(%arg0: i32) -> (i32, i32) {
    %c0_i32 = arith.constant 0 : i32
    %c0_i32_0 = arith.constant 0 : i32
    return %arg0, %c0_i32 : i32, i32
  }
  func.func @transform_18(%arg0: i32) -> (i32, i32) {
    %c0_i32 = arith.constant 0 : i32
    %c0_i32_0 = arith.constant 0 : i32
    return %arg0, %c0_i32 : i32, i32
  }
}

</mosaic_0001>

<llo_original>
// kernel: cvae_forward.1
$region0: #{cvae_forward.1}
  #allocation0 [shape = 'u32[]', space=smem, size = 0x4, offset = 0x4, fixed_abs, tag = 'smem constant byte address 0x4 - core index']
  #allocation1 [shape = 'u32[144,128]{1,0:T(1,128)}', space=vmem, size = 0x12000, scoped, tag = 'internal scratch']
  %s0 = inlined_call_operand.vmem [shape: f32[8,784], index: 0, kind: input, shape index: {}]
  %s1 = inlined_call_operand.vmem [shape: f32[8,10], index: 1, kind: input, shape index: {}]
  %s2 = inlined_call_operand.vmem [shape: f32[8,20], index: 2, kind: input, shape index: {}]
  %s3 = inlined_call_operand.hbm [shape: bf16[784,512], index: 3, kind: input, shape index: {}]
  %s4 = inlined_call_operand.vmem [shape: bf16[10,512], index: 4, kind: input, shape index: {}]
  %s5 = inlined_call_operand.vmem [shape: f32[1,512], index: 5, kind: input, shape index: {}]
  %s6 = inlined_call_operand.hbm [shape: bf16[512,256], index: 6, kind: input, shape index: {}]
  %s7 = inlined_call_operand.vmem [shape: f32[1,256], index: 7, kind: input, shape index: {}]
  %s8 = inlined_call_operand.vmem [shape: bf16[256,40], index: 8, kind: input, shape index: {}]
  %s9 = inlined_call_operand.vmem [shape: f32[1,40], index: 9, kind: input, shape index: {}]
  %s10 = inlined_call_operand.vmem [shape: bf16[20,256], index: 10, kind: input, shape index: {}]
  %s11 = inlined_call_operand.vmem [shape: bf16[10,256], index: 11, kind: input, shape index: {}]
  %s12 = inlined_call_operand.vmem [shape: f32[1,256], index: 12, kind: input, shape index: {}]
  %s13 = inlined_call_operand.hbm [shape: bf16[256,512], index: 13, kind: input, shape index: {}]
  %s14 = inlined_call_operand.vmem [shape: f32[1,512], index: 14, kind: input, shape index: {}]
  %s15 = inlined_call_operand.hbm [shape: bf16[512,896], index: 15, kind: input, shape index: {}]
  %s16 = inlined_call_operand.vmem [shape: f32[1,896], index: 16, kind: input, shape index: {}]
  %s17 = inlined_call_operand.vmem [shape: f32[8,784], index: 17, kind: output, shape index: {0}]
  %s18 = inlined_call_operand.vmem [shape: f32[8,40], index: 18, kind: output, shape index: {1}]
  %19 = xla_tuple %s17, %s18
  %s20 = sld [smem:[#allocation0]]
  $region102: #{cvae_forward.1} parent=0
    _
  %s22 = ssub.s32 1, %s20
  %s23 = scalar_select 0, %s22, %s20
  $region1: #{cvae_forward.1} parent=0
    #allocation2 [shape = 'u8[802816]{0}', space=vmem, size = 0xc4000, scoped, tag = 'input window, operand 3, single buffered']
    #allocation3 [shape = 's32[1]{0}', space=sflag, size = 0x4, scoped, tag = 'scoped memory for cvae_forward.1']
    #allocation4 [shape = 'u8[262144]{0}', space=vmem, size = 0x40000, scoped, tag = 'input window, operand 6, single buffered']
    #allocation5 [shape = 's32[1]{0}', space=sflag, size = 0x4, scoped, tag = 'scoped memory for cvae_forward.1']
    #allocation6 [shape = 'u8[262144]{0}', space=vmem, size = 0x40000, scoped, tag = 'input window, operand 13, single buffered']
    #allocation7 [shape = 'u8[917504]{0}', space=vmem, size = 0xe0000, scoped, tag = 'input window, operand 15, single buffered']
    #allocation8 [shape = 's32[1]{0}', space=sflag, size = 0x4, scoped, tag = 'scoped memory for cvae_forward.1']
    %24 = vsyncpa [#allocation3], 0
    %25 = vsyncpa [#allocation5], 0
    %26 = vsyncpa [#allocation8], 0
    // Predicated region
    $region2: #{cvae_forward.1} parent=1 // pred_check
      _
    $region3: #{cvae_forward.1} parent=1 // pred_check_branch
      %28 = sbr.rel (0) target = $region5
    $region4: #{cvae_forward.1} parent=1 // pred_region
      _
    $region5: #{cvae_forward.1} parent=1 // pred_fallthru
      _
    // Predicated region
    $region6: #{cvae_forward.1} parent=1 // pred_check
      _
    $region7: #{cvae_forward.1} parent=1 // pred_check_branch
      %30 = sbr.rel (0) target = $region9
    $region8: #{cvae_forward.1} parent=1 // pred_region
      _
    $region9: #{cvae_forward.1} parent=1 // pred_fallthru
      _
    // Predicated region
    $region10: #{cvae_forward.1} parent=1 // pred_check
      _
    $region11: #{cvae_forward.1} parent=1 // pred_check_branch
      %32 = sbr.rel (0) target = $region13
    $region12: #{cvae_forward.1} parent=1 // pred_region
      _
    $region13: #{cvae_forward.1} parent=1 // pred_fallthru
      _
    // Predicated region
    $region14: #{cvae_forward.1} parent=1 // pred_check
      _
    $region15: #{cvae_forward.1} parent=1 // pred_check_branch
      %34 = sbr.rel (0) target = $region17
    $region16: #{cvae_forward.1} parent=1 // pred_region
      %s36 = ssub.s32 25088, 25088
      %37 = vsyncadd [#allocation3], %s36
      %s38 = sshll.u32 [#allocation2], 4
      %s39 = int_to_ptr.vmem [resolvable:$true] %s38
      %44 = dma.hbm_to_vmem [thread:$0]  %s3, 25088, %s39, [#allocation3], 256, 256, 16
    $region17: #{cvae_forward.1} parent=1 // pred_fallthru
      _
    // Predicated region
    $region18: #{cvae_forward.1} parent=1 // pred_check
      _
    $region19: #{cvae_forward.1} parent=1 // pred_check_branch
      %46 = sbr.rel (0) target = $region21
    $region20: #{cvae_forward.1} parent=1 // pred_region
      _
    $region21: #{cvae_forward.1} parent=1 // pred_fallthru
      _
    // Predicated region
    $region22: #{cvae_forward.1} parent=1 // pred_check
      _
    $region23: #{cvae_forward.1} parent=1 // pred_check_branch
      %48 = sbr.rel (0) target = $region25
    $region24: #{cvae_forward.1} parent=1 // pred_region
      _
    $region25: #{cvae_forward.1} parent=1 // pred_fallthru
      _
    // Predicated region
    $region26: #{cvae_forward.1} parent=1 // pred_check
      _
    $region27: #{cvae_forward.1} parent=1 // pred_check_branch
      %50 = sbr.rel (0) target = $region29
    $region28: #{cvae_forward.1} parent=1 // pred_region
      %s52 = ssub.s32 8192, 8192
      %53 = vsyncadd [#allocation5], %s52
      %s54 = sshll.u32 [#allocation4], 4
      %s55 = int_to_ptr.vmem [resolvable:$true] %s54
      %60 = dma.hbm_to_vmem [thread:$0]  %s6, 8192, %s55, [#allocation5], 128, 128, 8
    $region29: #{cvae_forward.1} parent=1 // pred_fallthru
      _
    // Predicated region
    $region30: #{cvae_forward.1} parent=1 // pred_check
      _
    $region31: #{cvae_forward.1} parent=1 // pred_check_branch
      %62 = sbr.rel (0) target = $region33
    $region32: #{cvae_forward.1} parent=1 // pred_region
      _
    $region33: #{cvae_forward.1} parent=1 // pred_fallthru
      _
    // Predicated region
    $region34: #{cvae_forward.1} parent=1 // pred_check
      _
    $region35: #{cvae_forward.1} parent=1 // pred_check_branch
      %64 = sbr.rel (0) target = $region37
    $region36: #{cvae_forward.1} parent=1 // pred_region
      _
    $region37: #{cvae_forward.1} parent=1 // pred_fallthru
      _
    // Predicated region
    $region38: #{cvae_forward.1} parent=1 // pred_check
      _
    $region39: #{cvae_forward.1} parent=1 // pred_check_branch
      %66 = sbr.rel (0) target = $region41
    $region40: #{cvae_forward.1} parent=1 // pred_region
      _
    $region41: #{cvae_forward.1} parent=1 // pred_fallthru
      _
    // Predicated region
    $region42: #{cvae_forward.1} parent=1 // pred_check
      _
    $region43: #{cvae_forward.1} parent=1 // pred_check_branch
      %68 = sbr.rel (0) target = $region45
    $region44: #{cvae_forward.1} parent=1 // pred_region
      _
    $region45: #{cvae_forward.1} parent=1 // pred_fallthru
      _
    // Predicated region
    $region46: #{cvae_forward.1} parent=1 // pred_check
      _
    $region47: #{cvae_forward.1} parent=1 // pred_check_branch
      %70 = sbr.rel (0) target = $region49
    $region48: #{cvae_forward.1} parent=1 // pred_region
      _
    $region49: #{cvae_forward.1} parent=1 // pred_fallthru
      _
    // Predicated region
    $region50: #{cvae_forward.1} parent=1 // pred_check
      _
    $region51: #{cvae_forward.1} parent=1 // pred_check_branch
      %72 = sbr.rel (0) target = $region53
    $region52: #{cvae_forward.1} parent=1 // pred_region
      _
    $region53: #{cvae_forward.1} parent=1 // pred_fallthru
      _
    // Predicated region
    $region54: #{cvae_forward.1} parent=1 // pred_check
      _
    $region55: #{cvae_forward.1} parent=1 // pred_check_branch
      %74 = sbr.rel (0) target = $region57
    $region56: #{cvae_forward.1} parent=1 // pred_region
      %s76 = ssub.s32 8192, 8192
      %77 = vsyncadd [#allocation5], %s76
      %s78 = sshll.u32 [#allocation6], 4
      %s79 = int_to_ptr.vmem [resolvable:$true] %s78
      %84 = dma.hbm_to_vmem [thread:$0]  %s13, 8192, %s79, [#allocation5], 256, 256, 16
    $region57: #{cvae_forward.1} parent=1 // pred_fallthru
      _
    // Predicated region
    $region58: #{cvae_forward.1} parent=1 // pred_check
      _
    $region59: #{cvae_forward.1} parent=1 // pred_check_branch
      %86 = sbr.rel (0) target = $region61
    $region60: #{cvae_forward.1} parent=1 // pred_region
      _
    $region61: #{cvae_forward.1} parent=1 // pred_fallthru
      _
    // Predicated region
    $region62: #{cvae_forward.1} parent=1 // pred_check
      _
    $region63: #{cvae_forward.1} parent=1 // pred_check_branch
      %88 = sbr.rel (0) target = $region65
    $region64: #{cvae_forward.1} parent=1 // pred_region
      %s90 = ssub.s32 28672, 28672
      %91 = vsyncadd [#allocation8], %s90
      %s92 = sshll.u32 [#allocation7], 4
      %s93 = int_to_ptr.vmem [resolvable:$true] %s92
      %98 = dma.hbm_to_vmem [thread:$0]  %s15, 28672, %s93, [#allocation8], 448, 448, 28
    $region65: #{cvae_forward.1} parent=1 // pred_fallthru
      _
    // Predicated region
    $region66: #{cvae_forward.1} parent=1 // pred_check
      _
    $region67: #{cvae_forward.1} parent=1 // pred_check_branch
      %100 = sbr.rel (0) target = $region69
    $region68: #{cvae_forward.1} parent=1 // pred_region
      _
    $region69: #{cvae_forward.1} parent=1 // pred_fallthru
      _
    // Predicated region
    $region70: #{cvae_forward.1} parent=1 // pred_check
      _
    $region71: #{cvae_forward.1} parent=1 // pred_check_branch
      %102 = sbr.rel (0) target = $region73
    $region72: #{cvae_forward.1} parent=1 // pred_region
      %103 = dma.done [#allocation3], 25088
    $region73: #{cvae_forward.1} parent=1 // pred_fallthru
      _
    // Predicated region
    $region74: #{cvae_forward.1} parent=1 // pred_check
      _
    $region75: #{cvae_forward.1} parent=1 // pred_check_branch
      %105 = sbr.rel (0) target = $region77
    $region76: #{cvae_forward.1} parent=1 // pred_region
      %106 = dma.done [#allocation5], 8192
    $region77: #{cvae_forward.1} parent=1 // pred_fallthru
      _
    // Predicated region
    $region78: #{cvae_forward.1} parent=1 // pred_check
      _
    $region79: #{cvae_forward.1} parent=1 // pred_check_branch
      %108 = sbr.rel (0) target = $region81
    $region80: #{cvae_forward.1} parent=1 // pred_region
      %109 = dma.done [#allocation5], 8192
    $region81: #{cvae_forward.1} parent=1 // pred_fallthru
      _
    // Predicated region
    $region82: #{cvae_forward.1} parent=1 // pred_check
      _
    $region83: #{cvae_forward.1} parent=1 // pred_check_branch
      %111 = sbr.rel (0) target = $region85
    $region84: #{cvae_forward.1} parent=1 // pred_region
      %112 = dma.done [#allocation8], 28672
    $region85: #{cvae_forward.1} parent=1 // pred_fallthru
      _
    %v114 = vld [vmem:[%s0] sm:$0xff]
    %v115 = vld [vmem:[%s0 + $0x8] sm:$0xff]
    %v116 = vld [vmem:[%s0 + $0x10] sm:$0xff]
    %v117 = vld [vmem:[%s0 + $0x18] sm:$0xff]
    %v118 = vld [vmem:[%s0 + $0x20] sm:$0xff]
    %v119 = vld [vmem:[%s0 + $0x28] sm:$0xff]
    %v120 = vld [vmem:[%s0 + $0x30] sm:$0xff]
    %v121 = vpack.c.bf16 %v114, %v114
    %v122 = vpack.c.bf16 %v115, %v115
    %v123 = vpack.c.bf16 %v116, %v116
    %v124 = vpack.c.bf16 %v117, %v117
    %v125 = vpack.c.bf16 %v118, %v118
    %v126 = vpack.c.bf16 %v119, %v119
    %v127 = vpack.c.bf16 %v120, %v120
    %v128 = vld [vmem:[%s1] sm:$0xff]
    %v129 = vpack.c.bf16 %v128, %v128
    %v130 = vld [vmem:[#allocation2] sm:$0xff]
    %v131 = vld [vmem:[#allocation2 + $0x8] sm:$0xff]
    %v132 = vld [vmem:[#allocation2 + $0x10] sm:$0xff]
    %v133 = vld [vmem:[#allocation2 + $0x18] sm:$0xff]
    %v134 = vld [vmem:[#allocation2 + $0x20] sm:$0xff]
    %v135 = vld [vmem:[#allocation2 + $0x28] sm:$0xff]
    %v136 = vld [vmem:[#allocation2 + $0x30] sm:$0xff]
    %v137 = vld [vmem:[#allocation2 + $0x38] sm:$0xff]
    %v138 = vld [vmem:[#allocation2 + $0x40] sm:$0xff]
    %v139 = vld [vmem:[#allocation2 + $0x48] sm:$0xff]
    %v140 = vld [vmem:[#allocation2 + $0x50] sm:$0xff]
    %v141 = vld [vmem:[#allocation2 + $0x58] sm:$0xff]
    %v142 = vld [vmem:[#allocation2 + $0x60] sm:$0xff]
    %v143 = vld [vmem:[#allocation2 + $0x68] sm:$0xff]
    %v144 = vld [vmem:[#allocation2 + $0x70] sm:$0xff]
    %v145 = vld [vmem:[#allocation2 + $0x78] sm:$0xff]
    %v146 = vld [vmem:[#allocation2 + $0x80] sm:$0xff]
    %v147 = vld [vmem:[#allocation2 + $0x88] sm:$0xff]
    %v148 = vld [vmem:[#allocation2 + $0x90] sm:$0xff]
    %v149 = vld [vmem:[#allocation2 + $0x98] sm:$0xff]
    %v150 = vld [vmem:[#allocation2 + $0xa0] sm:$0xff]
    %v151 = vld [vmem:[#allocation2 + $0xa8] sm:$0xff]
    %v152 = vld [vmem:[#allocation2 + $0xb0] sm:$0xff]
    %v153 = vld [vmem:[#allocation2 + $0xb8] sm:$0xff]
    %v154 = vld [vmem:[#allocation2 + $0xc0] sm:$0xff]
    %v155 = vld [vmem:[#allocation2 + $0xc8] sm:$0xff]
    %v156 = vld [vmem:[#allocation2 + $0xd0] sm:$0xff]
    %v157 = vld [vmem:[#allocation2 + $0xd8] sm:$0xff]
    %v158 = vld [vmem:[#allocation2 + $0xe0] sm:$0xff]
    %v159 = vld [vmem:[#allocation2 + $0xe8] sm:$0xff]
    %v160 = vld [vmem:[#allocation2 + $0xf0] sm:$0xff]
    %v161 = vld [vmem:[#allocation2 + $0xf8] sm:$0xff]
    %v162 = vld [vmem:[#allocation2 + $0x100] sm:$0xff]
    %v163 = vld [vmem:[#allocation2 + $0x108] sm:$0xff]
    %v164 = vld [vmem:[#allocation2 + $0x110] sm:$0xff]
    %v165 = vld [vmem:[#allocation2 + $0x118] sm:$0xff]
    %v166 = vld [vmem:[#allocation2 + $0x120] sm:$0xff]
    %v167 = vld [vmem:[#allocation2 + $0x128] sm:$0xff]
    %v168 = vld [vmem:[#allocation2 + $0x130] sm:$0xff]
    %v169 = vld [vmem:[#allocation2 + $0x138] sm:$0xff]
    %v170 = vld [vmem:[#allocation2 + $0x140] sm:$0xff]
    %v171 = vld [vmem:[#allocation2 + $0x148] sm:$0xff]
    %v172 = vld [vmem:[#allocation2 + $0x150] sm:$0xff]
    %v173 = vld [vmem:[#allocation2 + $0x158] sm:$0xff]
    %v174 = vld [vmem:[#allocation2 + $0x160] sm:$0xff]
    %v175 = vld [vmem:[#allocation2 + $0x168] sm:$0xff]
    %v176 = vld [vmem:[#allocation2 + $0x170] sm:$0xff]
    %v177 = vld [vmem:[#allocation2 + $0x178] sm:$0xff]
    %v178 = vld [vmem:[#allocation2 + $0x180] sm:$0xff]
    %v179 = vld [vmem:[#allocation2 + $0x188] sm:$0xff]
    %v180 = vld [vmem:[#allocation2 + $0x190] sm:$0xff]
    %v181 = vld [vmem:[#allocation2 + $0x198] sm:$0xff]
    %v182 = vld [vmem:[#allocation2 + $0x1a0] sm:$0xff]
    %v183 = vld [vmem:[#allocation2 + $0x1a8] sm:$0xff]
    %v184 = vld [vmem:[#allocation2 + $0x1b0] sm:$0xff]
    %v185 = vld [vmem:[#allocation2 + $0x1b8] sm:$0xff]
    %v186 = vld [vmem:[#allocation2 + $0x1c0] sm:$0xff]
    %v187 = vld [vmem:[#allocation2 + $0x1c8] sm:$0xff]
    %v188 = vld [vmem:[#allocation2 + $0x1d0] sm:$0xff]
    %v189 = vld [vmem:[#allocation2 + $0x1d8] sm:$0xff]
    %v190 = vld [vmem:[#allocation2 + $0x1e0] sm:$0xff]
    %v191 = vld [vmem:[#allocation2 + $0x1e8] sm:$0xff]
    %v192 = vld [vmem:[#allocation2 + $0x1f0] sm:$0xff]
    %v193 = vld [vmem:[#allocation2 + $0x1f8] sm:$0xff]
    %v194 = vld [vmem:[#allocation2 + $0x200] sm:$0xff]
    %v195 = vld [vmem:[#allocation2 + $0x208] sm:$0xff]
    %v196 = vld [vmem:[#allocation2 + $0x210] sm:$0xff]
    %v197 = vld [vmem:[#allocation2 + $0x218] sm:$0xff]
    %v198 = vld [vmem:[#allocation2 + $0x220] sm:$0xff]
    %v199 = vld [vmem:[#allocation2 + $0x228] sm:$0xff]
    %v200 = vld [vmem:[#allocation2 + $0x230] sm:$0xff]
    %v201 = vld [vmem:[#allocation2 + $0x238] sm:$0xff]
    %v202 = vld [vmem:[#allocation2 + $0x240] sm:$0xff]
    %v203 = vld [vmem:[#allocation2 + $0x248] sm:$0xff]
    %v204 = vld [vmem:[#allocation2 + $0x250] sm:$0xff]
    %v205 = vld [vmem:[#allocation2 + $0x258] sm:$0xff]
    %v206 = vld [vmem:[#allocation2 + $0x260] sm:$0xff]
    %v207 = vld [vmem:[#allocation2 + $0x268] sm:$0xff]
    %v208 = vld [vmem:[#allocation2 + $0x270] sm:$0xff]
    %v209 = vld [vmem:[#allocation2 + $0x278] sm:$0xff]
    %v210 = vld [vmem:[#allocation2 + $0x280] sm:$0xff]
    %v211 = vld [vmem:[#allocation2 + $0x288] sm:$0xff]
    %v212 = vld [vmem:[#allocation2 + $0x290] sm:$0xff]
    %v213 = vld [vmem:[#allocation2 + $0x298] sm:$0xff]
    %v214 = vld [vmem:[#allocation2 + $0x2a0] sm:$0xff]
    %v215 = vld [vmem:[#allocation2 + $0x2a8] sm:$0xff]
    %v216 = vld [vmem:[#allocation2 + $0x2b0] sm:$0xff]
    %v217 = vld [vmem:[#allocation2 + $0x2b8] sm:$0xff]
    %v218 = vld [vmem:[#allocation2 + $0x2c0] sm:$0xff]
    %v219 = vld [vmem:[#allocation2 + $0x2c8] sm:$0xff]
    %v220 = vld [vmem:[#allocation2 + $0x2d0] sm:$0xff]
    %v221 = vld [vmem:[#allocation2 + $0x2d8] sm:$0xff]
    %v222 = vld [vmem:[#allocation2 + $0x2e0] sm:$0xff]
    %v223 = vld [vmem:[#allocation2 + $0x2e8] sm:$0xff]
    %v224 = vld [vmem:[#allocation2 + $0x2f0] sm:$0xff]
    %v225 = vld [vmem:[#allocation2 + $0x2f8] sm:$0xff]
    %v226 = vld [vmem:[#allocation2 + $0x300] sm:$0xff]
    %v227 = vld [vmem:[#allocation2 + $0x308] sm:$0xff]
    %v228 = vld [vmem:[#allocation2 + $0x310] sm:$0xff]
    %v229 = vld [vmem:[#allocation2 + $0x318] sm:$0xff]
    %v230 = vld [vmem:[#allocation2 + $0x320] sm:$0xff]
    %v231 = vld [vmem:[#allocation2 + $0x328] sm:$0xff]
    %v232 = vld [vmem:[#allocation2 + $0x330] sm:$0xff]
    %v233 = vld [vmem:[#allocation2 + $0x338] sm:$0xff]
    %v234 = vld [vmem:[#allocation2 + $0x340] sm:$0xff]
    %v235 = vld [vmem:[#allocation2 + $0x348] sm:$0xff]
    %v236 = vld [vmem:[#allocation2 + $0x350] sm:$0xff]
    %v237 = vld [vmem:[#allocation2 + $0x358] sm:$0xff]
    %v238 = vld [vmem:[#allocation2 + $0x360] sm:$0xff]
    %v239 = vld [vmem:[#allocation2 + $0x368] sm:$0xff]
    %v240 = vld [vmem:[#allocation2 + $0x370] sm:$0xff]
    %v241 = vld [vmem:[#allocation2 + $0x378] sm:$0xff]
    %v242 = vld [vmem:[#allocation2 + $0x380] sm:$0xff]
    %v243 = vld [vmem:[#allocation2 + $0x388] sm:$0xff]
    %v244 = vld [vmem:[#allocation2 + $0x390] sm:$0xff]
    %v245 = vld [vmem:[#allocation2 + $0x398] sm:$0xff]
    %v246 = vld [vmem:[#allocation2 + $0x3a0] sm:$0xff]
    %v247 = vld [vmem:[#allocation2 + $0x3a8] sm:$0xff]
    %v248 = vld [vmem:[#allocation2 + $0x3b0] sm:$0xff]
    %v249 = vld [vmem:[#allocation2 + $0x3b8] sm:$0xff]
    %v250 = vld [vmem:[#allocation2 + $0x3c0] sm:$0xff]
    %v251 = vld [vmem:[#allocation2 + $0x3c8] sm:$0xff]
    %v252 = vld [vmem:[#allocation2 + $0x3d0] sm:$0xff]
    %v253 = vld [vmem:[#allocation2 + $0x3d8] sm:$0xff]
    %v254 = vld [vmem:[#allocation2 + $0x3e0] sm:$0xff]
    %v255 = vld [vmem:[#allocation2 + $0x3e8] sm:$0xff]
    %v256 = vld [vmem:[#allocation2 + $0x3f0] sm:$0xff]
    %v257 = vld [vmem:[#allocation2 + $0x3f8] sm:$0xff]
    %v258 = vld [vmem:[#allocation2 + $0x400] sm:$0xff]
    %v259 = vld [vmem:[#allocation2 + $0x408] sm:$0xff]
    %v260 = vld [vmem:[#allocation2 + $0x410] sm:$0xff]
    %v261 = vld [vmem:[#allocation2 + $0x418] sm:$0xff]
    %v262 = vld [vmem:[#allocation2 + $0x420] sm:$0xff]
    %v263 = vld [vmem:[#allocation2 + $0x428] sm:$0xff]
    %v264 = vld [vmem:[#allocation2 + $0x430] sm:$0xff]
    %v265 = vld [vmem:[#allocation2 + $0x438] sm:$0xff]
    %v266 = vld [vmem:[#allocation2 + $0x440] sm:$0xff]
    %v267 = vld [vmem:[#allocation2 + $0x448] sm:$0xff]
    %v268 = vld [vmem:[#allocation2 + $0x450] sm:$0xff]
    %v269 = vld [vmem:[#allocation2 + $0x458] sm:$0xff]
    %v270 = vld [vmem:[#allocation2 + $0x460] sm:$0xff]
    %v271 = vld [vmem:[#allocation2 + $0x468] sm:$0xff]
    %v272 = vld [vmem:[#allocation2 + $0x470] sm:$0xff]
    %v273 = vld [vmem:[#allocation2 + $0x478] sm:$0xff]
    %v274 = vld [vmem:[#allocation2 + $0x480] sm:$0xff]
    %v275 = vld [vmem:[#allocation2 + $0x488] sm:$0xff]
    %v276 = vld [vmem:[#allocation2 + $0x490] sm:$0xff]
    %v277 = vld [vmem:[#allocation2 + $0x498] sm:$0xff]
    %v278 = vld [vmem:[#allocation2 + $0x4a0] sm:$0xff]
    %v279 = vld [vmem:[#allocation2 + $0x4a8] sm:$0xff]
    %v280 = vld [vmem:[#allocation2 + $0x4b0] sm:$0xff]
    %v281 = vld [vmem:[#allocation2 + $0x4b8] sm:$0xff]
    %v282 = vld [vmem:[#allocation2 + $0x4c0] sm:$0xff]
    %v283 = vld [vmem:[#allocation2 + $0x4c8] sm:$0xff]
    %v284 = vld [vmem:[#allocation2 + $0x4d0] sm:$0xff]
    %v285 = vld [vmem:[#allocation2 + $0x4d8] sm:$0xff]
    %v286 = vld [vmem:[#allocation2 + $0x4e0] sm:$0xff]
    %v287 = vld [vmem:[#allocation2 + $0x4e8] sm:$0xff]
    %v288 = vld [vmem:[#allocation2 + $0x4f0] sm:$0xff]
    %v289 = vld [vmem:[#allocation2 + $0x4f8] sm:$0xff]
    %v290 = vld [vmem:[#allocation2 + $0x500] sm:$0xff]
    %v291 = vld [vmem:[#allocation2 + $0x508] sm:$0xff]
    %v292 = vld [vmem:[#allocation2 + $0x510] sm:$0xff]
    %v293 = vld [vmem:[#allocation2 + $0x518] sm:$0xff]
    %v294 = vld [vmem:[#allocation2 + $0x520] sm:$0xff]
    %v295 = vld [vmem:[#allocation2 + $0x528] sm:$0xff]
    %v296 = vld [vmem:[#allocation2 + $0x530] sm:$0xff]
    %v297 = vld [vmem:[#allocation2 + $0x538] sm:$0xff]
    %v298 = vld [vmem:[#allocation2 + $0x540] sm:$0xff]
    %v299 = vld [vmem:[#allocation2 + $0x548] sm:$0xff]
    %v300 = vld [vmem:[#allocation2 + $0x550] sm:$0xff]
    %v301 = vld [vmem:[#allocation2 + $0x558] sm:$0xff]
    %v302 = vld [vmem:[#allocation2 + $0x560] sm:$0xff]
    %v303 = vld [vmem:[#allocation2 + $0x568] sm:$0xff]
    %v304 = vld [vmem:[#allocation2 + $0x570] sm:$0xff]
    %v305 = vld [vmem:[#allocation2 + $0x578] sm:$0xff]
    %v306 = vld [vmem:[#allocation2 + $0x580] sm:$0xff]
    %v307 = vld [vmem:[#allocation2 + $0x588] sm:$0xff]
    %v308 = vld [vmem:[#allocation2 + $0x590] sm:$0xff]
    %v309 = vld [vmem:[#allocation2 + $0x598] sm:$0xff]
    %v310 = vld [vmem:[#allocation2 + $0x5a0] sm:$0xff]
    %v311 = vld [vmem:[#allocation2 + $0x5a8] sm:$0xff]
    %v312 = vld [vmem:[#allocation2 + $0x5b0] sm:$0xff]
    %v313 = vld [vmem:[#allocation2 + $0x5b8] sm:$0xff]
    %v314 = vld [vmem:[#allocation2 + $0x5c0] sm:$0xff]
    %v315 = vld [vmem:[#allocation2 + $0x5c8] sm:$0xff]
    %v316 = vld [vmem:[#allocation2 + $0x5d0] sm:$0xff]
    %v317 = vld [vmem:[#allocation2 + $0x5d8] sm:$0xff]
    %v318 = vld [vmem:[#allocation2 + $0x5e0] sm:$0xff]
    %v319 = vld [vmem:[#allocation2 + $0x5e8] sm:$0xff]
    %v320 = vld [vmem:[#allocation2 + $0x5f0] sm:$0xff]
    %v321 = vld [vmem:[#allocation2 + $0x5f8] sm:$0xff]
    %v322 = vld [vmem:[#allocation2 + $0x600] sm:$0xff]
    %v323 = vld [vmem:[#allocation2 + $0x608] sm:$0xff]
    %v324 = vld [vmem:[#allocation2 + $0x610] sm:$0xff]
    %v325 = vld [vmem:[#allocation2 + $0x618] sm:$0xff]
    %v326 = vld [vmem:[%s4] sm:$0xff]
    %v327 = vld [vmem:[%s4 + $0x8] sm:$0xff]
    %v328 = vld [vmem:[%s4 + $0x10] sm:$0x11]
    %v329 = vld [vmem:[%s4 + $0x18] sm:$0x11]
    %v334 = vunpack.c.l.b16 %v326
    %v335 = vunpack.c.h.b16 %v326
    %v336 = vunpack.c.l.b16 %v327
    %v337 = vunpack.c.h.b16 %v327
    %v338 = vunpack.c.l.b16 %v328
    %v339 = vunpack.c.h.b16 %v328
    %v340 = vunpack.c.l.b16 %v329
    %v341 = vunpack.c.h.b16 %v329
    %v342 = vpack.c.b16 %v338, %v334
    %v343 = vpack.c.b16 %v339, %v335
    %v344 = vpack.c.b16 %v340, %v336
    %v345 = vpack.c.b16 %v341, %v337
    %vm346 = vcmask 80896
    %v348 = vsel %vm346, %v129, 0
    %vm350 = vcmask 1044480
    %v352 = vsel %vm350, %v342, 0
    %v355 = vsel %vm350, %v343, 0
    %v358 = vsel %vm350, %v344, 0
    %v361 = vsel %vm350, %v345, 0
    %363 = vmatprep.subr.bf16.mxu0 0
    %364 = vmatpush1.bf16.msra.mxu0 0
    %365 = vmatprep.subr.bf16.mxu0 0
    %366 = vmatpush1.bf16.msra.mxu0 0
    %367 = vmatprep.subr.bf16.mxu0 0
    %368 = vmatpush1.bf16.msra.mxu0 0
    %369 = vmatprep.subr.bf16.mxu0 0
    %370 = vmatpush1.bf16.msra.mxu0 0
    %371 = vmatprep.subr.bf16.mxu0 0
    %372 = vmatpush1.bf16.msra.mxu0 0
    %373 = vmatprep.subr.bf16.mxu0 0
    %374 = vmatpush1.bf16.msra.mxu0 0
    %375 = vmatprep.subr.bf16.mxu0 0
    %376 = vmatpush1.bf16.msra.mxu0 0
    %377 = vmatprep.subr.bf16.mxu0 %v355
    %378 = vmatpush1.bf16.msra.mxu0 %v352
    %379 = vmatprep.subr.bf16.mxu0 0
    %380 = vmatpush2.bf16.msra.mxu0 0
    %381 = vmatprep.subr.bf16.mxu0 0
    %382 = vmatpush2.bf16.msra.mxu0 0
    %383 = vmatprep.subr.bf16.mxu0 0
    %384 = vmatpush2.bf16.msra.mxu0 0
    %385 = vmatprep.subr.bf16.mxu0 0
    %386 = vmatpush2.bf16.msra.mxu0 0
    %387 = vmatprep.subr.bf16.mxu0 0
    %388 = vmatpush2.bf16.msra.mxu0 0
    %389 = vmatprep.subr.bf16.mxu0 0
    %390 = vmatpush2.bf16.msra.mxu0 0
    %391 = vmatprep.subr.bf16.mxu0 0
    %392 = vmatpush2.bf16.msra.mxu0 0
    %393 = vmatprep.subr.bf16.mxu0 0
    %394 = vmatpush2.bf16.msra.mxu0 0
    %395 = vmatprep.mubr.bf16.mxu0 0
    %396 = vmatmul.mubr.bf16.gmra.mxu0 %v348
    %v397 = vpop.f32.mrf.mxu0
    %v398 = vadd.f32 0.0, %v397
    %v399 = vpop.f32.mrf.mxu0
    %v400 = vadd.f32 0.0, %v399
    %v401 = vpop.f32.mrf.mxu0
    %v402 = vpop.f32.mrf.mxu0
    %403 = vdwg.mxu0
    %404 = vmatprep.subr.bf16.mxu0 0
    %405 = vmatpush1.bf16.msra.mxu0 0
    %406 = vmatprep.subr.bf16.mxu0 0
    %407 = vmatpush1.bf16.msra.mxu0 0
    %408 = vmatprep.subr.bf16.mxu0 0
    %409 = vmatpush1.bf16.msra.mxu0 0
    %410 = vmatprep.subr.bf16.mxu0 0
    %411 = vmatpush1.bf16.msra.mxu0 0
    %412 = vmatprep.subr.bf16.mxu0 0
    %413 = vmatpush1.bf16.msra.mxu0 0
    %414 = vmatprep.subr.bf16.mxu0 0
    %415 = vmatpush1.bf16.msra.mxu0 0
    %416 = vmatprep.subr.bf16.mxu0 0
    %417 = vmatpush1.bf16.msra.mxu0 0
    %418 = vmatprep.subr.bf16.mxu0 %v361
    %419 = vmatpush1.bf16.msra.mxu0 %v358
    %420 = vmatprep.subr.bf16.mxu0 0
    %421 = vmatpush2.bf16.msra.mxu0 0
    %422 = vmatprep.subr.bf16.mxu0 0
    %423 = vmatpush2.bf16.msra.mxu0 0
    %424 = vmatprep.subr.bf16.mxu0 0
    %425 = vmatpush2.bf16.msra.mxu0 0
    %426 = vmatprep.subr.bf16.mxu0 0
    %427 = vmatpush2.bf16.msra.mxu0 0
    %428 = vmatprep.subr.bf16.mxu0 0
    %429 = vmatpush2.bf16.msra.mxu0 0
    %430 = vmatprep.subr.bf16.mxu0 0
    %431 = vmatpush2.bf16.msra.mxu0 0
    %432 = vmatprep.subr.bf16.mxu0 0
    %433 = vmatpush2.bf16.msra.mxu0 0
    %434 = vmatprep.subr.bf16.mxu0 0
    %435 = vmatpush2.bf16.msra.mxu0 0
    %436 = vmatprep.mubr.bf16.mxu0 0
    %437 = vmatmul.mubr.bf16.gmra.mxu0 %v348
    %v438 = vpop.f32.mrf.mxu0
    %v439 = vadd.f32 0.0, %v438
    %v440 = vpop.f32.mrf.mxu0
    %v441 = vadd.f32 0.0, %v440
    %v442 = vpop.f32.mrf.mxu0
    %v443 = vpop.f32.mrf.mxu0
    %444 = vdwg.mxu0
    %v641 = vunpack.c.l.b16 %v130
    %v642 = vunpack.c.h.b16 %v130
    %v643 = vunpack.c.l.b16 %v131
    %v644 = vunpack.c.h.b16 %v131
    %v645 = vunpack.c.l.b16 %v132
    %v646 = vunpack.c.h.b16 %v132
    %v647 = vunpack.c.l.b16 %v133
    %v648 = vunpack.c.h.b16 %v133
    %v649 = vunpack.c.l.b16 %v134
    %v650 = vunpack.c.h.b16 %v134
    %v651 = vunpack.c.l.b16 %v135
    %v652 = vunpack.c.h.b16 %v135
    %v653 = vunpack.c.l.b16 %v136
    %v654 = vunpack.c.h.b16 %v136
    %v655 = vunpack.c.l.b16 %v137
    %v656 = vunpack.c.h.b16 %v137
    %v657 = vunpack.c.l.b16 %v138
    %v658 = vunpack.c.h.b16 %v138
    %v659 = vunpack.c.l.b16 %v139
    %v660 = vunpack.c.h.b16 %v139
    %v661 = vunpack.c.l.b16 %v140
    %v662 = vunpack.c.h.b16 %v140
    %v663 = vunpack.c.l.b16 %v141
    %v664 = vunpack.c.h.b16 %v141
    %v665 = vunpack.c.l.b16 %v142
    %v666 = vunpack.c.h.b16 %v142
    %v667 = vunpack.c.l.b16 %v143
    %v668 = vunpack.c.h.b16 %v143
    %v669 = vunpack.c.l.b16 %v144
    %v670 = vunpack.c.h.b16 %v144
    %v671 = vunpack.c.l.b16 %v145
    %v672 = vunpack.c.h.b16 %v145
    %v673 = vunpack.c.l.b16 %v146
    %v674 = vunpack.c.h.b16 %v146
    %v675 = vunpack.c.l.b16 %v147
    %v676 = vunpack.c.h.b16 %v147
    %v677 = vunpack.c.l.b16 %v148
    %v678 = vunpack.c.h.b16 %v148
    %v679 = vunpack.c.l.b16 %v149
    %v680 = vunpack.c.h.b16 %v149
    %v681 = vunpack.c.l.b16 %v150
    %v682 = vunpack.c.h.b16 %v150
    %v683 = vunpack.c.l.b16 %v151
    %v684 = vunpack.c.h.b16 %v151
    %v685 = vunpack.c.l.b16 %v152
    %v686 = vunpack.c.h.b16 %v152
    %v687 = vunpack.c.l.b16 %v153
    %v688 = vunpack.c.h.b16 %v153
    %v689 = vunpack.c.l.b16 %v154
    %v690 = vunpack.c.h.b16 %v154
    %v691 = vunpack.c.l.b16 %v155
    %v692 = vunpack.c.h.b16 %v155
    %v693 = vunpack.c.l.b16 %v156
    %v694 = vunpack.c.h.b16 %v156
    %v695 = vunpack.c.l.b16 %v157
    %v696 = vunpack.c.h.b16 %v157
    %v697 = vunpack.c.l.b16 %v158
    %v698 = vunpack.c.h.b16 %v158
    %v699 = vunpack.c.l.b16 %v159
    %v700 = vunpack.c.h.b16 %v159
    %v701 = vunpack.c.l.b16 %v160
    %v702 = vunpack.c.h.b16 %v160
    %v703 = vunpack.c.l.b16 %v161
    %v704 = vunpack.c.h.b16 %v161
    %v705 = vunpack.c.l.b16 %v162
    %v706 = vunpack.c.h.b16 %v162
    %v707 = vunpack.c.l.b16 %v163
    %v708 = vunpack.c.h.b16 %v163
    %v709 = vunpack.c.l.b16 %v164
    %v710 = vunpack.c.h.b16 %v164
    %v711 = vunpack.c.l.b16 %v165
    %v712 = vunpack.c.h.b16 %v165
    %v713 = vunpack.c.l.b16 %v166
    %v714 = vunpack.c.h.b16 %v166
    %v715 = vunpack.c.l.b16 %v167
    %v716 = vunpack.c.h.b16 %v167
    %v717 = vunpack.c.l.b16 %v168
    %v718 = vunpack.c.h.b16 %v168
    %v719 = vunpack.c.l.b16 %v169
    %v720 = vunpack.c.h.b16 %v169
    %v721 = vunpack.c.l.b16 %v170
    %v722 = vunpack.c.h.b16 %v170
    %v723 = vunpack.c.l.b16 %v171
    %v724 = vunpack.c.h.b16 %v171
    %v725 = vunpack.c.l.b16 %v172
    %v726 = vunpack.c.h.b16 %v172
    %v727 = vunpack.c.l.b16 %v173
    %v728 = vunpack.c.h.b16 %v173
    %v729 = vunpack.c.l.b16 %v174
    %v730 = vunpack.c.h.b16 %v174
    %v731 = vunpack.c.l.b16 %v175
    %v732 = vunpack.c.h.b16 %v175
    %v733 = vunpack.c.l.b16 %v176
    %v734 = vunpack.c.h.b16 %v176
    %v735 = vunpack.c.l.b16 %v177
    %v736 = vunpack.c.h.b16 %v177
    %v737 = vunpack.c.l.b16 %v178
    %v738 = vunpack.c.h.b16 %v178
    %v739 = vunpack.c.l.b16 %v179
    %v740 = vunpack.c.h.b16 %v179
    %v741 = vunpack.c.l.b16 %v180
    %v742 = vunpack.c.h.b16 %v180
    %v743 = vunpack.c.l.b16 %v181
    %v744 = vunpack.c.h.b16 %v181
    %v745 = vunpack.c.l.b16 %v182
    %v746 = vunpack.c.h.b16 %v182
    %v747 = vunpack.c.l.b16 %v183
    %v748 = vunpack.c.h.b16 %v183
    %v749 = vunpack.c.l.b16 %v184
    %v750 = vunpack.c.h.b16 %v184
    %v751 = vunpack.c.l.b16 %v185
    %v752 = vunpack.c.h.b16 %v185
    %v753 = vunpack.c.l.b16 %v186
    %v754 = vunpack.c.h.b16 %v186
    %v755 = vunpack.c.l.b16 %v187
    %v756 = vunpack.c.h.b16 %v187
    %v757 = vunpack.c.l.b16 %v188
    %v758 = vunpack.c.h.b16 %v188
    %v759 = vunpack.c.l.b16 %v189
    %v760 = vunpack.c.h.b16 %v189
    %v761 = vunpack.c.l.b16 %v190
    %v762 = vunpack.c.h.b16 %v190
    %v763 = vunpack.c.l.b16 %v191
    %v764 = vunpack.c.h.b16 %v191
    %v765 = vunpack.c.l.b16 %v192
    %v766 = vunpack.c.h.b16 %v192
    %v767 = vunpack.c.l.b16 %v193
    %v768 = vunpack.c.h.b16 %v193
    %v769 = vunpack.c.l.b16 %v194
    %v770 = vunpack.c.h.b16 %v194
    %v771 = vunpack.c.l.b16 %v195
    %v772 = vunpack.c.h.b16 %v195
    %v773 = vunpack.c.l.b16 %v196
    %v774 = vunpack.c.h.b16 %v196
    %v775 = vunpack.c.l.b16 %v197
    %v776 = vunpack.c.h.b16 %v197
    %v777 = vunpack.c.l.b16 %v198
    %v778 = vunpack.c.h.b16 %v198
    %v779 = vunpack.c.l.b16 %v199
    %v780 = vunpack.c.h.b16 %v199
    %v781 = vunpack.c.l.b16 %v200
    %v782 = vunpack.c.h.b16 %v200
    %v783 = vunpack.c.l.b16 %v201
    %v784 = vunpack.c.h.b16 %v201
    %v785 = vunpack.c.l.b16 %v202
    %v786 = vunpack.c.h.b16 %v202
    %v787 = vunpack.c.l.b16 %v203
    %v788 = vunpack.c.h.b16 %v203
    %v789 = vunpack.c.l.b16 %v204
    %v790 = vunpack.c.h.b16 %v204
    %v791 = vunpack.c.l.b16 %v205
    %v792 = vunpack.c.h.b16 %v205
    %v793 = vunpack.c.l.b16 %v206
    %v794 = vunpack.c.h.b16 %v206
    %v795 = vunpack.c.l.b16 %v207
    %v796 = vunpack.c.h.b16 %v207
    %v797 = vunpack.c.l.b16 %v208
    %v798 = vunpack.c.h.b16 %v208
    %v799 = vunpack.c.l.b16 %v209
    %v800 = vunpack.c.h.b16 %v209
    %v801 = vunpack.c.l.b16 %v210
    %v802 = vunpack.c.h.b16 %v210
    %v803 = vunpack.c.l.b16 %v211
    %v804 = vunpack.c.h.b16 %v211
    %v805 = vunpack.c.l.b16 %v212
    %v806 = vunpack.c.h.b16 %v212
    %v807 = vunpack.c.l.b16 %v213
    %v808 = vunpack.c.h.b16 %v213
    %v809 = vunpack.c.l.b16 %v214
    %v810 = vunpack.c.h.b16 %v214
    %v811 = vunpack.c.l.b16 %v215
    %v812 = vunpack.c.h.b16 %v215
    %v813 = vunpack.c.l.b16 %v216
    %v814 = vunpack.c.h.b16 %v216
    %v815 = vunpack.c.l.b16 %v217
    %v816 = vunpack.c.h.b16 %v217
    %v817 = vunpack.c.l.b16 %v218
    %v818 = vunpack.c.h.b16 %v218
    %v819 = vunpack.c.l.b16 %v219
    %v820 = vunpack.c.h.b16 %v219
    %v821 = vunpack.c.l.b16 %v220
    %v822 = vunpack.c.h.b16 %v220
    %v823 = vunpack.c.l.b16 %v221
    %v824 = vunpack.c.h.b16 %v221
    %v825 = vunpack.c.l.b16 %v222
    %v826 = vunpack.c.h.b16 %v222
    %v827 = vunpack.c.l.b16 %v223
    %v828 = vunpack.c.h.b16 %v223
    %v829 = vunpack.c.l.b16 %v224
    %v830 = vunpack.c.h.b16 %v224
    %v831 = vunpack.c.l.b16 %v225
    %v832 = vunpack.c.h.b16 %v225
    %v833 = vunpack.c.l.b16 %v226
    %v834 = vunpack.c.h.b16 %v226
    %v835 = vunpack.c.l.b16 %v227
    %v836 = vunpack.c.h.b16 %v227
    %v837 = vunpack.c.l.b16 %v228
    %v838 = vunpack.c.h.b16 %v228
    %v839 = vunpack.c.l.b16 %v229
    %v840 = vunpack.c.h.b16 %v229
    %v841 = vunpack.c.l.b16 %v230
    %v842 = vunpack.c.h.b16 %v230
    %v843 = vunpack.c.l.b16 %v231
    %v844 = vunpack.c.h.b16 %v231
    %v845 = vunpack.c.l.b16 %v232
    %v846 = vunpack.c.h.b16 %v232
    %v847 = vunpack.c.l.b16 %v233
    %v848 = vunpack.c.h.b16 %v233
    %v849 = vunpack.c.l.b16 %v234
    %v850 = vunpack.c.h.b16 %v234
    %v851 = vunpack.c.l.b16 %v235
    %v852 = vunpack.c.h.b16 %v235
    %v853 = vunpack.c.l.b16 %v236
    %v854 = vunpack.c.h.b16 %v236
    %v855 = vunpack.c.l.b16 %v237
    %v856 = vunpack.c.h.b16 %v237
    %v857 = vunpack.c.l.b16 %v238
    %v858 = vunpack.c.h.b16 %v238
    %v859 = vunpack.c.l.b16 %v239
    %v860 = vunpack.c.h.b16 %v239
    %v861 = vunpack.c.l.b16 %v240
    %v862 = vunpack.c.h.b16 %v240
    %v863 = vunpack.c.l.b16 %v241
    %v864 = vunpack.c.h.b16 %v241
    %v865 = vunpack.c.l.b16 %v242
    %v866 = vunpack.c.h.b16 %v242
    %v867 = vunpack.c.l.b16 %v243
    %v868 = vunpack.c.h.b16 %v243
    %v869 = vunpack.c.l.b16 %v244
    %v870 = vunpack.c.h.b16 %v244
    %v871 = vunpack.c.l.b16 %v245
    %v872 = vunpack.c.h.b16 %v245
    %v873 = vunpack.c.l.b16 %v246
    %v874 = vunpack.c.h.b16 %v246
    %v875 = vunpack.c.l.b16 %v247
    %v876 = vunpack.c.h.b16 %v247
    %v877 = vunpack.c.l.b16 %v248
    %v878 = vunpack.c.h.b16 %v248
    %v879 = vunpack.c.l.b16 %v249
    %v880 = vunpack.c.h.b16 %v249
    %v881 = vunpack.c.l.b16 %v250
    %v882 = vunpack.c.h.b16 %v250
    %v883 = vunpack.c.l.b16 %v251
    %v884 = vunpack.c.h.b16 %v251
    %v885 = vunpack.c.l.b16 %v252
    %v886 = vunpack.c.h.b16 %v252
    %v887 = vunpack.c.l.b16 %v253
    %v888 = vunpack.c.h.b16 %v253
    %v889 = vunpack.c.l.b16 %v254
    %v890 = vunpack.c.h.b16 %v254
    %v891 = vunpack.c.l.b16 %v255
    %v892 = vunpack.c.h.b16 %v255
    %v893 = vunpack.c.l.b16 %v256
    %v894 = vunpack.c.h.b16 %v256
    %v895 = vunpack.c.l.b16 %v257
    %v896 = vunpack.c.h.b16 %v257
    %v897 = vunpack.c.l.b16 %v258
    %v898 = vunpack.c.h.b16 %v258
    %v899 = vunpack.c.l.b16 %v259
    %v900 = vunpack.c.h.b16 %v259
    %v901 = vunpack.c.l.b16 %v260
    %v902 = vunpack.c.h.b16 %v260
    %v903 = vunpack.c.l.b16 %v261
    %v904 = vunpack.c.h.b16 %v261
    %v905 = vunpack.c.l.b16 %v262
    %v906 = vunpack.c.h.b16 %v262
    %v907 = vunpack.c.l.b16 %v263
    %v908 = vunpack.c.h.b16 %v263
    %v909 = vunpack.c.l.b16 %v264
    %v910 = vunpack.c.h.b16 %v264
    %v911 = vunpack.c.l.b16 %v265
    %v912 = vunpack.c.h.b16 %v265
    %v913 = vunpack.c.l.b16 %v266
    %v914 = vunpack.c.h.b16 %v266
    %v915 = vunpack.c.l.b16 %v267
    %v916 = vunpack.c.h.b16 %v267
    %v917 = vunpack.c.l.b16 %v268
    %v918 = vunpack.c.h.b16 %v268
    %v919 = vunpack.c.l.b16 %v269
    %v920 = vunpack.c.h.b16 %v269
    %v921 = vunpack.c.l.b16 %v270
    %v922 = vunpack.c.h.b16 %v270
    %v923 = vunpack.c.l.b16 %v271
    %v924 = vunpack.c.h.b16 %v271
    %v925 = vunpack.c.l.b16 %v272
    %v926 = vunpack.c.h.b16 %v272
    %v927 = vunpack.c.l.b16 %v273
    %v928 = vunpack.c.h.b16 %v273
    %v929 = vunpack.c.l.b16 %v274
    %v930 = vunpack.c.h.b16 %v274
    %v931 = vunpack.c.l.b16 %v275
    %v932 = vunpack.c.h.b16 %v275
    %v933 = vunpack.c.l.b16 %v276
    %v934 = vunpack.c.h.b16 %v276
    %v935 = vunpack.c.l.b16 %v277
    %v936 = vunpack.c.h.b16 %v277
    %v937 = vunpack.c.l.b16 %v278
    %v938 = vunpack.c.h.b16 %v278
    %v939 = vunpack.c.l.b16 %v279
    %v940 = vunpack.c.h.b16 %v279
    %v941 = vunpack.c.l.b16 %v280
    %v942 = vunpack.c.h.b16 %v280
    %v943 = vunpack.c.l.b16 %v281
    %v944 = vunpack.c.h.b16 %v281
    %v945 = vunpack.c.l.b16 %v282
    %v946 = vunpack.c.h.b16 %v282
    %v947 = vunpack.c.l.b16 %v283
    %v948 = vunpack.c.h.b16 %v283
    %v949 = vunpack.c.l.b16 %v284
    %v950 = vunpack.c.h.b16 %v284
    %v951 = vunpack.c.l.b16 %v285
    %v952 = vunpack.c.h.b16 %v285
    %v953 = vunpack.c.l.b16 %v286
    %v954 = vunpack.c.h.b16 %v286
    %v955 = vunpack.c.l.b16 %v287
    %v956 = vunpack.c.h.b16 %v287
    %v957 = vunpack.c.l.b16 %v288
    %v958 = vunpack.c.h.b16 %v288
    %v959 = vunpack.c.l.b16 %v289
    %v960 = vunpack.c.h.b16 %v289
    %v961 = vunpack.c.l.b16 %v290
    %v962 = vunpack.c.h.b16 %v290
    %v963 = vunpack.c.l.b16 %v291
    %v964 = vunpack.c.h.b16 %v291
    %v965 = vunpack.c.l.b16 %v292
    %v966 = vunpack.c.h.b16 %v292
    %v967 = vunpack.c.l.b16 %v293
    %v968 = vunpack.c.h.b16 %v293
    %v969 = vunpack.c.l.b16 %v294
    %v970 = vunpack.c.h.b16 %v294
    %v971 = vunpack.c.l.b16 %v295
    %v972 = vunpack.c.h.b16 %v295
    %v973 = vunpack.c.l.b16 %v296
    %v974 = vunpack.c.h.b16 %v296
    %v975 = vunpack.c.l.b16 %v297
    %v976 = vunpack.c.h.b16 %v297
    %v977 = vunpack.c.l.b16 %v298
    %v978 = vunpack.c.h.b16 %v298
    %v979 = vunpack.c.l.b16 %v299
    %v980 = vunpack.c.h.b16 %v299
    %v981 = vunpack.c.l.b16 %v300
    %v982 = vunpack.c.h.b16 %v300
    %v983 = vunpack.c.l.b16 %v301
    %v984 = vunpack.c.h.b16 %v301
    %v985 = vunpack.c.l.b16 %v302
    %v986 = vunpack.c.h.b16 %v302
    %v987 = vunpack.c.l.b16 %v303
    %v988 = vunpack.c.h.b16 %v303
    %v989 = vunpack.c.l.b16 %v304
    %v990 = vunpack.c.h.b16 %v304
    %v991 = vunpack.c.l.b16 %v305
    %v992 = vunpack.c.h.b16 %v305
    %v993 = vunpack.c.l.b16 %v306
    %v994 = vunpack.c.h.b16 %v306
    %v995 = vunpack.c.l.b16 %v307
    %v996 = vunpack.c.h.b16 %v307
    %v997 = vunpack.c.l.b16 %v308
    %v998 = vunpack.c.h.b16 %v308
    %v999 = vunpack.c.l.b16 %v309
    %v1000 = vunpack.c.h.b16 %v309
    %v1001 = vunpack.c.l.b16 %v310
    %v1002 = vunpack.c.h.b16 %v310
    %v1003 = vunpack.c.l.b16 %v311
    %v1004 = vunpack.c.h.b16 %v311
    %v1005 = vunpack.c.l.b16 %v312
    %v1006 = vunpack.c.h.b16 %v312
    %v1007 = vunpack.c.l.b16 %v313
    %v1008 = vunpack.c.h.b16 %v313
    %v1009 = vunpack.c.l.b16 %v314
    %v1010 = vunpack.c.h.b16 %v314
    %v1011 = vunpack.c.l.b16 %v315
    %v1012 = vunpack.c.h.b16 %v315
    %v1013 = vunpack.c.l.b16 %v316
    %v1014 = vunpack.c.h.b16 %v316
    %v1015 = vunpack.c.l.b16 %v317
    %v1016 = vunpack.c.h.b16 %v317
    %v1017 = vunpack.c.l.b16 %v318
    %v1018 = vunpack.c.h.b16 %v318
    %v1019 = vunpack.c.l.b16 %v319
    %v1020 = vunpack.c.h.b16 %v319
    %v1021 = vunpack.c.l.b16 %v320
    %v1022 = vunpack.c.h.b16 %v320
    %v1023 = vunpack.c.l.b16 %v321
    %v1024 = vunpack.c.h.b16 %v321
    %v1025 = vunpack.c.l.b16 %v322
    %v1026 = vunpack.c.h.b16 %v322
    %v1027 = vunpack.c.l.b16 %v323
    %v1028 = vunpack.c.h.b16 %v323
    %v1029 = vunpack.c.l.b16 %v324
    %v1030 = vunpack.c.h.b16 %v324
    %v1031 = vunpack.c.l.b16 %v325
    %v1032 = vunpack.c.h.b16 %v325
    %v1033 = vpack.c.b16 %v645, %v641
    %v1034 = vpack.c.b16 %v646, %v642
    %v1035 = vpack.c.b16 %v647, %v643
    %v1036 = vpack.c.b16 %v648, %v644
    %v1037 = vpack.c.b16 %v653, %v649
    %v1038 = vpack.c.b16 %v654, %v650
    %v1039 = vpack.c.b16 %v655, %v651
    %v1040 = vpack.c.b16 %v656, %v652
    %v1041 = vpack.c.b16 %v661, %v657
    %v1042 = vpack.c.b16 %v662, %v658
    %v1043 = vpack.c.b16 %v663, %v659
    %v1044 = vpack.c.b16 %v664, %v660
    %v1045 = vpack.c.b16 %v669, %v665
    %v1046 = vpack.c.b16 %v670, %v666
    %v1047 = vpack.c.b16 %v671, %v667
    %v1048 = vpack.c.b16 %v672, %v668
    %v1049 = vpack.c.b16 %v677, %v673
    %v1050 = vpack.c.b16 %v678, %v674
    %v1051 = vpack.c.b16 %v679, %v675
    %v1052 = vpack.c.b16 %v680, %v676
    %v1053 = vpack.c.b16 %v685, %v681
    %v1054 = vpack.c.b16 %v686, %v682
    %v1055 = vpack.c.b16 %v687, %v683
    %v1056 = vpack.c.b16 %v688, %v684
    %v1057 = vpack.c.b16 %v693, %v689
    %v1058 = vpack.c.b16 %v694, %v690
    %v1059 = vpack.c.b16 %v695, %v691
    %v1060 = vpack.c.b16 %v696, %v692
    %v1061 = vpack.c.b16 %v701, %v697
    %v1062 = vpack.c.b16 %v702, %v698
    %v1063 = vpack.c.b16 %v703, %v699
    %v1064 = vpack.c.b16 %v704, %v700
    %v1065 = vpack.c.b16 %v709, %v705
    %v1066 = vpack.c.b16 %v710, %v706
    %v1067 = vpack.c.b16 %v711, %v707
    %v1068 = vpack.c.b16 %v712, %v708
    %v1069 = vpack.c.b16 %v717, %v713
    %v1070 = vpack.c.b16 %v718, %v714
    %v1071 = vpack.c.b16 %v719, %v715
    %v1072 = vpack.c.b16 %v720, %v716
    %v1073 = vpack.c.b16 %v725, %v721
    %v1074 = vpack.c.b16 %v726, %v722
    %v1075 = vpack.c.b16 %v727, %v723
    %v1076 = vpack.c.b16 %v728, %v724
    %v1077 = vpack.c.b16 %v733, %v729
    %v1078 = vpack.c.b16 %v734, %v730
    %v1079 = vpack.c.b16 %v735, %v731
    %v1080 = vpack.c.b16 %v736, %v732
    %v1081 = vpack.c.b16 %v741, %v737
    %v1082 = vpack.c.b16 %v742, %v738
    %v1083 = vpack.c.b16 %v743, %v739
    %v1084 = vpack.c.b16 %v744, %v740
    %v1085 = vpack.c.b16 %v749, %v745
    %v1086 = vpack.c.b16 %v750, %v746
    %v1087 = vpack.c.b16 %v751, %v747
    %v1088 = vpack.c.b16 %v752, %v748
    %v1089 = vpack.c.b16 %v757, %v753
    %v1090 = vpack.c.b16 %v758, %v754
    %v1091 = vpack.c.b16 %v759, %v755
    %v1092 = vpack.c.b16 %v760, %v756
    %v1093 = vpack.c.b16 %v765, %v761
    %v1094 = vpack.c.b16 %v766, %v762
    %v1095 = vpack.c.b16 %v767, %v763
    %v1096 = vpack.c.b16 %v768, %v764
    %v1097 = vpack.c.b16 %v773, %v769
    %v1098 = vpack.c.b16 %v774, %v770
    %v1099 = vpack.c.b16 %v775, %v771
    %v1100 = vpack.c.b16 %v776, %v772
    %v1101 = vpack.c.b16 %v781, %v777
    %v1102 = vpack.c.b16 %v782, %v778
    %v1103 = vpack.c.b16 %v783, %v779
    %v1104 = vpack.c.b16 %v784, %v780
    %v1105 = vpack.c.b16 %v789, %v785
    %v1106 = vpack.c.b16 %v790, %v786
    %v1107 = vpack.c.b16 %v791, %v787
    %v1108 = vpack.c.b16 %v792, %v788
    %v1109 = vpack.c.b16 %v797, %v793
    %v1110 = vpack.c.b16 %v798, %v794
    %v1111 = vpack.c.b16 %v799, %v795
    %v1112 = vpack.c.b16 %v800, %v796
    %v1113 = vpack.c.b16 %v805, %v801
    %v1114 = vpack.c.b16 %v806, %v802
    %v1115 = vpack.c.b16 %v807, %v803
    %v1116 = vpack.c.b16 %v808, %v804
    %v1117 = vpack.c.b16 %v813, %v809
    %v1118 = vpack.c.b16 %v814, %v810
    %v1119 = vpack.c.b16 %v815, %v811
    %v1120 = vpack.c.b16 %v816, %v812
    %v1121 = vpack.c.b16 %v821, %v817
    %v1122 = vpack.c.b16 %v822, %v818
    %v1123 = vpack.c.b16 %v823, %v819
    %v1124 = vpack.c.b16 %v824, %v820
    %v1125 = vpack.c.b16 %v829, %v825
    %v1126 = vpack.c.b16 %v830, %v826
    %v1127 = vpack.c.b16 %v831, %v827
    %v1128 = vpack.c.b16 %v832, %v828
    %v1129 = vpack.c.b16 %v837, %v833
    %v1130 = vpack.c.b16 %v838, %v834
    %v1131 = vpack.c.b16 %v839, %v835
    %v1132 = vpack.c.b16 %v840, %v836
    %v1133 = vpack.c.b16 %v845, %v841
    %v1134 = vpack.c.b16 %v846, %v842
    %v1135 = vpack.c.b16 %v847, %v843
    %v1136 = vpack.c.b16 %v848, %v844
    %v1137 = vpack.c.b16 %v853, %v849
    %v1138 = vpack.c.b16 %v854, %v850
    %v1139 = vpack.c.b16 %v855, %v851
    %v1140 = vpack.c.b16 %v856, %v852
    %v1141 = vpack.c.b16 %v861, %v857
    %v1142 = vpack.c.b16 %v862, %v858
    %v1143 = vpack.c.b16 %v863, %v859
    %v1144 = vpack.c.b16 %v864, %v860
    %v1145 = vpack.c.b16 %v869, %v865
    %v1146 = vpack.c.b16 %v870, %v866
    %v1147 = vpack.c.b16 %v871, %v867
    %v1148 = vpack.c.b16 %v872, %v868
    %v1149 = vpack.c.b16 %v877, %v873
    %v1150 = vpack.c.b16 %v878, %v874
    %v1151 = vpack.c.b16 %v879, %v875
    %v1152 = vpack.c.b16 %v880, %v876
    %v1153 = vpack.c.b16 %v885, %v881
    %v1154 = vpack.c.b16 %v886, %v882
    %v1155 = vpack.c.b16 %v887, %v883
    %v1156 = vpack.c.b16 %v888, %v884
    %v1157 = vpack.c.b16 %v893, %v889
    %v1158 = vpack.c.b16 %v894, %v890
    %v1159 = vpack.c.b16 %v895, %v891
    %v1160 = vpack.c.b16 %v896, %v892
    %v1161 = vpack.c.b16 %v901, %v897
    %v1162 = vpack.c.b16 %v902, %v898
    %v1163 = vpack.c.b16 %v903, %v899
    %v1164 = vpack.c.b16 %v904, %v900
    %v1165 = vpack.c.b16 %v909, %v905
    %v1166 = vpack.c.b16 %v910, %v906
    %v1167 = vpack.c.b16 %v911, %v907
    %v1168 = vpack.c.b16 %v912, %v908
    %v1169 = vpack.c.b16 %v917, %v913
    %v1170 = vpack.c.b16 %v918, %v914
    %v1171 = vpack.c.b16 %v919, %v915
    %v1172 = vpack.c.b16 %v920, %v916
    %v1173 = vpack.c.b16 %v925, %v921
    %v1174 = vpack.c.b16 %v926, %v922
    %v1175 = vpack.c.b16 %v927, %v923
    %v1176 = vpack.c.b16 %v928, %v924
    %v1177 = vpack.c.b16 %v933, %v929
    %v1178 = vpack.c.b16 %v934, %v930
    %v1179 = vpack.c.b16 %v935, %v931
    %v1180 = vpack.c.b16 %v936, %v932
    %v1181 = vpack.c.b16 %v941, %v937
    %v1182 = vpack.c.b16 %v942, %v938
    %v1183 = vpack.c.b16 %v943, %v939
    %v1184 = vpack.c.b16 %v944, %v940
    %v1185 = vpack.c.b16 %v949, %v945
    %v1186 = vpack.c.b16 %v950, %v946
    %v1187 = vpack.c.b16 %v951, %v947
    %v1188 = vpack.c.b16 %v952, %v948
    %v1189 = vpack.c.b16 %v957, %v953
    %v1190 = vpack.c.b16 %v958, %v954
    %v1191 = vpack.c.b16 %v959, %v955
    %v1192 = vpack.c.b16 %v960, %v956
    %v1193 = vpack.c.b16 %v965, %v961
    %v1194 = vpack.c.b16 %v966, %v962
    %v1195 = vpack.c.b16 %v967, %v963
    %v1196 = vpack.c.b16 %v968, %v964
    %v1197 = vpack.c.b16 %v973, %v969
    %v1198 = vpack.c.b16 %v974, %v970
    %v1199 = vpack.c.b16 %v975, %v971
    %v1200 = vpack.c.b16 %v976, %v972
    %v1201 = vpack.c.b16 %v981, %v977
    %v1202 = vpack.c.b16 %v982, %v978
    %v1203 = vpack.c.b16 %v983, %v979
    %v1204 = vpack.c.b16 %v984, %v980
    %v1205 = vpack.c.b16 %v989, %v985
    %v1206 = vpack.c.b16 %v990, %v986
    %v1207 = vpack.c.b16 %v991, %v987
    %v1208 = vpack.c.b16 %v992, %v988
    %v1209 = vpack.c.b16 %v997, %v993
    %v1210 = vpack.c.b16 %v998, %v994
    %v1211 = vpack.c.b16 %v999, %v995
    %v1212 = vpack.c.b16 %v1000, %v996
    %v1213 = vpack.c.b16 %v1005, %v1001
    %v1214 = vpack.c.b16 %v1006, %v1002
    %v1215 = vpack.c.b16 %v1007, %v1003
    %v1216 = vpack.c.b16 %v1008, %v1004
    %v1217 = vpack.c.b16 %v1013, %v1009
    %v1218 = vpack.c.b16 %v1014, %v1010
    %v1219 = vpack.c.b16 %v1015, %v1011
    %v1220 = vpack.c.b16 %v1016, %v1012
    %v1221 = vpack.c.b16 %v1021, %v1017
    %v1222 = vpack.c.b16 %v1022, %v1018
    %v1223 = vpack.c.b16 %v1023, %v1019
    %v1224 = vpack.c.b16 %v1024, %v1020
    %v1225 = vpack.c.b16 %v1029, %v1025
    %v1226 = vpack.c.b16 %v1030, %v1026
    %v1227 = vpack.c.b16 %v1031, %v1027
    %v1228 = vpack.c.b16 %v1032, %v1028
    %vm1425 = vcmask 130048
    %v1427 = vsel %vm1425, %v127, 0
    %1429 = vmatprep.subr.bf16.mxu0 %v1062
    %1430 = vmatpush1.bf16.msra.mxu0 %v1061
    %1431 = vmatprep.subr.bf16.mxu0 %v1058
    %1432 = vmatpush1.bf16.msra.mxu0 %v1057
    %1433 = vmatprep.subr.bf16.mxu0 %v1054
    %1434 = vmatpush1.bf16.msra.mxu0 %v1053
    %1435 = vmatprep.subr.bf16.mxu0 %v1050
    %1436 = vmatpush1.bf16.msra.mxu0 %v1049
    %1437 = vmatprep.subr.bf16.mxu0 %v1046
    %1438 = vmatpush1.bf16.msra.mxu0 %v1045
    %1439 = vmatprep.subr.bf16.mxu0 %v1042
    %1440 = vmatpush1.bf16.msra.mxu0 %v1041
    %1441 = vmatprep.subr.bf16.mxu0 %v1038
    %1442 = vmatpush1.bf16.msra.mxu0 %v1037
    %1443 = vmatprep.subr.bf16.mxu0 %v1034
    %1444 = vmatpush1.bf16.msra.mxu0 %v1033
    %1445 = vmatprep.subr.bf16.mxu0 %v1094
    %1446 = vmatpush2.bf16.msra.mxu0 %v1093
    %1447 = vmatprep.subr.bf16.mxu0 %v1090
    %1448 = vmatpush2.bf16.msra.mxu0 %v1089
    %1449 = vmatprep.subr.bf16.mxu0 %v1086
    %1450 = vmatpush2.bf16.msra.mxu0 %v1085
    %1451 = vmatprep.subr.bf16.mxu0 %v1082
    %1452 = vmatpush2.bf16.msra.mxu0 %v1081
    %1453 = vmatprep.subr.bf16.mxu0 %v1078
    %1454 = vmatpush2.bf16.msra.mxu0 %v1077
    %1455 = vmatprep.subr.bf16.mxu0 %v1074
    %1456 = vmatpush2.bf16.msra.mxu0 %v1073
    %1457 = vmatprep.subr.bf16.mxu0 %v1070
    %1458 = vmatpush2.bf16.msra.mxu0 %v1069
    %1459 = vmatprep.subr.bf16.mxu0 %v1066
    %1460 = vmatpush2.bf16.msra.mxu0 %v1065
    %1461 = vmatprep.mubr.bf16.mxu0 %v122
    %1462 = vmatmul.mubr.bf16.gmra.mxu0 %v121
    %v1463 = vpop.f32.mrf.mxu0
    %v1464 = vadd.f32 %v398, %v1463
    %v1465 = vpop.f32.mrf.mxu0
    %v1466 = vadd.f32 %v400, %v1465
    %v1467 = vpop.f32.mrf.mxu0
    %v1468 = vpop.f32.mrf.mxu0
    %1469 = vdwg.mxu0
    %1470 = vmatprep.subr.bf16.mxu0 %v1126
    %1471 = vmatpush1.bf16.msra.mxu0 %v1125
    %1472 = vmatprep.subr.bf16.mxu0 %v1122
    %1473 = vmatpush1.bf16.msra.mxu0 %v1121
    %1474 = vmatprep.subr.bf16.mxu0 %v1118
    %1475 = vmatpush1.bf16.msra.mxu0 %v1117
    %1476 = vmatprep.subr.bf16.mxu0 %v1114
    %1477 = vmatpush1.bf16.msra.mxu0 %v1113
    %1478 = vmatprep.subr.bf16.mxu0 %v1110
    %1479 = vmatpush1.bf16.msra.mxu0 %v1109
    %1480 = vmatprep.subr.bf16.mxu0 %v1106
    %1481 = vmatpush1.bf16.msra.mxu0 %v1105
    %1482 = vmatprep.subr.bf16.mxu0 %v1102
    %1483 = vmatpush1.bf16.msra.mxu0 %v1101
    %1484 = vmatprep.subr.bf16.mxu0 %v1098
    %1485 = vmatpush1.bf16.msra.mxu0 %v1097
    %1486 = vmatprep.subr.bf16.mxu0 %v1158
    %1487 = vmatpush2.bf16.msra.mxu0 %v1157
    %1488 = vmatprep.subr.bf16.mxu0 %v1154
    %1489 = vmatpush2.bf16.msra.mxu0 %v1153
    %1490 = vmatprep.subr.bf16.mxu0 %v1150
    %1491 = vmatpush2.bf16.msra.mxu0 %v1149
    %1492 = vmatprep.subr.bf16.mxu0 %v1146
    %1493 = vmatpush2.bf16.msra.mxu0 %v1145
    %1494 = vmatprep.subr.bf16.mxu0 %v1142
    %1495 = vmatpush2.bf16.msra.mxu0 %v1141
    %1496 = vmatprep.subr.bf16.mxu0 %v1138
    %1497 = vmatpush2.bf16.msra.mxu0 %v1137
    %1498 = vmatprep.subr.bf16.mxu0 %v1134
    %1499 = vmatpush2.bf16.msra.mxu0 %v1133
    %1500 = vmatprep.subr.bf16.mxu0 %v1130
    %1501 = vmatpush2.bf16.msra.mxu0 %v1129
    %1502 = vmatprep.mubr.bf16.mxu0 %v124
    %1503 = vmatmul.mubr.bf16.gmra.mxu0 %v123
    %v1504 = vpop.f32.mrf.mxu0
    %v1505 = vadd.f32 %v1464, %v1504
    %v1506 = vpop.f32.mrf.mxu0
    %v1507 = vadd.f32 %v1466, %v1506
    %v1508 = vpop.f32.mrf.mxu0
    %v1509 = vpop.f32.mrf.mxu0
    %1510 = vdwg.mxu0
    %1511 = vmatprep.subr.bf16.mxu0 %v1190
    %1512 = vmatpush1.bf16.msra.mxu0 %v1189
    %1513 = vmatprep.subr.bf16.mxu0 %v1186
    %1514 = vmatpush1.bf16.msra.mxu0 %v1185
    %1515 = vmatprep.subr.bf16.mxu0 %v1182
    %1516 = vmatpush1.bf16.msra.mxu0 %v1181
    %1517 = vmatprep.subr.bf16.mxu0 %v1178
    %1518 = vmatpush1.bf16.msra.mxu0 %v1177
    %1519 = vmatprep.subr.bf16.mxu0 %v1174
    %1520 = vmatpush1.bf16.msra.mxu0 %v1173
    %1521 = vmatprep.subr.bf16.mxu0 %v1170
    %1522 = vmatpush1.bf16.msra.mxu0 %v1169
    %1523 = vmatprep.subr.bf16.mxu0 %v1166
    %1524 = vmatpush1.bf16.msra.mxu0 %v1165
    %1525 = vmatprep.subr.bf16.mxu0 %v1162
    %1526 = vmatpush1.bf16.msra.mxu0 %v1161
    %1527 = vmatprep.subr.bf16.mxu0 %v1222
    %1528 = vmatpush2.bf16.msra.mxu0 %v1221
    %1529 = vmatprep.subr.bf16.mxu0 %v1218
    %1530 = vmatpush2.bf16.msra.mxu0 %v1217
    %1531 = vmatprep.subr.bf16.mxu0 %v1214
    %1532 = vmatpush2.bf16.msra.mxu0 %v1213
    %1533 = vmatprep.subr.bf16.mxu0 %v1210
    %1534 = vmatpush2.bf16.msra.mxu0 %v1209
    %1535 = vmatprep.subr.bf16.mxu0 %v1206
    %1536 = vmatpush2.bf16.msra.mxu0 %v1205
    %1537 = vmatprep.subr.bf16.mxu0 %v1202
    %1538 = vmatpush2.bf16.msra.mxu0 %v1201
    %1539 = vmatprep.subr.bf16.mxu0 %v1198
    %1540 = vmatpush2.bf16.msra.mxu0 %v1197
    %1541 = vmatprep.subr.bf16.mxu0 %v1194
    %1542 = vmatpush2.bf16.msra.mxu0 %v1193
    %1543 = vmatprep.mubr.bf16.mxu0 %v126
    %1544 = vmatmul.mubr.bf16.gmra.mxu0 %v125
    %v1545 = vpop.f32.mrf.mxu0
    %v1546 = vadd.f32 %v1505, %v1545
    %v1547 = vpop.f32.mrf.mxu0
    %v1548 = vadd.f32 %v1507, %v1547
    %v1549 = vpop.f32.mrf.mxu0
    %v1550 = vpop.f32.mrf.mxu0
    %1551 = vdwg.mxu0
    %1552 = vmatprep.subr.bf16.mxu0 0
    %1553 = vmatpush1.bf16.msra.mxu0 0
    %1554 = vmatprep.subr.bf16.mxu0 0
    %1555 = vmatpush1.bf16.msra.mxu0 0
    %1556 = vmatprep.subr.bf16.mxu0 0
    %1557 = vmatpush1.bf16.msra.mxu0 0
    %1558 = vmatprep.subr.bf16.mxu0 0
    %1559 = vmatpush1.bf16.msra.mxu0 0
    %1560 = vmatprep.subr.bf16.mxu0 0
    %1561 = vmatpush1.bf16.msra.mxu0 0
    %1562 = vmatprep.subr.bf16.mxu0 0
    %1563 = vmatpush1.bf16.msra.mxu0 0
    %1564 = vmatprep.subr.bf16.mxu0 0
    %1565 = vmatpush1.bf16.msra.mxu0 0
    %1566 = vmatprep.subr.bf16.mxu0 %v1226
    %1567 = vmatpush1.bf16.msra.mxu0 %v1225
    %1568 = vmatprep.subr.bf16.mxu0 0
    %1569 = vmatpush2.bf16.msra.mxu0 0
    %1570 = vmatprep.subr.bf16.mxu0 0
    %1571 = vmatpush2.bf16.msra.mxu0 0
    %1572 = vmatprep.subr.bf16.mxu0 0
    %1573 = vmatpush2.bf16.msra.mxu0 0
    %1574 = vmatprep.subr.bf16.mxu0 0
    %1575 = vmatpush2.bf16.msra.mxu0 0
    %1576 = vmatprep.subr.bf16.mxu0 0
    %1577 = vmatpush2.bf16.msra.mxu0 0
    %1578 = vmatprep.subr.bf16.mxu0 0
    %1579 = vmatpush2.bf16.msra.mxu0 0
    %1580 = vmatprep.subr.bf16.mxu0 0
    %1581 = vmatpush2.bf16.msra.mxu0 0
    %1582 = vmatprep.subr.bf16.mxu0 0
    %1583 = vmatpush2.bf16.msra.mxu0 0
    %1584 = vmatprep.mubr.bf16.mxu0 0
    %1585 = vmatmul.mubr.bf16.gmra.mxu0 %v1427
    %v1586 = vpop.f32.mrf.mxu0
    %v1587 = vadd.f32 %v1546, %v1586
    %v1588 = vpop.f32.mrf.mxu0
    %v1589 = vadd.f32 %v1548, %v1588
    %v1590 = vpop.f32.mrf.mxu0
    %v1591 = vpop.f32.mrf.mxu0
    %1592 = vdwg.mxu0
    %1593 = vmatprep.subr.bf16.mxu0 %v1064
    %1594 = vmatpush1.bf16.msra.mxu0 %v1063
    %1595 = vmatprep.subr.bf16.mxu0 %v1060
    %1596 = vmatpush1.bf16.msra.mxu0 %v1059
    %1597 = vmatprep.subr.bf16.mxu0 %v1056
    %1598 = vmatpush1.bf16.msra.mxu0 %v1055
    %1599 = vmatprep.subr.bf16.mxu0 %v1052
    %1600 = vmatpush1.bf16.msra.mxu0 %v1051
    %1601 = vmatprep.subr.bf16.mxu0 %v1048
    %1602 = vmatpush1.bf16.msra.mxu0 %v1047
    %1603 = vmatprep.subr.bf16.mxu0 %v1044
    %1604 = vmatpush1.bf16.msra.mxu0 %v1043
    %1605 = vmatprep.subr.bf16.mxu0 %v1040
    %1606 = vmatpush1.bf16.msra.mxu0 %v1039
    %1607 = vmatprep.subr.bf16.mxu0 %v1036
    %1608 = vmatpush1.bf16.msra.mxu0 %v1035
    %1609 = vmatprep.subr.bf16.mxu0 %v1096
    %1610 = vmatpush2.bf16.msra.mxu0 %v1095
    %1611 = vmatprep.subr.bf16.mxu0 %v1092
    %1612 = vmatpush2.bf16.msra.mxu0 %v1091
    %1613 = vmatprep.subr.bf16.mxu0 %v1088
    %1614 = vmatpush2.bf16.msra.mxu0 %v1087
    %1615 = vmatprep.subr.bf16.mxu0 %v1084
    %1616 = vmatpush2.bf16.msra.mxu0 %v1083
    %1617 = vmatprep.subr.bf16.mxu0 %v1080
    %1618 = vmatpush2.bf16.msra.mxu0 %v1079
    %1619 = vmatprep.subr.bf16.mxu0 %v1076
    %1620 = vmatpush2.bf16.msra.mxu0 %v1075
    %1621 = vmatprep.subr.bf16.mxu0 %v1072
    %1622 = vmatpush2.bf16.msra.mxu0 %v1071
    %1623 = vmatprep.subr.bf16.mxu0 %v1068
    %1624 = vmatpush2.bf16.msra.mxu0 %v1067
    %1625 = vmatprep.mubr.bf16.mxu0 %v122
    %1626 = vmatmul.mubr.bf16.gmra.mxu0 %v121
    %v1627 = vpop.f32.mrf.mxu0
    %v1628 = vadd.f32 %v439, %v1627
    %v1629 = vpop.f32.mrf.mxu0
    %v1630 = vadd.f32 %v441, %v1629
    %v1631 = vpop.f32.mrf.mxu0
    %v1632 = vpop.f32.mrf.mxu0
    %1633 = vdwg.mxu0
    %1634 = vmatprep.subr.bf16.mxu0 %v1128
    %1635 = vmatpush1.bf16.msra.mxu0 %v1127
    %1636 = vmatprep.subr.bf16.mxu0 %v1124
    %1637 = vmatpush1.bf16.msra.mxu0 %v1123
    %1638 = vmatprep.subr.bf16.mxu0 %v1120
    %1639 = vmatpush1.bf16.msra.mxu0 %v1119
    %1640 = vmatprep.subr.bf16.mxu0 %v1116
    %1641 = vmatpush1.bf16.msra.mxu0 %v1115
    %1642 = vmatprep.subr.bf16.mxu0 %v1112
    %1643 = vmatpush1.bf16.msra.mxu0 %v1111
    %1644 = vmatprep.subr.bf16.mxu0 %v1108
    %1645 = vmatpush1.bf16.msra.mxu0 %v1107
    %1646 = vmatprep.subr.bf16.mxu0 %v1104
    %1647 = vmatpush1.bf16.msra.mxu0 %v1103
    %1648 = vmatprep.subr.bf16.mxu0 %v1100
    %1649 = vmatpush1.bf16.msra.mxu0 %v1099
    %1650 = vmatprep.subr.bf16.mxu0 %v1160
    %1651 = vmatpush2.bf16.msra.mxu0 %v1159
    %1652 = vmatprep.subr.bf16.mxu0 %v1156
    %1653 = vmatpush2.bf16.msra.mxu0 %v1155
    %1654 = vmatprep.subr.bf16.mxu0 %v1152
    %1655 = vmatpush2.bf16.msra.mxu0 %v1151
    %1656 = vmatprep.subr.bf16.mxu0 %v1148
    %1657 = vmatpush2.bf16.msra.mxu0 %v1147
    %1658 = vmatprep.subr.bf16.mxu0 %v1144
    %1659 = vmatpush2.bf16.msra.mxu0 %v1143
    %1660 = vmatprep.subr.bf16.mxu0 %v1140
    %1661 = vmatpush2.bf16.msra.mxu0 %v1139
    %1662 = vmatprep.subr.bf16.mxu0 %v1136
    %1663 = vmatpush2.bf16.msra.mxu0 %v1135
    %1664 = vmatprep.subr.bf16.mxu0 %v1132
    %1665 = vmatpush2.bf16.msra.mxu0 %v1131
    %1666 = vmatprep.mubr.bf16.mxu0 %v124
    %1667 = vmatmul.mubr.bf16.gmra.mxu0 %v123
    %v1668 = vpop.f32.mrf.mxu0
    %v1669 = vadd.f32 %v1628, %v1668
    %v1670 = vpop.f32.mrf.mxu0
    %v1671 = vadd.f32 %v1630, %v1670
    %v1672 = vpop.f32.mrf.mxu0
    %v1673 = vpop.f32.mrf.mxu0
    %1674 = vdwg.mxu0
    %1675 = vmatprep.subr.bf16.mxu0 %v1192
    %1676 = vmatpush1.bf16.msra.mxu0 %v1191
    %1677 = vmatprep.subr.bf16.mxu0 %v1188
    %1678 = vmatpush1.bf16.msra.mxu0 %v1187
    %1679 = vmatprep.subr.bf16.mxu0 %v1184
    %1680 = vmatpush1.bf16.msra.mxu0 %v1183
    %1681 = vmatprep.subr.bf16.mxu0 %v1180
    %1682 = vmatpush1.bf16.msra.mxu0 %v1179
    %1683 = vmatprep.subr.bf16.mxu0 %v1176
    %1684 = vmatpush1.bf16.msra.mxu0 %v1175
    %1685 = vmatprep.subr.bf16.mxu0 %v1172
    %1686 = vmatpush1.bf16.msra.mxu0 %v1171
    %1687 = vmatprep.subr.bf16.mxu0 %v1168
    %1688 = vmatpush1.bf16.msra.mxu0 %v1167
    %1689 = vmatprep.subr.bf16.mxu0 %v1164
    %1690 = vmatpush1.bf16.msra.mxu0 %v1163
    %1691 = vmatprep.subr.bf16.mxu0 %v1224
    %1692 = vmatpush2.bf16.msra.mxu0 %v1223
    %1693 = vmatprep.subr.bf16.mxu0 %v1220
    %1694 = vmatpush2.bf16.msra.mxu0 %v1219
    %1695 = vmatprep.subr.bf16.mxu0 %v1216
    %1696 = vmatpush2.bf16.msra.mxu0 %v1215
    %1697 = vmatprep.subr.bf16.mxu0 %v1212
    %1698 = vmatpush2.bf16.msra.mxu0 %v1211
    %1699 = vmatprep.subr.bf16.mxu0 %v1208
    %1700 = vmatpush2.bf16.msra.mxu0 %v1207
    %1701 = vmatprep.subr.bf16.mxu0 %v1204
    %1702 = vmatpush2.bf16.msra.mxu0 %v1203
    %1703 = vmatprep.subr.bf16.mxu0 %v1200
    %1704 = vmatpush2.bf16.msra.mxu0 %v1199
    %1705 = vmatprep.subr.bf16.mxu0 %v1196
    %1706 = vmatpush2.bf16.msra.mxu0 %v1195
    %1707 = vmatprep.mubr.bf16.mxu0 %v126
    %1708 = vmatmul.mubr.bf16.gmra.mxu0 %v125
    %v1709 = vpop.f32.mrf.mxu0
    %v1710 = vadd.f32 %v1669, %v1709
    %v1711 = vpop.f32.mrf.mxu0
    %v1712 = vadd.f32 %v1671, %v1711
    %v1713 = vpop.f32.mrf.mxu0
    %v1714 = vpop.f32.mrf.mxu0
    %1715 = vdwg.mxu0
    %1716 = vmatprep.subr.bf16.mxu0 0
    %1717 = vmatpush1.bf16.msra.mxu0 0
    %1718 = vmatprep.subr.bf16.mxu0 0
    %1719 = vmatpush1.bf16.msra.mxu0 0
    %1720 = vmatprep.subr.bf16.mxu0 0
    %1721 = vmatpush1.bf16.msra.mxu0 0
    %1722 = vmatprep.subr.bf16.mxu0 0
    %1723 = vmatpush1.bf16.msra.mxu0 0
    %1724 = vmatprep.subr.bf16.mxu0 0
    %1725 = vmatpush1.bf16.msra.mxu0 0
    %1726 = vmatprep.subr.bf16.mxu0 0
    %1727 = vmatpush1.bf16.msra.mxu0 0
    %1728 = vmatprep.subr.bf16.mxu0 0
    %1729 = vmatpush1.bf16.msra.mxu0 0
    %1730 = vmatprep.subr.bf16.mxu0 %v1228
    %1731 = vmatpush1.bf16.msra.mxu0 %v1227
    %1732 = vmatprep.subr.bf16.mxu0 0
    %1733 = vmatpush2.bf16.msra.mxu0 0
    %1734 = vmatprep.subr.bf16.mxu0 0
    %1735 = vmatpush2.bf16.msra.mxu0 0
    %1736 = vmatprep.subr.bf16.mxu0 0
    %1737 = vmatpush2.bf16.msra.mxu0 0
    %1738 = vmatprep.subr.bf16.mxu0 0
    %1739 = vmatpush2.bf16.msra.mxu0 0
    %1740 = vmatprep.subr.bf16.mxu0 0
    %1741 = vmatpush2.bf16.msra.mxu0 0
    %1742 = vmatprep.subr.bf16.mxu0 0
    %1743 = vmatpush2.bf16.msra.mxu0 0
    %1744 = vmatprep.subr.bf16.mxu0 0
    %1745 = vmatpush2.bf16.msra.mxu0 0
    %1746 = vmatprep.subr.bf16.mxu0 0
    %1747 = vmatpush2.bf16.msra.mxu0 0
    %1748 = vmatprep.mubr.bf16.mxu0 0
    %1749 = vmatmul.mubr.bf16.gmra.mxu0 %v1427
    %v1750 = vpop.f32.mrf.mxu0
    %v1751 = vadd.f32 %v1710, %v1750
    %v1752 = vpop.f32.mrf.mxu0
    %v1753 = vadd.f32 %v1712, %v1752
    %v1754 = vpop.f32.mrf.mxu0
    %v1755 = vpop.f32.mrf.mxu0
    %1756 = vdwg.mxu0
    %v1757 = vld [vmem:[%s5] sm:$0xf]
    %v1759 = vlaneseq
    %v1760 = vshrl.u32 %v1759, 7
    %v1761 = vsub.s32 0, %v1760
    %v1762 = vrot.slane %v1757, %v1761
    %v1763 = vlaneseq
    %v1764 = vshrl.u32 %v1763, 7
    %v1765 = vsub.s32 1, %v1764
    %v1766 = vrot.slane %v1757, %v1765
    %v1767 = vlaneseq
    %v1768 = vshrl.u32 %v1767, 7
    %v1769 = vsub.s32 2, %v1768
    %v1770 = vrot.slane %v1757, %v1769
    %v1771 = vlaneseq
    %v1772 = vshrl.u32 %v1771, 7
    %v1773 = vsub.s32 3, %v1772
    %v1774 = vrot.slane %v1757, %v1773
    %v1779 = vadd.f32 %v1587, %v1762
    %v1780 = vadd.f32 %v1589, %v1766
    %v1781 = vadd.f32 %v1751, %v1770
    %v1782 = vadd.f32 %v1753, %v1774
    %v1783 = vmax.f32 %v1779, 0.0
    %v1784 = vmax.f32 %v1780, 0.0
    %v1785 = vmax.f32 %v1781, 0.0
    %v1786 = vmax.f32 %v1782, 0.0
    %v1787 = vpack.c.bf16 %v1783, %v1783
    %v1788 = vpack.c.bf16 %v1784, %v1784
    %v1789 = vpack.c.bf16 %v1785, %v1785
    %v1790 = vpack.c.bf16 %v1786, %v1786
    %v1791 = vld [vmem:[#allocation4] sm:$0xff]
    %v1792 = vld [vmem:[#allocation4 + $0x8] sm:$0xff]
    %v1793 = vld [vmem:[#allocation4 + $0x10] sm:$0xff]
    %v1794 = vld [vmem:[#allocation4 + $0x18] sm:$0xff]
    %v1795 = vld [vmem:[#allocation4 + $0x20] sm:$0xff]
    %v1796 = vld [vmem:[#allocation4 + $0x28] sm:$0xff]
    %v1797 = vld [vmem:[#allocation4 + $0x30] sm:$0xff]
    %v1798 = vld [vmem:[#allocation4 + $0x38] sm:$0xff]
    %v1799 = vld [vmem:[#allocation4 + $0x40] sm:$0xff]
    %v1800 = vld [vmem:[#allocation4 + $0x48] sm:$0xff]
    %v1801 = vld [vmem:[#allocation4 + $0x50] sm:$0xff]
    %v1802 = vld [vmem:[#allocation4 + $0x58] sm:$0xff]
    %v1803 = vld [vmem:[#allocation4 + $0x60] sm:$0xff]
    %v1804 = vld [vmem:[#allocation4 + $0x68] sm:$0xff]
    %v1805 = vld [vmem:[#allocation4 + $0x70] sm:$0xff]
    %v1806 = vld [vmem:[#allocation4 + $0x78] sm:$0xff]
    %v1807 = vld [vmem:[#allocation4 + $0x80] sm:$0xff]
    %v1808 = vld [vmem:[#allocation4 + $0x88] sm:$0xff]
    %v1809 = vld [vmem:[#allocation4 + $0x90] sm:$0xff]
    %v1810 = vld [vmem:[#allocation4 + $0x98] sm:$0xff]
    %v1811 = vld [vmem:[#allocation4 + $0xa0] sm:$0xff]
    %v1812 = vld [vmem:[#allocation4 + $0xa8] sm:$0xff]
    %v1813 = vld [vmem:[#allocation4 + $0xb0] sm:$0xff]
    %v1814 = vld [vmem:[#allocation4 + $0xb8] sm:$0xff]
    %v1815 = vld [vmem:[#allocation4 + $0xc0] sm:$0xff]
    %v1816 = vld [vmem:[#allocation4 + $0xc8] sm:$0xff]
    %v1817 = vld [vmem:[#allocation4 + $0xd0] sm:$0xff]
    %v1818 = vld [vmem:[#allocation4 + $0xd8] sm:$0xff]
    %v1819 = vld [vmem:[#allocation4 + $0xe0] sm:$0xff]
    %v1820 = vld [vmem:[#allocation4 + $0xe8] sm:$0xff]
    %v1821 = vld [vmem:[#allocation4 + $0xf0] sm:$0xff]
    %v1822 = vld [vmem:[#allocation4 + $0xf8] sm:$0xff]
    %v1823 = vld [vmem:[#allocation4 + $0x100] sm:$0xff]
    %v1824 = vld [vmem:[#allocation4 + $0x108] sm:$0xff]
    %v1825 = vld [vmem:[#allocation4 + $0x110] sm:$0xff]
    %v1826 = vld [vmem:[#allocation4 + $0x118] sm:$0xff]
    %v1827 = vld [vmem:[#allocation4 + $0x120] sm:$0xff]
    %v1828 = vld [vmem:[#allocation4 + $0x128] sm:$0xff]
    %v1829 = vld [vmem:[#allocation4 + $0x130] sm:$0xff]
    %v1830 = vld [vmem:[#allocation4 + $0x138] sm:$0xff]
    %v1831 = vld [vmem:[#allocation4 + $0x140] sm:$0xff]
    %v1832 = vld [vmem:[#allocation4 + $0x148] sm:$0xff]
    %v1833 = vld [vmem:[#allocation4 + $0x150] sm:$0xff]
    %v1834 = vld [vmem:[#allocation4 + $0x158] sm:$0xff]
    %v1835 = vld [vmem:[#allocation4 + $0x160] sm:$0xff]
    %v1836 = vld [vmem:[#allocation4 + $0x168] sm:$0xff]
    %v1837 = vld [vmem:[#allocation4 + $0x170] sm:$0xff]
    %v1838 = vld [vmem:[#allocation4 + $0x178] sm:$0xff]
    %v1839 = vld [vmem:[#allocation4 + $0x180] sm:$0xff]
    %v1840 = vld [vmem:[#allocation4 + $0x188] sm:$0xff]
    %v1841 = vld [vmem:[#allocation4 + $0x190] sm:$0xff]
    %v1842 = vld [vmem:[#allocation4 + $0x198] sm:$0xff]
    %v1843 = vld [vmem:[#allocation4 + $0x1a0] sm:$0xff]
    %v1844 = vld [vmem:[#allocation4 + $0x1a8] sm:$0xff]
    %v1845 = vld [vmem:[#allocation4 + $0x1b0] sm:$0xff]
    %v1846 = vld [vmem:[#allocation4 + $0x1b8] sm:$0xff]
    %v1847 = vld [vmem:[#allocation4 + $0x1c0] sm:$0xff]
    %v1848 = vld [vmem:[#allocation4 + $0x1c8] sm:$0xff]
    %v1849 = vld [vmem:[#allocation4 + $0x1d0] sm:$0xff]
    %v1850 = vld [vmem:[#allocation4 + $0x1d8] sm:$0xff]
    %v1851 = vld [vmem:[#allocation4 + $0x1e0] sm:$0xff]
    %v1852 = vld [vmem:[#allocation4 + $0x1e8] sm:$0xff]
    %v1853 = vld [vmem:[#allocation4 + $0x1f0] sm:$0xff]
    %v1854 = vld [vmem:[#allocation4 + $0x1f8] sm:$0xff]
    %v1855 = vld [vmem:[%s7] sm:$0x3]
    %v1857 = vlaneseq
    %v1858 = vshrl.u32 %v1857, 7
    %v1859 = vsub.s32 0, %v1858
    %v1860 = vrot.slane %v1855, %v1859
    %v1861 = vlaneseq
    %v1862 = vshrl.u32 %v1861, 7
    %v1863 = vsub.s32 1, %v1862
    %v1864 = vrot.slane %v1855, %v1863
    %v1931 = vunpack.c.l.b16 %v1791
    %v1932 = vunpack.c.h.b16 %v1791
    %v1933 = vunpack.c.l.b16 %v1792
    %v1934 = vunpack.c.h.b16 %v1792
    %v1935 = vunpack.c.l.b16 %v1793
    %v1936 = vunpack.c.h.b16 %v1793
    %v1937 = vunpack.c.l.b16 %v1794
    %v1938 = vunpack.c.h.b16 %v1794
    %v1939 = vunpack.c.l.b16 %v1795
    %v1940 = vunpack.c.h.b16 %v1795
    %v1941 = vunpack.c.l.b16 %v1796
    %v1942 = vunpack.c.h.b16 %v1796
    %v1943 = vunpack.c.l.b16 %v1797
    %v1944 = vunpack.c.h.b16 %v1797
    %v1945 = vunpack.c.l.b16 %v1798
    %v1946 = vunpack.c.h.b16 %v1798
    %v1947 = vunpack.c.l.b16 %v1799
    %v1948 = vunpack.c.h.b16 %v1799
    %v1949 = vunpack.c.l.b16 %v1800
    %v1950 = vunpack.c.h.b16 %v1800
    %v1951 = vunpack.c.l.b16 %v1801
    %v1952 = vunpack.c.h.b16 %v1801
    %v1953 = vunpack.c.l.b16 %v1802
    %v1954 = vunpack.c.h.b16 %v1802
    %v1955 = vunpack.c.l.b16 %v1803
    %v1956 = vunpack.c.h.b16 %v1803
    %v1957 = vunpack.c.l.b16 %v1804
    %v1958 = vunpack.c.h.b16 %v1804
    %v1959 = vunpack.c.l.b16 %v1805
    %v1960 = vunpack.c.h.b16 %v1805
    %v1961 = vunpack.c.l.b16 %v1806
    %v1962 = vunpack.c.h.b16 %v1806
    %v1963 = vunpack.c.l.b16 %v1807
    %v1964 = vunpack.c.h.b16 %v1807
    %v1965 = vunpack.c.l.b16 %v1808
    %v1966 = vunpack.c.h.b16 %v1808
    %v1967 = vunpack.c.l.b16 %v1809
    %v1968 = vunpack.c.h.b16 %v1809
    %v1969 = vunpack.c.l.b16 %v1810
    %v1970 = vunpack.c.h.b16 %v1810
    %v1971 = vunpack.c.l.b16 %v1811
    %v1972 = vunpack.c.h.b16 %v1811
    %v1973 = vunpack.c.l.b16 %v1812
    %v1974 = vunpack.c.h.b16 %v1812
    %v1975 = vunpack.c.l.b16 %v1813
    %v1976 = vunpack.c.h.b16 %v1813
    %v1977 = vunpack.c.l.b16 %v1814
    %v1978 = vunpack.c.h.b16 %v1814
    %v1979 = vunpack.c.l.b16 %v1815
    %v1980 = vunpack.c.h.b16 %v1815
    %v1981 = vunpack.c.l.b16 %v1816
    %v1982 = vunpack.c.h.b16 %v1816
    %v1983 = vunpack.c.l.b16 %v1817
    %v1984 = vunpack.c.h.b16 %v1817
    %v1985 = vunpack.c.l.b16 %v1818
    %v1986 = vunpack.c.h.b16 %v1818
    %v1987 = vunpack.c.l.b16 %v1819
    %v1988 = vunpack.c.h.b16 %v1819
    %v1989 = vunpack.c.l.b16 %v1820
    %v1990 = vunpack.c.h.b16 %v1820
    %v1991 = vunpack.c.l.b16 %v1821
    %v1992 = vunpack.c.h.b16 %v1821
    %v1993 = vunpack.c.l.b16 %v1822
    %v1994 = vunpack.c.h.b16 %v1822
    %v1995 = vunpack.c.l.b16 %v1823
    %v1996 = vunpack.c.h.b16 %v1823
    %v1997 = vunpack.c.l.b16 %v1824
    %v1998 = vunpack.c.h.b16 %v1824
    %v1999 = vunpack.c.l.b16 %v1825
    %v2000 = vunpack.c.h.b16 %v1825
    %v2001 = vunpack.c.l.b16 %v1826
    %v2002 = vunpack.c.h.b16 %v1826
    %v2003 = vunpack.c.l.b16 %v1827
    %v2004 = vunpack.c.h.b16 %v1827
    %v2005 = vunpack.c.l.b16 %v1828
    %v2006 = vunpack.c.h.b16 %v1828
    %v2007 = vunpack.c.l.b16 %v1829
    %v2008 = vunpack.c.h.b16 %v1829
    %v2009 = vunpack.c.l.b16 %v1830
    %v2010 = vunpack.c.h.b16 %v1830
    %v2011 = vunpack.c.l.b16 %v1831
    %v2012 = vunpack.c.h.b16 %v1831
    %v2013 = vunpack.c.l.b16 %v1832
    %v2014 = vunpack.c.h.b16 %v1832
    %v2015 = vunpack.c.l.b16 %v1833
    %v2016 = vunpack.c.h.b16 %v1833
    %v2017 = vunpack.c.l.b16 %v1834
    %v2018 = vunpack.c.h.b16 %v1834
    %v2019 = vunpack.c.l.b16 %v1835
    %v2020 = vunpack.c.h.b16 %v1835
    %v2021 = vunpack.c.l.b16 %v1836
    %v2022 = vunpack.c.h.b16 %v1836
    %v2023 = vunpack.c.l.b16 %v1837
    %v2024 = vunpack.c.h.b16 %v1837
    %v2025 = vunpack.c.l.b16 %v1838
    %v2026 = vunpack.c.h.b16 %v1838
    %v2027 = vunpack.c.l.b16 %v1839
    %v2028 = vunpack.c.h.b16 %v1839
    %v2029 = vunpack.c.l.b16 %v1840
    %v2030 = vunpack.c.h.b16 %v1840
    %v2031 = vunpack.c.l.b16 %v1841
    %v2032 = vunpack.c.h.b16 %v1841
    %v2033 = vunpack.c.l.b16 %v1842
    %v2034 = vunpack.c.h.b16 %v1842
    %v2035 = vunpack.c.l.b16 %v1843
    %v2036 = vunpack.c.h.b16 %v1843
    %v2037 = vunpack.c.l.b16 %v1844
    %v2038 = vunpack.c.h.b16 %v1844
    %v2039 = vunpack.c.l.b16 %v1845
    %v2040 = vunpack.c.h.b16 %v1845
    %v2041 = vunpack.c.l.b16 %v1846
    %v2042 = vunpack.c.h.b16 %v1846
    %v2043 = vunpack.c.l.b16 %v1847
    %v2044 = vunpack.c.h.b16 %v1847
    %v2045 = vunpack.c.l.b16 %v1848
    %v2046 = vunpack.c.h.b16 %v1848
    %v2047 = vunpack.c.l.b16 %v1849
    %v2048 = vunpack.c.h.b16 %v1849
    %v2049 = vunpack.c.l.b16 %v1850
    %v2050 = vunpack.c.h.b16 %v1850
    %v2051 = vunpack.c.l.b16 %v1851
    %v2052 = vunpack.c.h.b16 %v1851
    %v2053 = vunpack.c.l.b16 %v1852
    %v2054 = vunpack.c.h.b16 %v1852
    %v2055 = vunpack.c.l.b16 %v1853
    %v2056 = vunpack.c.h.b16 %v1853
    %v2057 = vunpack.c.l.b16 %v1854
    %v2058 = vunpack.c.h.b16 %v1854
    %v2059 = vpack.c.b16 %v1933, %v1931
    %v2060 = vpack.c.b16 %v1934, %v1932
    %v2061 = vpack.c.b16 %v1937, %v1935
    %v2062 = vpack.c.b16 %v1938, %v1936
    %v2063 = vpack.c.b16 %v1941, %v1939
    %v2064 = vpack.c.b16 %v1942, %v1940
    %v2065 = vpack.c.b16 %v1945, %v1943
    %v2066 = vpack.c.b16 %v1946, %v1944
    %v2067 = vpack.c.b16 %v1949, %v1947
    %v2068 = vpack.c.b16 %v1950, %v1948
    %v2069 = vpack.c.b16 %v1953, %v1951
    %v2070 = vpack.c.b16 %v1954, %v1952
    %v2071 = vpack.c.b16 %v1957, %v1955
    %v2072 = vpack.c.b16 %v1958, %v1956
    %v2073 = vpack.c.b16 %v1961, %v1959
    %v2074 = vpack.c.b16 %v1962, %v1960
    %v2075 = vpack.c.b16 %v1965, %v1963
    %v2076 = vpack.c.b16 %v1966, %v1964
    %v2077 = vpack.c.b16 %v1969, %v1967
    %v2078 = vpack.c.b16 %v1970, %v1968
    %v2079 = vpack.c.b16 %v1973, %v1971
    %v2080 = vpack.c.b16 %v1974, %v1972
    %v2081 = vpack.c.b16 %v1977, %v1975
    %v2082 = vpack.c.b16 %v1978, %v1976
    %v2083 = vpack.c.b16 %v1981, %v1979
    %v2084 = vpack.c.b16 %v1982, %v1980
    %v2085 = vpack.c.b16 %v1985, %v1983
    %v2086 = vpack.c.b16 %v1986, %v1984
    %v2087 = vpack.c.b16 %v1989, %v1987
    %v2088 = vpack.c.b16 %v1990, %v1988
    %v2089 = vpack.c.b16 %v1993, %v1991
    %v2090 = vpack.c.b16 %v1994, %v1992
    %v2091 = vpack.c.b16 %v1997, %v1995
    %v2092 = vpack.c.b16 %v1998, %v1996
    %v2093 = vpack.c.b16 %v2001, %v1999
    %v2094 = vpack.c.b16 %v2002, %v2000
    %v2095 = vpack.c.b16 %v2005, %v2003
    %v2096 = vpack.c.b16 %v2006, %v2004
    %v2097 = vpack.c.b16 %v2009, %v2007
    %v2098 = vpack.c.b16 %v2010, %v2008
    %v2099 = vpack.c.b16 %v2013, %v2011
    %v2100 = vpack.c.b16 %v2014, %v2012
    %v2101 = vpack.c.b16 %v2017, %v2015
    %v2102 = vpack.c.b16 %v2018, %v2016
    %v2103 = vpack.c.b16 %v2021, %v2019
    %v2104 = vpack.c.b16 %v2022, %v2020
    %v2105 = vpack.c.b16 %v2025, %v2023
    %v2106 = vpack.c.b16 %v2026, %v2024
    %v2107 = vpack.c.b16 %v2029, %v2027
    %v2108 = vpack.c.b16 %v2030, %v2028
    %v2109 = vpack.c.b16 %v2033, %v2031
    %v2110 = vpack.c.b16 %v2034, %v2032
    %v2111 = vpack.c.b16 %v2037, %v2035
    %v2112 = vpack.c.b16 %v2038, %v2036
    %v2113 = vpack.c.b16 %v2041, %v2039
    %v2114 = vpack.c.b16 %v2042, %v2040
    %v2115 = vpack.c.b16 %v2045, %v2043
    %v2116 = vpack.c.b16 %v2046, %v2044
    %v2117 = vpack.c.b16 %v2049, %v2047
    %v2118 = vpack.c.b16 %v2050, %v2048
    %v2119 = vpack.c.b16 %v2053, %v2051
    %v2120 = vpack.c.b16 %v2054, %v2052
    %v2121 = vpack.c.b16 %v2057, %v2055
    %v2122 = vpack.c.b16 %v2058, %v2056
    %2187 = vmatprep.subr.bf16.mxu0 %v2074
    %2188 = vmatpush1.bf16.msra.mxu0 %v2073
    %2189 = vmatprep.subr.bf16.mxu0 %v2072
    %2190 = vmatpush1.bf16.msra.mxu0 %v2071
    %2191 = vmatprep.subr.bf16.mxu0 %v2070
    %2192 = vmatpush1.bf16.msra.mxu0 %v2069
    %2193 = vmatprep.subr.bf16.mxu0 %v2068
    %2194 = vmatpush1.bf16.msra.mxu0 %v2067
    %2195 = vmatprep.subr.bf16.mxu0 %v2066
    %2196 = vmatpush1.bf16.msra.mxu0 %v2065
    %2197 = vmatprep.subr.bf16.mxu0 %v2064
    %2198 = vmatpush1.bf16.msra.mxu0 %v2063
    %2199 = vmatprep.subr.bf16.mxu0 %v2062
    %2200 = vmatpush1.bf16.msra.mxu0 %v2061
    %2201 = vmatprep.subr.bf16.mxu0 %v2060
    %2202 = vmatpush1.bf16.msra.mxu0 %v2059
    %2203 = vmatprep.subr.bf16.mxu0 %v2090
    %2204 = vmatpush2.bf16.msra.mxu0 %v2089
    %2205 = vmatprep.subr.bf16.mxu0 %v2088
    %2206 = vmatpush2.bf16.msra.mxu0 %v2087
    %2207 = vmatprep.subr.bf16.mxu0 %v2086
    %2208 = vmatpush2.bf16.msra.mxu0 %v2085
    %2209 = vmatprep.subr.bf16.mxu0 %v2084
    %2210 = vmatpush2.bf16.msra.mxu0 %v2083
    %2211 = vmatprep.subr.bf16.mxu0 %v2082
    %2212 = vmatpush2.bf16.msra.mxu0 %v2081
    %2213 = vmatprep.subr.bf16.mxu0 %v2080
    %2214 = vmatpush2.bf16.msra.mxu0 %v2079
    %2215 = vmatprep.subr.bf16.mxu0 %v2078
    %2216 = vmatpush2.bf16.msra.mxu0 %v2077
    %2217 = vmatprep.subr.bf16.mxu0 %v2076
    %2218 = vmatpush2.bf16.msra.mxu0 %v2075
    %2219 = vmatprep.mubr.bf16.mxu0 %v1788
    %2220 = vmatmul.mubr.bf16.gmra.mxu0 %v1787
    %v2221 = vpop.f32.mrf.mxu0
    %v2222 = vadd.f32 %v1860, %v2221
    %v2223 = vpop.f32.mrf.mxu0
    %v2224 = vadd.f32 %v1864, %v2223
    %v2225 = vpop.f32.mrf.mxu0
    %v2226 = vpop.f32.mrf.mxu0
    %2227 = vdwg.mxu0
    %2228 = vmatprep.subr.bf16.mxu0 %v2106
    %2229 = vmatpush1.bf16.msra.mxu0 %v2105
    %2230 = vmatprep.subr.bf16.mxu0 %v2104
    %2231 = vmatpush1.bf16.msra.mxu0 %v2103
    %2232 = vmatprep.subr.bf16.mxu0 %v2102
    %2233 = vmatpush1.bf16.msra.mxu0 %v2101
    %2234 = vmatprep.subr.bf16.mxu0 %v2100
    %2235 = vmatpush1.bf16.msra.mxu0 %v2099
    %2236 = vmatprep.subr.bf16.mxu0 %v2098
    %2237 = vmatpush1.bf16.msra.mxu0 %v2097
    %2238 = vmatprep.subr.bf16.mxu0 %v2096
    %2239 = vmatpush1.bf16.msra.mxu0 %v2095
    %2240 = vmatprep.subr.bf16.mxu0 %v2094
    %2241 = vmatpush1.bf16.msra.mxu0 %v2093
    %2242 = vmatprep.subr.bf16.mxu0 %v2092
    %2243 = vmatpush1.bf16.msra.mxu0 %v2091
    %2244 = vmatprep.subr.bf16.mxu0 %v2122
    %2245 = vmatpush2.bf16.msra.mxu0 %v2121
    %2246 = vmatprep.subr.bf16.mxu0 %v2120
    %2247 = vmatpush2.bf16.msra.mxu0 %v2119
    %2248 = vmatprep.subr.bf16.mxu0 %v2118
    %2249 = vmatpush2.bf16.msra.mxu0 %v2117
    %2250 = vmatprep.subr.bf16.mxu0 %v2116
    %2251 = vmatpush2.bf16.msra.mxu0 %v2115
    %2252 = vmatprep.subr.bf16.mxu0 %v2114
    %2253 = vmatpush2.bf16.msra.mxu0 %v2113
    %2254 = vmatprep.subr.bf16.mxu0 %v2112
    %2255 = vmatpush2.bf16.msra.mxu0 %v2111
    %2256 = vmatprep.subr.bf16.mxu0 %v2110
    %2257 = vmatpush2.bf16.msra.mxu0 %v2109
    %2258 = vmatprep.subr.bf16.mxu0 %v2108
    %2259 = vmatpush2.bf16.msra.mxu0 %v2107
    %2260 = vmatprep.mubr.bf16.mxu0 %v1790
    %2261 = vmatmul.mubr.bf16.gmra.mxu0 %v1789
    %v2262 = vpop.f32.mrf.mxu0
    %v2263 = vadd.f32 %v2222, %v2262
    %v2264 = vpop.f32.mrf.mxu0
    %v2265 = vadd.f32 %v2224, %v2264
    %v2266 = vpop.f32.mrf.mxu0
    %v2267 = vpop.f32.mrf.mxu0
    %2268 = vdwg.mxu0
    %v2269 = vmax.f32 %v2263, 0.0
    %v2270 = vmax.f32 %v2265, 0.0
    %v2271 = vpack.c.bf16 %v2269, %v2269
    %v2272 = vpack.c.bf16 %v2270, %v2270
    %v2273 = vld [vmem:[%s8] sm:$0xf]
    %v2274 = vld [vmem:[%s8 + $0x4] sm:$0xf]
    %v2275 = vld [vmem:[%s8 + $0x8] sm:$0xf]
    %v2276 = vld [vmem:[%s8 + $0xc] sm:$0xf]
    %v2277 = vld [vmem:[%s8 + $0x10] sm:$0xf]
    %v2278 = vld [vmem:[%s8 + $0x14] sm:$0xf]
    %v2279 = vld [vmem:[%s8 + $0x18] sm:$0xf]
    %v2280 = vld [vmem:[%s8 + $0x1c] sm:$0xf]
    %v2281 = vld [vmem:[%s8 + $0x20] sm:$0xf]
    %v2282 = vld [vmem:[%s8 + $0x24] sm:$0xf]
    %v2283 = vld [vmem:[%s8 + $0x28] sm:$0xf]
    %v2284 = vld [vmem:[%s8 + $0x2c] sm:$0xf]
    %v2285 = vld [vmem:[%s8 + $0x30] sm:$0xf]
    %v2286 = vld [vmem:[%s8 + $0x34] sm:$0xf]
    %v2287 = vld [vmem:[%s8 + $0x38] sm:$0xf]
    %v2288 = vld [vmem:[%s8 + $0x3c] sm:$0xf]
    %v2289 = vld [vmem:[%s8 + $0x40] sm:$0xf]
    %v2290 = vld [vmem:[%s8 + $0x44] sm:$0xf]
    %v2291 = vld [vmem:[%s8 + $0x48] sm:$0xf]
    %v2292 = vld [vmem:[%s8 + $0x4c] sm:$0xf]
    %v2293 = vld [vmem:[%s8 + $0x50] sm:$0xf]
    %v2294 = vld [vmem:[%s8 + $0x54] sm:$0xf]
    %v2295 = vld [vmem:[%s8 + $0x58] sm:$0xf]
    %v2296 = vld [vmem:[%s8 + $0x5c] sm:$0xf]
    %v2297 = vld [vmem:[%s8 + $0x60] sm:$0xf]
    %v2298 = vld [vmem:[%s8 + $0x64] sm:$0xf]
    %v2299 = vld [vmem:[%s8 + $0x68] sm:$0xf]
    %v2300 = vld [vmem:[%s8 + $0x6c] sm:$0xf]
    %v2301 = vld [vmem:[%s8 + $0x70] sm:$0xf]
    %v2302 = vld [vmem:[%s8 + $0x74] sm:$0xf]
    %v2303 = vld [vmem:[%s8 + $0x78] sm:$0xf]
    %v2304 = vld [vmem:[%s8 + $0x7c] sm:$0xf]
    %v2305 = vld [vmem:[%s9] sm:$0x1]
    %v2307 = vlaneseq
    %v2308 = vshrl.u32 %v2307, 7
    %v2309 = vsub.s32 0, %v2308
    %v2310 = vrot.slane %v2305, %v2309
    %v2344 = vunpack.c.l.b16 %v2273
    %v2345 = vunpack.c.l.b16 %v2274
    %v2346 = vunpack.c.l.b16 %v2275
    %v2347 = vunpack.c.l.b16 %v2276
    %v2348 = vunpack.c.l.b16 %v2277
    %v2349 = vunpack.c.l.b16 %v2278
    %v2350 = vunpack.c.l.b16 %v2279
    %v2351 = vunpack.c.l.b16 %v2280
    %v2352 = vunpack.c.l.b16 %v2281
    %v2353 = vunpack.c.l.b16 %v2282
    %v2354 = vunpack.c.l.b16 %v2283
    %v2355 = vunpack.c.l.b16 %v2284
    %v2356 = vunpack.c.l.b16 %v2285
    %v2357 = vunpack.c.l.b16 %v2286
    %v2358 = vunpack.c.l.b16 %v2287
    %v2359 = vunpack.c.l.b16 %v2288
    %v2360 = vunpack.c.l.b16 %v2289
    %v2361 = vunpack.c.l.b16 %v2290
    %v2362 = vunpack.c.l.b16 %v2291
    %v2363 = vunpack.c.l.b16 %v2292
    %v2364 = vunpack.c.l.b16 %v2293
    %v2365 = vunpack.c.l.b16 %v2294
    %v2366 = vunpack.c.l.b16 %v2295
    %v2367 = vunpack.c.l.b16 %v2296
    %v2368 = vunpack.c.l.b16 %v2297
    %v2369 = vunpack.c.l.b16 %v2298
    %v2370 = vunpack.c.l.b16 %v2299
    %v2371 = vunpack.c.l.b16 %v2300
    %v2372 = vunpack.c.l.b16 %v2301
    %v2373 = vunpack.c.l.b16 %v2302
    %v2374 = vunpack.c.l.b16 %v2303
    %v2375 = vunpack.c.l.b16 %v2304
    %v2376 = vpack.c.b16 %v2345, %v2344
    %v2377 = vpack.c.b16 %v2347, %v2346
    %v2378 = vpack.c.b16 %v2349, %v2348
    %v2379 = vpack.c.b16 %v2351, %v2350
    %v2380 = vpack.c.b16 %v2353, %v2352
    %v2381 = vpack.c.b16 %v2355, %v2354
    %v2382 = vpack.c.b16 %v2357, %v2356
    %v2383 = vpack.c.b16 %v2359, %v2358
    %v2384 = vpack.c.b16 %v2361, %v2360
    %v2385 = vpack.c.b16 %v2363, %v2362
    %v2386 = vpack.c.b16 %v2365, %v2364
    %v2387 = vpack.c.b16 %v2367, %v2366
    %v2388 = vpack.c.b16 %v2369, %v2368
    %v2389 = vpack.c.b16 %v2371, %v2370
    %v2390 = vpack.c.b16 %v2373, %v2372
    %v2391 = vpack.c.b16 %v2375, %v2374
    %2408 = vmatprep.subr.bf16.mxu0 0
    %2409 = vmatpush1.bf16.msra.mxu0 %v2383
    %2410 = vmatprep.subr.bf16.mxu0 0
    %2411 = vmatpush1.bf16.msra.mxu0 %v2382
    %2412 = vmatprep.subr.bf16.mxu0 0
    %2413 = vmatpush1.bf16.msra.mxu0 %v2381
    %2414 = vmatprep.subr.bf16.mxu0 0
    %2415 = vmatpush1.bf16.msra.mxu0 %v2380
    %2416 = vmatprep.subr.bf16.mxu0 0
    %2417 = vmatpush1.bf16.msra.mxu0 %v2379
    %2418 = vmatprep.subr.bf16.mxu0 0
    %2419 = vmatpush1.bf16.msra.mxu0 %v2378
    %2420 = vmatprep.subr.bf16.mxu0 0
    %2421 = vmatpush1.bf16.msra.mxu0 %v2377
    %2422 = vmatprep.subr.bf16.mxu0 0
    %2423 = vmatpush1.bf16.msra.mxu0 %v2376
    %2424 = vmatprep.subr.bf16.mxu0 0
    %2425 = vmatpush2.bf16.msra.mxu0 %v2391
    %2426 = vmatprep.subr.bf16.mxu0 0
    %2427 = vmatpush2.bf16.msra.mxu0 %v2390
    %2428 = vmatprep.subr.bf16.mxu0 0
    %2429 = vmatpush2.bf16.msra.mxu0 %v2389
    %2430 = vmatprep.subr.bf16.mxu0 0
    %2431 = vmatpush2.bf16.msra.mxu0 %v2388
    %2432 = vmatprep.subr.bf16.mxu0 0
    %2433 = vmatpush2.bf16.msra.mxu0 %v2387
    %2434 = vmatprep.subr.bf16.mxu0 0
    %2435 = vmatpush2.bf16.msra.mxu0 %v2386
    %2436 = vmatprep.subr.bf16.mxu0 0
    %2437 = vmatpush2.bf16.msra.mxu0 %v2385
    %2438 = vmatprep.subr.bf16.mxu0 0
    %2439 = vmatpush2.bf16.msra.mxu0 %v2384
    %2440 = vmatprep.mubr.bf16.mxu0 %v2272
    %2441 = vmatmul.mubr.bf16.gmra.mxu0 %v2271
    %v2442 = vpop.f32.mrf.mxu0
    %v2443 = vadd.f32 %v2310, %v2442
    %v2444 = vpop.f32.mrf.mxu0
    %v2445 = vpop.f32.mrf.mxu0
    %v2446 = vpop.f32.mrf.mxu0
    %2447 = vdwg.mxu0
    %v2448 = vmul.f32 %v2443, 0.5
    %v2449 = vmul.f32 %v2448, 1.442695
    %v2450 = vpow.pop %v2449
    %v2451 = vld [vmem:[%s2] sm:$0xff]
    %2453 = vrot.lane.b32.xlu0 %v2450, 108
    %v2454 = vpop.permute.xlu0 %2453
    %v2456 = vmul.f32 %v2451, %v2454
    %v2457 = vadd.f32 %v2443, %v2456
    %v2458 = vpack.c.bf16 %v2457, %v2457
    %v2459 = vld [vmem:[%s10] sm:$0xff]
    %v2460 = vld [vmem:[%s10 + $0x8] sm:$0xff]
    %v2461 = vld [vmem:[%s10 + $0x10] sm:$0x33]
    %v2462 = vld [vmem:[%s11] sm:$0xff]
    %v2463 = vld [vmem:[%s11 + $0x8] sm:$0x11]
    %v2466 = vunpack.c.l.b16 %v2462
    %v2467 = vunpack.c.h.b16 %v2462
    %v2468 = vunpack.c.l.b16 %v2463
    %v2469 = vunpack.c.h.b16 %v2463
    %v2470 = vpack.c.b16 %v2468, %v2466
    %v2471 = vpack.c.b16 %v2469, %v2467
    %v2473 = vsel %vm350, %v2470, 0
    %v2476 = vsel %vm350, %v2471, 0
    %2478 = vmatprep.subr.bf16.mxu0 0
    %2479 = vmatpush1.bf16.msra.mxu0 0
    %2480 = vmatprep.subr.bf16.mxu0 0
    %2481 = vmatpush1.bf16.msra.mxu0 0
    %2482 = vmatprep.subr.bf16.mxu0 0
    %2483 = vmatpush1.bf16.msra.mxu0 0
    %2484 = vmatprep.subr.bf16.mxu0 0
    %2485 = vmatpush1.bf16.msra.mxu0 0
    %2486 = vmatprep.subr.bf16.mxu0 0
    %2487 = vmatpush1.bf16.msra.mxu0 0
    %2488 = vmatprep.subr.bf16.mxu0 0
    %2489 = vmatpush1.bf16.msra.mxu0 0
    %2490 = vmatprep.subr.bf16.mxu0 0
    %2491 = vmatpush1.bf16.msra.mxu0 0
    %2492 = vmatprep.subr.bf16.mxu0 %v2476
    %2493 = vmatpush1.bf16.msra.mxu0 %v2473
    %2494 = vmatprep.subr.bf16.mxu0 0
    %2495 = vmatpush2.bf16.msra.mxu0 0
    %2496 = vmatprep.subr.bf16.mxu0 0
    %2497 = vmatpush2.bf16.msra.mxu0 0
    %2498 = vmatprep.subr.bf16.mxu0 0
    %2499 = vmatpush2.bf16.msra.mxu0 0
    %2500 = vmatprep.subr.bf16.mxu0 0
    %2501 = vmatpush2.bf16.msra.mxu0 0
    %2502 = vmatprep.subr.bf16.mxu0 0
    %2503 = vmatpush2.bf16.msra.mxu0 0
    %2504 = vmatprep.subr.bf16.mxu0 0
    %2505 = vmatpush2.bf16.msra.mxu0 0
    %2506 = vmatprep.subr.bf16.mxu0 0
    %2507 = vmatpush2.bf16.msra.mxu0 0
    %2508 = vmatprep.subr.bf16.mxu0 0
    %2509 = vmatpush2.bf16.msra.mxu0 0
    %2510 = vmatprep.mubr.bf16.mxu0 0
    %2511 = vmatmul.mubr.bf16.gmra.mxu0 %v348
    %v2512 = vpop.f32.mrf.mxu0
    %v2513 = vadd.f32 0.0, %v2512
    %v2514 = vpop.f32.mrf.mxu0
    %v2515 = vadd.f32 0.0, %v2514
    %v2516 = vpop.f32.mrf.mxu0
    %v2517 = vpop.f32.mrf.mxu0
    %2518 = vdwg.mxu0
    %v2522 = vunpack.c.l.b16 %v2459
    %v2523 = vunpack.c.h.b16 %v2459
    %v2524 = vunpack.c.l.b16 %v2460
    %v2525 = vunpack.c.h.b16 %v2460
    %v2526 = vunpack.c.l.b16 %v2461
    %v2527 = vunpack.c.h.b16 %v2461
    %v2528 = vpack.c.b16 %v2524, %v2522
    %v2529 = vpack.c.b16 %v2525, %v2523
    %v2530 = vpack.c.b16 %v2526, %v2526
    %v2531 = vpack.c.b16 %v2527, %v2527
    %vm2534 = vcmask 162816
    %v2536 = vsel %vm2534, %v2458, 0
    %vm2538 = vcmask 1041408
    %v2540 = vsel %vm2538, %v2530, 0
    %v2543 = vsel %vm2538, %v2531, 0
    %2545 = vmatprep.subr.bf16.mxu0 0
    %2546 = vmatpush1.bf16.msra.mxu0 0
    %2547 = vmatprep.subr.bf16.mxu0 0
    %2548 = vmatpush1.bf16.msra.mxu0 0
    %2549 = vmatprep.subr.bf16.mxu0 0
    %2550 = vmatpush1.bf16.msra.mxu0 0
    %2551 = vmatprep.subr.bf16.mxu0 0
    %2552 = vmatpush1.bf16.msra.mxu0 0
    %2553 = vmatprep.subr.bf16.mxu0 0
    %2554 = vmatpush1.bf16.msra.mxu0 0
    %2555 = vmatprep.subr.bf16.mxu0 0
    %2556 = vmatpush1.bf16.msra.mxu0 0
    %2557 = vmatprep.subr.bf16.mxu0 %v2543
    %2558 = vmatpush1.bf16.msra.mxu0 %v2540
    %2559 = vmatprep.subr.bf16.mxu0 %v2529
    %2560 = vmatpush1.bf16.msra.mxu0 %v2528
    %2561 = vmatprep.subr.bf16.mxu0 0
    %2562 = vmatpush2.bf16.msra.mxu0 0
    %2563 = vmatprep.subr.bf16.mxu0 0
    %2564 = vmatpush2.bf16.msra.mxu0 0
    %2565 = vmatprep.subr.bf16.mxu0 0
    %2566 = vmatpush2.bf16.msra.mxu0 0
    %2567 = vmatprep.subr.bf16.mxu0 0
    %2568 = vmatpush2.bf16.msra.mxu0 0
    %2569 = vmatprep.subr.bf16.mxu0 0
    %2570 = vmatpush2.bf16.msra.mxu0 0
    %2571 = vmatprep.subr.bf16.mxu0 0
    %2572 = vmatpush2.bf16.msra.mxu0 0
    %2573 = vmatprep.subr.bf16.mxu0 0
    %2574 = vmatpush2.bf16.msra.mxu0 0
    %2575 = vmatprep.subr.bf16.mxu0 0
    %2576 = vmatpush2.bf16.msra.mxu0 0
    %2577 = vmatprep.mubr.bf16.mxu0 0
    %2578 = vmatmul.mubr.bf16.gmra.mxu0 %v2536
    %v2579 = vpop.f32.mrf.mxu0
    %v2580 = vadd.f32 %v2513, %v2579
    %v2581 = vpop.f32.mrf.mxu0
    %v2582 = vadd.f32 %v2515, %v2581
    %v2583 = vpop.f32.mrf.mxu0
    %v2584 = vpop.f32.mrf.mxu0
    %2585 = vdwg.mxu0
    %v2586 = vld [vmem:[%s12] sm:$0x3]
    %v2588 = vlaneseq
    %v2589 = vshrl.u32 %v2588, 7
    %v2590 = vsub.s32 0, %v2589
    %v2591 = vrot.slane %v2586, %v2590
    %v2592 = vlaneseq
    %v2593 = vshrl.u32 %v2592, 7
    %v2594 = vsub.s32 1, %v2593
    %v2595 = vrot.slane %v2586, %v2594
    %v2598 = vadd.f32 %v2580, %v2591
    %v2599 = vadd.f32 %v2582, %v2595
    %v2600 = vmax.f32 %v2598, 0.0
    %v2601 = vmax.f32 %v2599, 0.0
    %v2602 = vpack.c.bf16 %v2600, %v2600
    %v2603 = vpack.c.bf16 %v2601, %v2601
    %v2604 = vld [vmem:[#allocation6] sm:$0xff]
    %v2605 = vld [vmem:[#allocation6 + $0x8] sm:$0xff]
    %v2606 = vld [vmem:[#allocation6 + $0x10] sm:$0xff]
    %v2607 = vld [vmem:[#allocation6 + $0x18] sm:$0xff]
    %v2608 = vld [vmem:[#allocation6 + $0x20] sm:$0xff]
    %v2609 = vld [vmem:[#allocation6 + $0x28] sm:$0xff]
    %v2610 = vld [vmem:[#allocation6 + $0x30] sm:$0xff]
    %v2611 = vld [vmem:[#allocation6 + $0x38] sm:$0xff]
    %v2612 = vld [vmem:[#allocation6 + $0x40] sm:$0xff]
    %v2613 = vld [vmem:[#allocation6 + $0x48] sm:$0xff]
    %v2614 = vld [vmem:[#allocation6 + $0x50] sm:$0xff]
    %v2615 = vld [vmem:[#allocation6 + $0x58] sm:$0xff]
    %v2616 = vld [vmem:[#allocation6 + $0x60] sm:$0xff]
    %v2617 = vld [vmem:[#allocation6 + $0x68] sm:$0xff]
    %v2618 = vld [vmem:[#allocation6 + $0x70] sm:$0xff]
    %v2619 = vld [vmem:[#allocation6 + $0x78] sm:$0xff]
    %v2620 = vld [vmem:[#allocation6 + $0x80] sm:$0xff]
    %v2621 = vld [vmem:[#allocation6 + $0x88] sm:$0xff]
    %v2622 = vld [vmem:[#allocation6 + $0x90] sm:$0xff]
    %v2623 = vld [vmem:[#allocation6 + $0x98] sm:$0xff]
    %v2624 = vld [vmem:[#allocation6 + $0xa0] sm:$0xff]
    %v2625 = vld [vmem:[#allocation6 + $0xa8] sm:$0xff]
    %v2626 = vld [vmem:[#allocation6 + $0xb0] sm:$0xff]
    %v2627 = vld [vmem:[#allocation6 + $0xb8] sm:$0xff]
    %v2628 = vld [vmem:[#allocation6 + $0xc0] sm:$0xff]
    %v2629 = vld [vmem:[#allocation6 + $0xc8] sm:$0xff]
    %v2630 = vld [vmem:[#allocation6 + $0xd0] sm:$0xff]
    %v2631 = vld [vmem:[#allocation6 + $0xd8] sm:$0xff]
    %v2632 = vld [vmem:[#allocation6 + $0xe0] sm:$0xff]
    %v2633 = vld [vmem:[#allocation6 + $0xe8] sm:$0xff]
    %v2634 = vld [vmem:[#allocation6 + $0xf0] sm:$0xff]
    %v2635 = vld [vmem:[#allocation6 + $0xf8] sm:$0xff]
    %v2636 = vld [vmem:[#allocation6 + $0x100] sm:$0xff]
    %v2637 = vld [vmem:[#allocation6 + $0x108] sm:$0xff]
    %v2638 = vld [vmem:[#allocation6 + $0x110] sm:$0xff]
    %v2639 = vld [vmem:[#allocation6 + $0x118] sm:$0xff]
    %v2640 = vld [vmem:[#allocation6 + $0x120] sm:$0xff]
    %v2641 = vld [vmem:[#allocation6 + $0x128] sm:$0xff]
    %v2642 = vld [vmem:[#allocation6 + $0x130] sm:$0xff]
    %v2643 = vld [vmem:[#allocation6 + $0x138] sm:$0xff]
    %v2644 = vld [vmem:[#allocation6 + $0x140] sm:$0xff]
    %v2645 = vld [vmem:[#allocation6 + $0x148] sm:$0xff]
    %v2646 = vld [vmem:[#allocation6 + $0x150] sm:$0xff]
    %v2647 = vld [vmem:[#allocation6 + $0x158] sm:$0xff]
    %v2648 = vld [vmem:[#allocation6 + $0x160] sm:$0xff]
    %v2649 = vld [vmem:[#allocation6 + $0x168] sm:$0xff]
    %v2650 = vld [vmem:[#allocation6 + $0x170] sm:$0xff]
    %v2651 = vld [vmem:[#allocation6 + $0x178] sm:$0xff]
    %v2652 = vld [vmem:[#allocation6 + $0x180] sm:$0xff]
    %v2653 = vld [vmem:[#allocation6 + $0x188] sm:$0xff]
    %v2654 = vld [vmem:[#allocation6 + $0x190] sm:$0xff]
    %v2655 = vld [vmem:[#allocation6 + $0x198] sm:$0xff]
    %v2656 = vld [vmem:[#allocation6 + $0x1a0] sm:$0xff]
    %v2657 = vld [vmem:[#allocation6 + $0x1a8] sm:$0xff]
    %v2658 = vld [vmem:[#allocation6 + $0x1b0] sm:$0xff]
    %v2659 = vld [vmem:[#allocation6 + $0x1b8] sm:$0xff]
    %v2660 = vld [vmem:[#allocation6 + $0x1c0] sm:$0xff]
    %v2661 = vld [vmem:[#allocation6 + $0x1c8] sm:$0xff]
    %v2662 = vld [vmem:[#allocation6 + $0x1d0] sm:$0xff]
    %v2663 = vld [vmem:[#allocation6 + $0x1d8] sm:$0xff]
    %v2664 = vld [vmem:[#allocation6 + $0x1e0] sm:$0xff]
    %v2665 = vld [vmem:[#allocation6 + $0x1e8] sm:$0xff]
    %v2666 = vld [vmem:[#allocation6 + $0x1f0] sm:$0xff]
    %v2667 = vld [vmem:[#allocation6 + $0x1f8] sm:$0xff]
    %v2668 = vld [vmem:[%s14] sm:$0xf]
    %v2670 = vlaneseq
    %v2671 = vshrl.u32 %v2670, 7
    %v2672 = vsub.s32 0, %v2671
    %v2673 = vrot.slane %v2668, %v2672
    %v2674 = vlaneseq
    %v2675 = vshrl.u32 %v2674, 7
    %v2676 = vsub.s32 1, %v2675
    %v2677 = vrot.slane %v2668, %v2676
    %v2678 = vlaneseq
    %v2679 = vshrl.u32 %v2678, 7
    %v2680 = vsub.s32 2, %v2679
    %v2681 = vrot.slane %v2668, %v2680
    %v2682 = vlaneseq
    %v2683 = vshrl.u32 %v2682, 7
    %v2684 = vsub.s32 3, %v2683
    %v2685 = vrot.slane %v2668, %v2684
    %v2754 = vunpack.c.l.b16 %v2604
    %v2755 = vunpack.c.h.b16 %v2604
    %v2756 = vunpack.c.l.b16 %v2605
    %v2757 = vunpack.c.h.b16 %v2605
    %v2758 = vunpack.c.l.b16 %v2606
    %v2759 = vunpack.c.h.b16 %v2606
    %v2760 = vunpack.c.l.b16 %v2607
    %v2761 = vunpack.c.h.b16 %v2607
    %v2762 = vunpack.c.l.b16 %v2608
    %v2763 = vunpack.c.h.b16 %v2608
    %v2764 = vunpack.c.l.b16 %v2609
    %v2765 = vunpack.c.h.b16 %v2609
    %v2766 = vunpack.c.l.b16 %v2610
    %v2767 = vunpack.c.h.b16 %v2610
    %v2768 = vunpack.c.l.b16 %v2611
    %v2769 = vunpack.c.h.b16 %v2611
    %v2770 = vunpack.c.l.b16 %v2612
    %v2771 = vunpack.c.h.b16 %v2612
    %v2772 = vunpack.c.l.b16 %v2613
    %v2773 = vunpack.c.h.b16 %v2613
    %v2774 = vunpack.c.l.b16 %v2614
    %v2775 = vunpack.c.h.b16 %v2614
    %v2776 = vunpack.c.l.b16 %v2615
    %v2777 = vunpack.c.h.b16 %v2615
    %v2778 = vunpack.c.l.b16 %v2616
    %v2779 = vunpack.c.h.b16 %v2616
    %v2780 = vunpack.c.l.b16 %v2617
    %v2781 = vunpack.c.h.b16 %v2617
    %v2782 = vunpack.c.l.b16 %v2618
    %v2783 = vunpack.c.h.b16 %v2618
    %v2784 = vunpack.c.l.b16 %v2619
    %v2785 = vunpack.c.h.b16 %v2619
    %v2786 = vunpack.c.l.b16 %v2620
    %v2787 = vunpack.c.h.b16 %v2620
    %v2788 = vunpack.c.l.b16 %v2621
    %v2789 = vunpack.c.h.b16 %v2621
    %v2790 = vunpack.c.l.b16 %v2622
    %v2791 = vunpack.c.h.b16 %v2622
    %v2792 = vunpack.c.l.b16 %v2623
    %v2793 = vunpack.c.h.b16 %v2623
    %v2794 = vunpack.c.l.b16 %v2624
    %v2795 = vunpack.c.h.b16 %v2624
    %v2796 = vunpack.c.l.b16 %v2625
    %v2797 = vunpack.c.h.b16 %v2625
    %v2798 = vunpack.c.l.b16 %v2626
    %v2799 = vunpack.c.h.b16 %v2626
    %v2800 = vunpack.c.l.b16 %v2627
    %v2801 = vunpack.c.h.b16 %v2627
    %v2802 = vunpack.c.l.b16 %v2628
    %v2803 = vunpack.c.h.b16 %v2628
    %v2804 = vunpack.c.l.b16 %v2629
    %v2805 = vunpack.c.h.b16 %v2629
    %v2806 = vunpack.c.l.b16 %v2630
    %v2807 = vunpack.c.h.b16 %v2630
    %v2808 = vunpack.c.l.b16 %v2631
    %v2809 = vunpack.c.h.b16 %v2631
    %v2810 = vunpack.c.l.b16 %v2632
    %v2811 = vunpack.c.h.b16 %v2632
    %v2812 = vunpack.c.l.b16 %v2633
    %v2813 = vunpack.c.h.b16 %v2633
    %v2814 = vunpack.c.l.b16 %v2634
    %v2815 = vunpack.c.h.b16 %v2634
    %v2816 = vunpack.c.l.b16 %v2635
    %v2817 = vunpack.c.h.b16 %v2635
    %v2818 = vunpack.c.l.b16 %v2636
    %v2819 = vunpack.c.h.b16 %v2636
    %v2820 = vunpack.c.l.b16 %v2637
    %v2821 = vunpack.c.h.b16 %v2637
    %v2822 = vunpack.c.l.b16 %v2638
    %v2823 = vunpack.c.h.b16 %v2638
    %v2824 = vunpack.c.l.b16 %v2639
    %v2825 = vunpack.c.h.b16 %v2639
    %v2826 = vunpack.c.l.b16 %v2640
    %v2827 = vunpack.c.h.b16 %v2640
    %v2828 = vunpack.c.l.b16 %v2641
    %v2829 = vunpack.c.h.b16 %v2641
    %v2830 = vunpack.c.l.b16 %v2642
    %v2831 = vunpack.c.h.b16 %v2642
    %v2832 = vunpack.c.l.b16 %v2643
    %v2833 = vunpack.c.h.b16 %v2643
    %v2834 = vunpack.c.l.b16 %v2644
    %v2835 = vunpack.c.h.b16 %v2644
    %v2836 = vunpack.c.l.b16 %v2645
    %v2837 = vunpack.c.h.b16 %v2645
    %v2838 = vunpack.c.l.b16 %v2646
    %v2839 = vunpack.c.h.b16 %v2646
    %v2840 = vunpack.c.l.b16 %v2647
    %v2841 = vunpack.c.h.b16 %v2647
    %v2842 = vunpack.c.l.b16 %v2648
    %v2843 = vunpack.c.h.b16 %v2648
    %v2844 = vunpack.c.l.b16 %v2649
    %v2845 = vunpack.c.h.b16 %v2649
    %v2846 = vunpack.c.l.b16 %v2650
    %v2847 = vunpack.c.h.b16 %v2650
    %v2848 = vunpack.c.l.b16 %v2651
    %v2849 = vunpack.c.h.b16 %v2651
    %v2850 = vunpack.c.l.b16 %v2652
    %v2851 = vunpack.c.h.b16 %v2652
    %v2852 = vunpack.c.l.b16 %v2653
    %v2853 = vunpack.c.h.b16 %v2653
    %v2854 = vunpack.c.l.b16 %v2654
    %v2855 = vunpack.c.h.b16 %v2654
    %v2856 = vunpack.c.l.b16 %v2655
    %v2857 = vunpack.c.h.b16 %v2655
    %v2858 = vunpack.c.l.b16 %v2656
    %v2859 = vunpack.c.h.b16 %v2656
    %v2860 = vunpack.c.l.b16 %v2657
    %v2861 = vunpack.c.h.b16 %v2657
    %v2862 = vunpack.c.l.b16 %v2658
    %v2863 = vunpack.c.h.b16 %v2658
    %v2864 = vunpack.c.l.b16 %v2659
    %v2865 = vunpack.c.h.b16 %v2659
    %v2866 = vunpack.c.l.b16 %v2660
    %v2867 = vunpack.c.h.b16 %v2660
    %v2868 = vunpack.c.l.b16 %v2661
    %v2869 = vunpack.c.h.b16 %v2661
    %v2870 = vunpack.c.l.b16 %v2662
    %v2871 = vunpack.c.h.b16 %v2662
    %v2872 = vunpack.c.l.b16 %v2663
    %v2873 = vunpack.c.h.b16 %v2663
    %v2874 = vunpack.c.l.b16 %v2664
    %v2875 = vunpack.c.h.b16 %v2664
    %v2876 = vunpack.c.l.b16 %v2665
    %v2877 = vunpack.c.h.b16 %v2665
    %v2878 = vunpack.c.l.b16 %v2666
    %v2879 = vunpack.c.h.b16 %v2666
    %v2880 = vunpack.c.l.b16 %v2667
    %v2881 = vunpack.c.h.b16 %v2667
    %v2882 = vpack.c.b16 %v2758, %v2754
    %v2883 = vpack.c.b16 %v2759, %v2755
    %v2884 = vpack.c.b16 %v2760, %v2756
    %v2885 = vpack.c.b16 %v2761, %v2757
    %v2886 = vpack.c.b16 %v2766, %v2762
    %v2887 = vpack.c.b16 %v2767, %v2763
    %v2888 = vpack.c.b16 %v2768, %v2764
    %v2889 = vpack.c.b16 %v2769, %v2765
    %v2890 = vpack.c.b16 %v2774, %v2770
    %v2891 = vpack.c.b16 %v2775, %v2771
    %v2892 = vpack.c.b16 %v2776, %v2772
    %v2893 = vpack.c.b16 %v2777, %v2773
    %v2894 = vpack.c.b16 %v2782, %v2778
    %v2895 = vpack.c.b16 %v2783, %v2779
    %v2896 = vpack.c.b16 %v2784, %v2780
    %v2897 = vpack.c.b16 %v2785, %v2781
    %v2898 = vpack.c.b16 %v2790, %v2786
    %v2899 = vpack.c.b16 %v2791, %v2787
    %v2900 = vpack.c.b16 %v2792, %v2788
    %v2901 = vpack.c.b16 %v2793, %v2789
    %v2902 = vpack.c.b16 %v2798, %v2794
    %v2903 = vpack.c.b16 %v2799, %v2795
    %v2904 = vpack.c.b16 %v2800, %v2796
    %v2905 = vpack.c.b16 %v2801, %v2797
    %v2906 = vpack.c.b16 %v2806, %v2802
    %v2907 = vpack.c.b16 %v2807, %v2803
    %v2908 = vpack.c.b16 %v2808, %v2804
    %v2909 = vpack.c.b16 %v2809, %v2805
    %v2910 = vpack.c.b16 %v2814, %v2810
    %v2911 = vpack.c.b16 %v2815, %v2811
    %v2912 = vpack.c.b16 %v2816, %v2812
    %v2913 = vpack.c.b16 %v2817, %v2813
    %v2914 = vpack.c.b16 %v2822, %v2818
    %v2915 = vpack.c.b16 %v2823, %v2819
    %v2916 = vpack.c.b16 %v2824, %v2820
    %v2917 = vpack.c.b16 %v2825, %v2821
    %v2918 = vpack.c.b16 %v2830, %v2826
    %v2919 = vpack.c.b16 %v2831, %v2827
    %v2920 = vpack.c.b16 %v2832, %v2828
    %v2921 = vpack.c.b16 %v2833, %v2829
    %v2922 = vpack.c.b16 %v2838, %v2834
    %v2923 = vpack.c.b16 %v2839, %v2835
    %v2924 = vpack.c.b16 %v2840, %v2836
    %v2925 = vpack.c.b16 %v2841, %v2837
    %v2926 = vpack.c.b16 %v2846, %v2842
    %v2927 = vpack.c.b16 %v2847, %v2843
    %v2928 = vpack.c.b16 %v2848, %v2844
    %v2929 = vpack.c.b16 %v2849, %v2845
    %v2930 = vpack.c.b16 %v2854, %v2850
    %v2931 = vpack.c.b16 %v2855, %v2851
    %v2932 = vpack.c.b16 %v2856, %v2852
    %v2933 = vpack.c.b16 %v2857, %v2853
    %v2934 = vpack.c.b16 %v2862, %v2858
    %v2935 = vpack.c.b16 %v2863, %v2859
    %v2936 = vpack.c.b16 %v2864, %v2860
    %v2937 = vpack.c.b16 %v2865, %v2861
    %v2938 = vpack.c.b16 %v2870, %v2866
    %v2939 = vpack.c.b16 %v2871, %v2867
    %v2940 = vpack.c.b16 %v2872, %v2868
    %v2941 = vpack.c.b16 %v2873, %v2869
    %v2942 = vpack.c.b16 %v2878, %v2874
    %v2943 = vpack.c.b16 %v2879, %v2875
    %v2944 = vpack.c.b16 %v2880, %v2876
    %v2945 = vpack.c.b16 %v2881, %v2877
    %3010 = vmatprep.subr.bf16.mxu0 %v2911
    %3011 = vmatpush1.bf16.msra.mxu0 %v2910
    %3012 = vmatprep.subr.bf16.mxu0 %v2907
    %3013 = vmatpush1.bf16.msra.mxu0 %v2906
    %3014 = vmatprep.subr.bf16.mxu0 %v2903
    %3015 = vmatpush1.bf16.msra.mxu0 %v2902
    %3016 = vmatprep.subr.bf16.mxu0 %v2899
    %3017 = vmatpush1.bf16.msra.mxu0 %v2898
    %3018 = vmatprep.subr.bf16.mxu0 %v2895
    %3019 = vmatpush1.bf16.msra.mxu0 %v2894
    %3020 = vmatprep.subr.bf16.mxu0 %v2891
    %3021 = vmatpush1.bf16.msra.mxu0 %v2890
    %3022 = vmatprep.subr.bf16.mxu0 %v2887
    %3023 = vmatpush1.bf16.msra.mxu0 %v2886
    %3024 = vmatprep.subr.bf16.mxu0 %v2883
    %3025 = vmatpush1.bf16.msra.mxu0 %v2882
    %3026 = vmatprep.subr.bf16.mxu0 %v2943
    %3027 = vmatpush2.bf16.msra.mxu0 %v2942
    %3028 = vmatprep.subr.bf16.mxu0 %v2939
    %3029 = vmatpush2.bf16.msra.mxu0 %v2938
    %3030 = vmatprep.subr.bf16.mxu0 %v2935
    %3031 = vmatpush2.bf16.msra.mxu0 %v2934
    %3032 = vmatprep.subr.bf16.mxu0 %v2931
    %3033 = vmatpush2.bf16.msra.mxu0 %v2930
    %3034 = vmatprep.subr.bf16.mxu0 %v2927
    %3035 = vmatpush2.bf16.msra.mxu0 %v2926
    %3036 = vmatprep.subr.bf16.mxu0 %v2923
    %3037 = vmatpush2.bf16.msra.mxu0 %v2922
    %3038 = vmatprep.subr.bf16.mxu0 %v2919
    %3039 = vmatpush2.bf16.msra.mxu0 %v2918
    %3040 = vmatprep.subr.bf16.mxu0 %v2915
    %3041 = vmatpush2.bf16.msra.mxu0 %v2914
    %3042 = vmatprep.mubr.bf16.mxu0 %v2603
    %3043 = vmatmul.mubr.bf16.gmra.mxu0 %v2602
    %v3044 = vpop.f32.mrf.mxu0
    %v3045 = vadd.f32 %v2673, %v3044
    %v3046 = vpop.f32.mrf.mxu0
    %v3047 = vadd.f32 %v2677, %v3046
    %v3048 = vpop.f32.mrf.mxu0
    %v3049 = vpop.f32.mrf.mxu0
    %3050 = vdwg.mxu0
    %3051 = vmatprep.subr.bf16.mxu0 %v2913
    %3052 = vmatpush1.bf16.msra.mxu0 %v2912
    %3053 = vmatprep.subr.bf16.mxu0 %v2909
    %3054 = vmatpush1.bf16.msra.mxu0 %v2908
    %3055 = vmatprep.subr.bf16.mxu0 %v2905
    %3056 = vmatpush1.bf16.msra.mxu0 %v2904
    %3057 = vmatprep.subr.bf16.mxu0 %v2901
    %3058 = vmatpush1.bf16.msra.mxu0 %v2900
    %3059 = vmatprep.subr.bf16.mxu0 %v2897
    %3060 = vmatpush1.bf16.msra.mxu0 %v2896
    %3061 = vmatprep.subr.bf16.mxu0 %v2893
    %3062 = vmatpush1.bf16.msra.mxu0 %v2892
    %3063 = vmatprep.subr.bf16.mxu0 %v2889
    %3064 = vmatpush1.bf16.msra.mxu0 %v2888
    %3065 = vmatprep.subr.bf16.mxu0 %v2885
    %3066 = vmatpush1.bf16.msra.mxu0 %v2884
    %3067 = vmatprep.subr.bf16.mxu0 %v2945
    %3068 = vmatpush2.bf16.msra.mxu0 %v2944
    %3069 = vmatprep.subr.bf16.mxu0 %v2941
    %3070 = vmatpush2.bf16.msra.mxu0 %v2940
    %3071 = vmatprep.subr.bf16.mxu0 %v2937
    %3072 = vmatpush2.bf16.msra.mxu0 %v2936
    %3073 = vmatprep.subr.bf16.mxu0 %v2933
    %3074 = vmatpush2.bf16.msra.mxu0 %v2932
    %3075 = vmatprep.subr.bf16.mxu0 %v2929
    %3076 = vmatpush2.bf16.msra.mxu0 %v2928
    %3077 = vmatprep.subr.bf16.mxu0 %v2925
    %3078 = vmatpush2.bf16.msra.mxu0 %v2924
    %3079 = vmatprep.subr.bf16.mxu0 %v2921
    %3080 = vmatpush2.bf16.msra.mxu0 %v2920
    %3081 = vmatprep.subr.bf16.mxu0 %v2917
    %3082 = vmatpush2.bf16.msra.mxu0 %v2916
    %3083 = vmatprep.mubr.bf16.mxu0 %v2603
    %3084 = vmatmul.mubr.bf16.gmra.mxu0 %v2602
    %v3085 = vpop.f32.mrf.mxu0
    %v3086 = vadd.f32 %v2681, %v3085
    %v3087 = vpop.f32.mrf.mxu0
    %v3088 = vadd.f32 %v2685, %v3087
    %v3089 = vpop.f32.mrf.mxu0
    %v3090 = vpop.f32.mrf.mxu0
    %3091 = vdwg.mxu0
    %v3092 = vmax.f32 %v3045, 0.0
    %v3093 = vmax.f32 %v3047, 0.0
    %v3094 = vmax.f32 %v3086, 0.0
    %v3095 = vmax.f32 %v3088, 0.0
    %v3096 = vpack.c.bf16 %v3092, %v3092
    %v3097 = vpack.c.bf16 %v3093, %v3093
    %v3098 = vpack.c.bf16 %v3094, %v3094
    %v3099 = vpack.c.bf16 %v3095, %v3095
    %v3100 = vld [vmem:[#allocation7] sm:$0xff]
    %v3101 = vld [vmem:[#allocation7 + $0x8] sm:$0xff]
    %v3102 = vld [vmem:[#allocation7 + $0x10] sm:$0xff]
    %v3103 = vld [vmem:[#allocation7 + $0x18] sm:$0xf]
    %v3104 = vld [vmem:[#allocation7 + $0x1c] sm:$0xff]
    %v3105 = vld [vmem:[#allocation7 + $0x24] sm:$0xff]
    %v3106 = vld [vmem:[#allocation7 + $0x2c] sm:$0xff]
    %v3107 = vld [vmem:[#allocation7 + $0x34] sm:$0xf]
    %v3108 = vld [vmem:[#allocation7 + $0x38] sm:$0xff]
    %v3109 = vld [vmem:[#allocation7 + $0x40] sm:$0xff]
    %v3110 = vld [vmem:[#allocation7 + $0x48] sm:$0xff]
    %v3111 = vld [vmem:[#allocation7 + $0x50] sm:$0xf]
    %v3112 = vld [vmem:[#allocation7 + $0x54] sm:$0xff]
    %v3113 = vld [vmem:[#allocation7 + $0x5c] sm:$0xff]
    %v3114 = vld [vmem:[#allocation7 + $0x64] sm:$0xff]
    %v3115 = vld [vmem:[#allocation7 + $0x6c] sm:$0xf]
    %v3116 = vld [vmem:[#allocation7 + $0x70] sm:$0xff]
    %v3117 = vld [vmem:[#allocation7 + $0x78] sm:$0xff]
    %v3118 = vld [vmem:[#allocation7 + $0x80] sm:$0xff]
    %v3119 = vld [vmem:[#allocation7 + $0x88] sm:$0xf]
    %v3120 = vld [vmem:[#allocation7 + $0x8c] sm:$0xff]
    %v3121 = vld [vmem:[#allocation7 + $0x94] sm:$0xff]
    %v3122 = vld [vmem:[#allocation7 + $0x9c] sm:$0xff]
    %v3123 = vld [vmem:[#allocation7 + $0xa4] sm:$0xf]
    %v3124 = vld [vmem:[#allocation7 + $0xa8] sm:$0xff]
    %v3125 = vld [vmem:[#allocation7 + $0xb0] sm:$0xff]
    %v3126 = vld [vmem:[#allocation7 + $0xb8] sm:$0xff]
    %v3127 = vld [vmem:[#allocation7 + $0xc0] sm:$0xf]
    %v3128 = vld [vmem:[#allocation7 + $0xc4] sm:$0xff]
    %v3129 = vld [vmem:[#allocation7 + $0xcc] sm:$0xff]
    %v3130 = vld [vmem:[#allocation7 + $0xd4] sm:$0xff]
    %v3131 = vld [vmem:[#allocation7 + $0xdc] sm:$0xf]
    %v3132 = vld [vmem:[#allocation7 + $0xe0] sm:$0xff]
    %v3133 = vld [vmem:[#allocation7 + $0xe8] sm:$0xff]
    %v3134 = vld [vmem:[#allocation7 + $0xf0] sm:$0xff]
    %v3135 = vld [vmem:[#allocation7 + $0xf8] sm:$0xf]
    %v3136 = vld [vmem:[#allocation7 + $0xfc] sm:$0xff]
    %v3137 = vld [vmem:[#allocation7 + $0x104] sm:$0xff]
    %v3138 = vld [vmem:[#allocation7 + $0x10c] sm:$0xff]
    %v3139 = vld [vmem:[#allocation7 + $0x114] sm:$0xf]
    %v3140 = vld [vmem:[#allocation7 + $0x118] sm:$0xff]
    %v3141 = vld [vmem:[#allocation7 + $0x120] sm:$0xff]
    %v3142 = vld [vmem:[#allocation7 + $0x128] sm:$0xff]
    %v3143 = vld [vmem:[#allocation7 + $0x130] sm:$0xf]
    %v3144 = vld [vmem:[#allocation7 + $0x134] sm:$0xff]
    %v3145 = vld [vmem:[#allocation7 + $0x13c] sm:$0xff]
    %v3146 = vld [vmem:[#allocation7 + $0x144] sm:$0xff]
    %v3147 = vld [vmem:[#allocation7 + $0x14c] sm:$0xf]
    %v3148 = vld [vmem:[#allocation7 + $0x150] sm:$0xff]
    %v3149 = vld [vmem:[#allocation7 + $0x158] sm:$0xff]
    %v3150 = vld [vmem:[#allocation7 + $0x160] sm:$0xff]
    %v3151 = vld [vmem:[#allocation7 + $0x168] sm:$0xf]
    %v3152 = vld [vmem:[#allocation7 + $0x16c] sm:$0xff]
    %v3153 = vld [vmem:[#allocation7 + $0x174] sm:$0xff]
    %v3154 = vld [vmem:[#allocation7 + $0x17c] sm:$0xff]
    %v3155 = vld [vmem:[#allocation7 + $0x184] sm:$0xf]
    %v3156 = vld [vmem:[#allocation7 + $0x188] sm:$0xff]
    %v3157 = vld [vmem:[#allocation7 + $0x190] sm:$0xff]
    %v3158 = vld [vmem:[#allocation7 + $0x198] sm:$0xff]
    %v3159 = vld [vmem:[#allocation7 + $0x1a0] sm:$0xf]
    %v3160 = vld [vmem:[#allocation7 + $0x1a4] sm:$0xff]
    %v3161 = vld [vmem:[#allocation7 + $0x1ac] sm:$0xff]
    %v3162 = vld [vmem:[#allocation7 + $0x1b4] sm:$0xff]
    %v3163 = vld [vmem:[#allocation7 + $0x1bc] sm:$0xf]
    %v3164 = vld [vmem:[#allocation7 + $0x1c0] sm:$0xff]
    %v3165 = vld [vmem:[#allocation7 + $0x1c8] sm:$0xff]
    %v3166 = vld [vmem:[#allocation7 + $0x1d0] sm:$0xff]
    %v3167 = vld [vmem:[#allocation7 + $0x1d8] sm:$0xf]
    %v3168 = vld [vmem:[#allocation7 + $0x1dc] sm:$0xff]
    %v3169 = vld [vmem:[#allocation7 + $0x1e4] sm:$0xff]
    %v3170 = vld [vmem:[#allocation7 + $0x1ec] sm:$0xff]
    %v3171 = vld [vmem:[#allocation7 + $0x1f4] sm:$0xf]
    %v3172 = vld [vmem:[#allocation7 + $0x1f8] sm:$0xff]
    %v3173 = vld [vmem:[#allocation7 + $0x200] sm:$0xff]
    %v3174 = vld [vmem:[#allocation7 + $0x208] sm:$0xff]
    %v3175 = vld [vmem:[#allocation7 + $0x210] sm:$0xf]
    %v3176 = vld [vmem:[#allocation7 + $0x214] sm:$0xff]
    %v3177 = vld [vmem:[#allocation7 + $0x21c] sm:$0xff]
    %v3178 = vld [vmem:[#allocation7 + $0x224] sm:$0xff]
    %v3179 = vld [vmem:[#allocation7 + $0x22c] sm:$0xf]
    %v3180 = vld [vmem:[#allocation7 + $0x230] sm:$0xff]
    %v3181 = vld [vmem:[#allocation7 + $0x238] sm:$0xff]
    %v3182 = vld [vmem:[#allocation7 + $0x240] sm:$0xff]
    %v3183 = vld [vmem:[#allocation7 + $0x248] sm:$0xf]
    %v3184 = vld [vmem:[#allocation7 + $0x24c] sm:$0xff]
    %v3185 = vld [vmem:[#allocation7 + $0x254] sm:$0xff]
    %v3186 = vld [vmem:[#allocation7 + $0x25c] sm:$0xff]
    %v3187 = vld [vmem:[#allocation7 + $0x264] sm:$0xf]
    %v3188 = vld [vmem:[#allocation7 + $0x268] sm:$0xff]
    %v3189 = vld [vmem:[#allocation7 + $0x270] sm:$0xff]
    %v3190 = vld [vmem:[#allocation7 + $0x278] sm:$0xff]
    %v3191 = vld [vmem:[#allocation7 + $0x280] sm:$0xf]
    %v3192 = vld [vmem:[#allocation7 + $0x284] sm:$0xff]
    %v3193 = vld [vmem:[#allocation7 + $0x28c] sm:$0xff]
    %v3194 = vld [vmem:[#allocation7 + $0x294] sm:$0xff]
    %v3195 = vld [vmem:[#allocation7 + $0x29c] sm:$0xf]
    %v3196 = vld [vmem:[#allocation7 + $0x2a0] sm:$0xff]
    %v3197 = vld [vmem:[#allocation7 + $0x2a8] sm:$0xff]
    %v3198 = vld [vmem:[#allocation7 + $0x2b0] sm:$0xff]
    %v3199 = vld [vmem:[#allocation7 + $0x2b8] sm:$0xf]
    %v3200 = vld [vmem:[#allocation7 + $0x2bc] sm:$0xff]
    %v3201 = vld [vmem:[#allocation7 + $0x2c4] sm:$0xff]
    %v3202 = vld [vmem:[#allocation7 + $0x2cc] sm:$0xff]
    %v3203 = vld [vmem:[#allocation7 + $0x2d4] sm:$0xf]
    %v3204 = vld [vmem:[#allocation7 + $0x2d8] sm:$0xff]
    %v3205 = vld [vmem:[#allocation7 + $0x2e0] sm:$0xff]
    %v3206 = vld [vmem:[#allocation7 + $0x2e8] sm:$0xff]
    %v3207 = vld [vmem:[#allocation7 + $0x2f0] sm:$0xf]
    %v3208 = vld [vmem:[#allocation7 + $0x2f4] sm:$0xff]
    %v3209 = vld [vmem:[#allocation7 + $0x2fc] sm:$0xff]
    %v3210 = vld [vmem:[#allocation7 + $0x304] sm:$0xff]
    %v3211 = vld [vmem:[#allocation7 + $0x30c] sm:$0xf]
    %v3212 = vld [vmem:[#allocation7 + $0x310] sm:$0xff]
    %v3213 = vld [vmem:[#allocation7 + $0x318] sm:$0xff]
    %v3214 = vld [vmem:[#allocation7 + $0x320] sm:$0xff]
    %v3215 = vld [vmem:[#allocation7 + $0x328] sm:$0xf]
    %v3216 = vld [vmem:[#allocation7 + $0x32c] sm:$0xff]
    %v3217 = vld [vmem:[#allocation7 + $0x334] sm:$0xff]
    %v3218 = vld [vmem:[#allocation7 + $0x33c] sm:$0xff]
    %v3219 = vld [vmem:[#allocation7 + $0x344] sm:$0xf]
    %v3220 = vld [vmem:[#allocation7 + $0x348] sm:$0xff]
    %v3221 = vld [vmem:[#allocation7 + $0x350] sm:$0xff]
    %v3222 = vld [vmem:[#allocation7 + $0x358] sm:$0xff]
    %v3223 = vld [vmem:[#allocation7 + $0x360] sm:$0xf]
    %v3224 = vld [vmem:[#allocation7 + $0x364] sm:$0xff]
    %v3225 = vld [vmem:[#allocation7 + $0x36c] sm:$0xff]
    %v3226 = vld [vmem:[#allocation7 + $0x374] sm:$0xff]
    %v3227 = vld [vmem:[#allocation7 + $0x37c] sm:$0xf]
    %v3228 = vld [vmem:[#allocation7 + $0x380] sm:$0xff]
    %v3229 = vld [vmem:[#allocation7 + $0x388] sm:$0xff]
    %v3230 = vld [vmem:[#allocation7 + $0x390] sm:$0xff]
    %v3231 = vld [vmem:[#allocation7 + $0x398] sm:$0xf]
    %v3232 = vld [vmem:[#allocation7 + $0x39c] sm:$0xff]
    %v3233 = vld [vmem:[#allocation7 + $0x3a4] sm:$0xff]
    %v3234 = vld [vmem:[#allocation7 + $0x3ac] sm:$0xff]
    %v3235 = vld [vmem:[#allocation7 + $0x3b4] sm:$0xf]
    %v3236 = vld [vmem:[#allocation7 + $0x3b8] sm:$0xff]
    %v3237 = vld [vmem:[#allocation7 + $0x3c0] sm:$0xff]
    %v3238 = vld [vmem:[#allocation7 + $0x3c8] sm:$0xff]
    %v3239 = vld [vmem:[#allocation7 + $0x3d0] sm:$0xf]
    %v3240 = vld [vmem:[#allocation7 + $0x3d4] sm:$0xff]
    %v3241 = vld [vmem:[#allocation7 + $0x3dc] sm:$0xff]
    %v3242 = vld [vmem:[#allocation7 + $0x3e4] sm:$0xff]
    %v3243 = vld [vmem:[#allocation7 + $0x3ec] sm:$0xf]
    %v3244 = vld [vmem:[#allocation7 + $0x3f0] sm:$0xff]
    %v3245 = vld [vmem:[#allocation7 + $0x3f8] sm:$0xff]
    %v3246 = vld [vmem:[#allocation7 + $0x400] sm:$0xff]
    %v3247 = vld [vmem:[#allocation7 + $0x408] sm:$0xf]
    %v3248 = vld [vmem:[#allocation7 + $0x40c] sm:$0xff]
    %v3249 = vld [vmem:[#allocation7 + $0x414] sm:$0xff]
    %v3250 = vld [vmem:[#allocation7 + $0x41c] sm:$0xff]
    %v3251 = vld [vmem:[#allocation7 + $0x424] sm:$0xf]
    %v3252 = vld [vmem:[#allocation7 + $0x428] sm:$0xff]
    %v3253 = vld [vmem:[#allocation7 + $0x430] sm:$0xff]
    %v3254 = vld [vmem:[#allocation7 + $0x438] sm:$0xff]
    %v3255 = vld [vmem:[#allocation7 + $0x440] sm:$0xf]
    %v3256 = vld [vmem:[#allocation7 + $0x444] sm:$0xff]
    %v3257 = vld [vmem:[#allocation7 + $0x44c] sm:$0xff]
    %v3258 = vld [vmem:[#allocation7 + $0x454] sm:$0xff]
    %v3259 = vld [vmem:[#allocation7 + $0x45c] sm:$0xf]
    %v3260 = vld [vmem:[#allocation7 + $0x460] sm:$0xff]
    %v3261 = vld [vmem:[#allocation7 + $0x468] sm:$0xff]
    %v3262 = vld [vmem:[#allocation7 + $0x470] sm:$0xff]
    %v3263 = vld [vmem:[#allocation7 + $0x478] sm:$0xf]
    %v3264 = vld [vmem:[#allocation7 + $0x47c] sm:$0xff]
    %v3265 = vld [vmem:[#allocation7 + $0x484] sm:$0xff]
    %v3266 = vld [vmem:[#allocation7 + $0x48c] sm:$0xff]
    %v3267 = vld [vmem:[#allocation7 + $0x494] sm:$0xf]
    %v3268 = vld [vmem:[#allocation7 + $0x498] sm:$0xff]
    %v3269 = vld [vmem:[#allocation7 + $0x4a0] sm:$0xff]
    %v3270 = vld [vmem:[#allocation7 + $0x4a8] sm:$0xff]
    %v3271 = vld [vmem:[#allocation7 + $0x4b0] sm:$0xf]
    %v3272 = vld [vmem:[#allocation7 + $0x4b4] sm:$0xff]
    %v3273 = vld [vmem:[#allocation7 + $0x4bc] sm:$0xff]
    %v3274 = vld [vmem:[#allocation7 + $0x4c4] sm:$0xff]
    %v3275 = vld [vmem:[#allocation7 + $0x4cc] sm:$0xf]
    %v3276 = vld [vmem:[#allocation7 + $0x4d0] sm:$0xff]
    %v3277 = vld [vmem:[#allocation7 + $0x4d8] sm:$0xff]
    %v3278 = vld [vmem:[#allocation7 + $0x4e0] sm:$0xff]
    %v3279 = vld [vmem:[#allocation7 + $0x4e8] sm:$0xf]
    %v3280 = vld [vmem:[#allocation7 + $0x4ec] sm:$0xff]
    %v3281 = vld [vmem:[#allocation7 + $0x4f4] sm:$0xff]
    %v3282 = vld [vmem:[#allocation7 + $0x4fc] sm:$0xff]
    %v3283 = vld [vmem:[#allocation7 + $0x504] sm:$0xf]
    %v3284 = vld [vmem:[#allocation7 + $0x508] sm:$0xff]
    %v3285 = vld [vmem:[#allocation7 + $0x510] sm:$0xff]
    %v3286 = vld [vmem:[#allocation7 + $0x518] sm:$0xff]
    %v3287 = vld [vmem:[#allocation7 + $0x520] sm:$0xf]
    %v3288 = vld [vmem:[#allocation7 + $0x524] sm:$0xff]
    %v3289 = vld [vmem:[#allocation7 + $0x52c] sm:$0xff]
    %v3290 = vld [vmem:[#allocation7 + $0x534] sm:$0xff]
    %v3291 = vld [vmem:[#allocation7 + $0x53c] sm:$0xf]
    %v3292 = vld [vmem:[#allocation7 + $0x540] sm:$0xff]
    %v3293 = vld [vmem:[#allocation7 + $0x548] sm:$0xff]
    %v3294 = vld [vmem:[#allocation7 + $0x550] sm:$0xff]
    %v3295 = vld [vmem:[#allocation7 + $0x558] sm:$0xf]
    %v3296 = vld [vmem:[#allocation7 + $0x55c] sm:$0xff]
    %v3297 = vld [vmem:[#allocation7 + $0x564] sm:$0xff]
    %v3298 = vld [vmem:[#allocation7 + $0x56c] sm:$0xff]
    %v3299 = vld [vmem:[#allocation7 + $0x574] sm:$0xf]
    %v3300 = vld [vmem:[#allocation7 + $0x578] sm:$0xff]
    %v3301 = vld [vmem:[#allocation7 + $0x580] sm:$0xff]
    %v3302 = vld [vmem:[#allocation7 + $0x588] sm:$0xff]
    %v3303 = vld [vmem:[#allocation7 + $0x590] sm:$0xf]
    %v3304 = vld [vmem:[#allocation7 + $0x594] sm:$0xff]
    %v3305 = vld [vmem:[#allocation7 + $0x59c] sm:$0xff]
    %v3306 = vld [vmem:[#allocation7 + $0x5a4] sm:$0xff]
    %v3307 = vld [vmem:[#allocation7 + $0x5ac] sm:$0xf]
    %v3308 = vld [vmem:[#allocation7 + $0x5b0] sm:$0xff]
    %v3309 = vld [vmem:[#allocation7 + $0x5b8] sm:$0xff]
    %v3310 = vld [vmem:[#allocation7 + $0x5c0] sm:$0xff]
    %v3311 = vld [vmem:[#allocation7 + $0x5c8] sm:$0xf]
    %v3312 = vld [vmem:[#allocation7 + $0x5cc] sm:$0xff]
    %v3313 = vld [vmem:[#allocation7 + $0x5d4] sm:$0xff]
    %v3314 = vld [vmem:[#allocation7 + $0x5dc] sm:$0xff]
    %v3315 = vld [vmem:[#allocation7 + $0x5e4] sm:$0xf]
    %v3316 = vld [vmem:[#allocation7 + $0x5e8] sm:$0xff]
    %v3317 = vld [vmem:[#allocation7 + $0x5f0] sm:$0xff]
    %v3318 = vld [vmem:[#allocation7 + $0x5f8] sm:$0xff]
    %v3319 = vld [vmem:[#allocation7 + $0x600] sm:$0xf]
    %v3320 = vld [vmem:[#allocation7 + $0x604] sm:$0xff]
    %v3321 = vld [vmem:[#allocation7 + $0x60c] sm:$0xff]
    %v3322 = vld [vmem:[#allocation7 + $0x614] sm:$0xff]
    %v3323 = vld [vmem:[#allocation7 + $0x61c] sm:$0xf]
    %v3324 = vld [vmem:[#allocation7 + $0x620] sm:$0xff]
    %v3325 = vld [vmem:[#allocation7 + $0x628] sm:$0xff]
    %v3326 = vld [vmem:[#allocation7 + $0x630] sm:$0xff]
    %v3327 = vld [vmem:[#allocation7 + $0x638] sm:$0xf]
    %v3328 = vld [vmem:[#allocation7 + $0x63c] sm:$0xff]
    %v3329 = vld [vmem:[#allocation7 + $0x644] sm:$0xff]
    %v3330 = vld [vmem:[#allocation7 + $0x64c] sm:$0xff]
    %v3331 = vld [vmem:[#allocation7 + $0x654] sm:$0xf]
    %v3332 = vld [vmem:[#allocation7 + $0x658] sm:$0xff]
    %v3333 = vld [vmem:[#allocation7 + $0x660] sm:$0xff]
    %v3334 = vld [vmem:[#allocation7 + $0x668] sm:$0xff]
    %v3335 = vld [vmem:[#allocation7 + $0x670] sm:$0xf]
    %v3336 = vld [vmem:[#allocation7 + $0x674] sm:$0xff]
    %v3337 = vld [vmem:[#allocation7 + $0x67c] sm:$0xff]
    %v3338 = vld [vmem:[#allocation7 + $0x684] sm:$0xff]
    %v3339 = vld [vmem:[#allocation7 + $0x68c] sm:$0xf]
    %v3340 = vld [vmem:[#allocation7 + $0x690] sm:$0xff]
    %v3341 = vld [vmem:[#allocation7 + $0x698] sm:$0xff]
    %v3342 = vld [vmem:[#allocation7 + $0x6a0] sm:$0xff]
    %v3343 = vld [vmem:[#allocation7 + $0x6a8] sm:$0xf]
    %v3344 = vld [vmem:[#allocation7 + $0x6ac] sm:$0xff]
    %v3345 = vld [vmem:[#allocation7 + $0x6b4] sm:$0xff]
    %v3346 = vld [vmem:[#allocation7 + $0x6bc] sm:$0xff]
    %v3347 = vld [vmem:[#allocation7 + $0x6c4] sm:$0xf]
    %v3348 = vld [vmem:[#allocation7 + $0x6c8] sm:$0xff]
    %v3349 = vld [vmem:[#allocation7 + $0x6d0] sm:$0xff]
    %v3350 = vld [vmem:[#allocation7 + $0x6d8] sm:$0xff]
    %v3351 = vld [vmem:[#allocation7 + $0x6e0] sm:$0xf]
    %v3352 = vld [vmem:[#allocation7 + $0x6e4] sm:$0xff]
    %v3353 = vld [vmem:[#allocation7 + $0x6ec] sm:$0xff]
    %v3354 = vld [vmem:[#allocation7 + $0x6f4] sm:$0xff]
    %v3355 = vld [vmem:[#allocation7 + $0x6fc] sm:$0xf]
    %v3356 = vld [vmem:[%s16] sm:$0xff]
    %v3358 = vlaneseq
    %v3359 = vshrl.u32 %v3358, 7
    %v3360 = vsub.s32 0, %v3359
    %v3361 = vrot.slane %v3356, %v3360
    %v3362 = vlaneseq
    %v3363 = vshrl.u32 %v3362, 7
    %v3364 = vsub.s32 1, %v3363
    %v3365 = vrot.slane %v3356, %v3364
    %v3366 = vlaneseq
    %v3367 = vshrl.u32 %v3366, 7
    %v3368 = vsub.s32 2, %v3367
    %v3369 = vrot.slane %v3356, %v3368
    %v3370 = vlaneseq
    %v3371 = vshrl.u32 %v3370, 7
    %v3372 = vsub.s32 3, %v3371
    %v3373 = vrot.slane %v3356, %v3372
    %v3374 = vlaneseq
    %v3375 = vshrl.u32 %v3374, 7
    %v3376 = vsub.s32 4, %v3375
    %v3377 = vrot.slane %v3356, %v3376
    %v3378 = vlaneseq
    %v3379 = vshrl.u32 %v3378, 7
    %v3380 = vsub.s32 5, %v3379
    %v3381 = vrot.slane %v3356, %v3380
    %v3382 = vlaneseq
    %v3383 = vshrl.u32 %v3382, 7
    %v3384 = vsub.s32 6, %v3383
    %v3385 = vrot.slane %v3356, %v3384
    %v3649 = vunpack.c.l.b16 %v3100
    %v3650 = vunpack.c.h.b16 %v3100
    %v3651 = vunpack.c.l.b16 %v3101
    %v3652 = vunpack.c.h.b16 %v3101
    %v3653 = vunpack.c.l.b16 %v3102
    %v3654 = vunpack.c.h.b16 %v3102
    %v3655 = vunpack.c.l.b16 %v3103
    %v3656 = vunpack.c.l.b16 %v3104
    %v3657 = vunpack.c.h.b16 %v3104
    %v3658 = vunpack.c.l.b16 %v3105
    %v3659 = vunpack.c.h.b16 %v3105
    %v3660 = vunpack.c.l.b16 %v3106
    %v3661 = vunpack.c.h.b16 %v3106
    %v3662 = vunpack.c.l.b16 %v3107
    %v3663 = vunpack.c.l.b16 %v3108
    %v3664 = vunpack.c.h.b16 %v3108
    %v3665 = vunpack.c.l.b16 %v3109
    %v3666 = vunpack.c.h.b16 %v3109
    %v3667 = vunpack.c.l.b16 %v3110
    %v3668 = vunpack.c.h.b16 %v3110
    %v3669 = vunpack.c.l.b16 %v3111
    %v3670 = vunpack.c.l.b16 %v3112
    %v3671 = vunpack.c.h.b16 %v3112
    %v3672 = vunpack.c.l.b16 %v3113
    %v3673 = vunpack.c.h.b16 %v3113
    %v3674 = vunpack.c.l.b16 %v3114
    %v3675 = vunpack.c.h.b16 %v3114
    %v3676 = vunpack.c.l.b16 %v3115
    %v3677 = vunpack.c.l.b16 %v3116
    %v3678 = vunpack.c.h.b16 %v3116
    %v3679 = vunpack.c.l.b16 %v3117
    %v3680 = vunpack.c.h.b16 %v3117
    %v3681 = vunpack.c.l.b16 %v3118
    %v3682 = vunpack.c.h.b16 %v3118
    %v3683 = vunpack.c.l.b16 %v3119
    %v3684 = vunpack.c.l.b16 %v3120
    %v3685 = vunpack.c.h.b16 %v3120
    %v3686 = vunpack.c.l.b16 %v3121
    %v3687 = vunpack.c.h.b16 %v3121
    %v3688 = vunpack.c.l.b16 %v3122
    %v3689 = vunpack.c.h.b16 %v3122
    %v3690 = vunpack.c.l.b16 %v3123
    %v3691 = vunpack.c.l.b16 %v3124
    %v3692 = vunpack.c.h.b16 %v3124
    %v3693 = vunpack.c.l.b16 %v3125
    %v3694 = vunpack.c.h.b16 %v3125
    %v3695 = vunpack.c.l.b16 %v3126
    %v3696 = vunpack.c.h.b16 %v3126
    %v3697 = vunpack.c.l.b16 %v3127
    %v3698 = vunpack.c.l.b16 %v3128
    %v3699 = vunpack.c.h.b16 %v3128
    %v3700 = vunpack.c.l.b16 %v3129
    %v3701 = vunpack.c.h.b16 %v3129
    %v3702 = vunpack.c.l.b16 %v3130
    %v3703 = vunpack.c.h.b16 %v3130
    %v3704 = vunpack.c.l.b16 %v3131
    %v3705 = vunpack.c.l.b16 %v3132
    %v3706 = vunpack.c.h.b16 %v3132
    %v3707 = vunpack.c.l.b16 %v3133
    %v3708 = vunpack.c.h.b16 %v3133
    %v3709 = vunpack.c.l.b16 %v3134
    %v3710 = vunpack.c.h.b16 %v3134
    %v3711 = vunpack.c.l.b16 %v3135
    %v3712 = vunpack.c.l.b16 %v3136
    %v3713 = vunpack.c.h.b16 %v3136
    %v3714 = vunpack.c.l.b16 %v3137
    %v3715 = vunpack.c.h.b16 %v3137
    %v3716 = vunpack.c.l.b16 %v3138
    %v3717 = vunpack.c.h.b16 %v3138
    %v3718 = vunpack.c.l.b16 %v3139
    %v3719 = vunpack.c.l.b16 %v3140
    %v3720 = vunpack.c.h.b16 %v3140
    %v3721 = vunpack.c.l.b16 %v3141
    %v3722 = vunpack.c.h.b16 %v3141
    %v3723 = vunpack.c.l.b16 %v3142
    %v3724 = vunpack.c.h.b16 %v3142
    %v3725 = vunpack.c.l.b16 %v3143
    %v3726 = vunpack.c.l.b16 %v3144
    %v3727 = vunpack.c.h.b16 %v3144
    %v3728 = vunpack.c.l.b16 %v3145
    %v3729 = vunpack.c.h.b16 %v3145
    %v3730 = vunpack.c.l.b16 %v3146
    %v3731 = vunpack.c.h.b16 %v3146
    %v3732 = vunpack.c.l.b16 %v3147
    %v3733 = vunpack.c.l.b16 %v3148
    %v3734 = vunpack.c.h.b16 %v3148
    %v3735 = vunpack.c.l.b16 %v3149
    %v3736 = vunpack.c.h.b16 %v3149
    %v3737 = vunpack.c.l.b16 %v3150
    %v3738 = vunpack.c.h.b16 %v3150
    %v3739 = vunpack.c.l.b16 %v3151
    %v3740 = vunpack.c.l.b16 %v3152
    %v3741 = vunpack.c.h.b16 %v3152
    %v3742 = vunpack.c.l.b16 %v3153
    %v3743 = vunpack.c.h.b16 %v3153
    %v3744 = vunpack.c.l.b16 %v3154
    %v3745 = vunpack.c.h.b16 %v3154
    %v3746 = vunpack.c.l.b16 %v3155
    %v3747 = vunpack.c.l.b16 %v3156
    %v3748 = vunpack.c.h.b16 %v3156
    %v3749 = vunpack.c.l.b16 %v3157
    %v3750 = vunpack.c.h.b16 %v3157
    %v3751 = vunpack.c.l.b16 %v3158
    %v3752 = vunpack.c.h.b16 %v3158
    %v3753 = vunpack.c.l.b16 %v3159
    %v3754 = vunpack.c.l.b16 %v3160
    %v3755 = vunpack.c.h.b16 %v3160
    %v3756 = vunpack.c.l.b16 %v3161
    %v3757 = vunpack.c.h.b16 %v3161
    %v3758 = vunpack.c.l.b16 %v3162
    %v3759 = vunpack.c.h.b16 %v3162
    %v3760 = vunpack.c.l.b16 %v3163
    %v3761 = vunpack.c.l.b16 %v3164
    %v3762 = vunpack.c.h.b16 %v3164
    %v3763 = vunpack.c.l.b16 %v3165
    %v3764 = vunpack.c.h.b16 %v3165
    %v3765 = vunpack.c.l.b16 %v3166
    %v3766 = vunpack.c.h.b16 %v3166
    %v3767 = vunpack.c.l.b16 %v3167
    %v3768 = vunpack.c.l.b16 %v3168
    %v3769 = vunpack.c.h.b16 %v3168
    %v3770 = vunpack.c.l.b16 %v3169
    %v3771 = vunpack.c.h.b16 %v3169
    %v3772 = vunpack.c.l.b16 %v3170
    %v3773 = vunpack.c.h.b16 %v3170
    %v3774 = vunpack.c.l.b16 %v3171
    %v3775 = vunpack.c.l.b16 %v3172
    %v3776 = vunpack.c.h.b16 %v3172
    %v3777 = vunpack.c.l.b16 %v3173
    %v3778 = vunpack.c.h.b16 %v3173
    %v3779 = vunpack.c.l.b16 %v3174
    %v3780 = vunpack.c.h.b16 %v3174
    %v3781 = vunpack.c.l.b16 %v3175
    %v3782 = vunpack.c.l.b16 %v3176
    %v3783 = vunpack.c.h.b16 %v3176
    %v3784 = vunpack.c.l.b16 %v3177
    %v3785 = vunpack.c.h.b16 %v3177
    %v3786 = vunpack.c.l.b16 %v3178
    %v3787 = vunpack.c.h.b16 %v3178
    %v3788 = vunpack.c.l.b16 %v3179
    %v3789 = vunpack.c.l.b16 %v3180
    %v3790 = vunpack.c.h.b16 %v3180
    %v3791 = vunpack.c.l.b16 %v3181
    %v3792 = vunpack.c.h.b16 %v3181
    %v3793 = vunpack.c.l.b16 %v3182
    %v3794 = vunpack.c.h.b16 %v3182
    %v3795 = vunpack.c.l.b16 %v3183
    %v3796 = vunpack.c.l.b16 %v3184
    %v3797 = vunpack.c.h.b16 %v3184
    %v3798 = vunpack.c.l.b16 %v3185
    %v3799 = vunpack.c.h.b16 %v3185
    %v3800 = vunpack.c.l.b16 %v3186
    %v3801 = vunpack.c.h.b16 %v3186
    %v3802 = vunpack.c.l.b16 %v3187
    %v3803 = vunpack.c.l.b16 %v3188
    %v3804 = vunpack.c.h.b16 %v3188
    %v3805 = vunpack.c.l.b16 %v3189
    %v3806 = vunpack.c.h.b16 %v3189
    %v3807 = vunpack.c.l.b16 %v3190
    %v3808 = vunpack.c.h.b16 %v3190
    %v3809 = vunpack.c.l.b16 %v3191
    %v3810 = vunpack.c.l.b16 %v3192
    %v3811 = vunpack.c.h.b16 %v3192
    %v3812 = vunpack.c.l.b16 %v3193
    %v3813 = vunpack.c.h.b16 %v3193
    %v3814 = vunpack.c.l.b16 %v3194
    %v3815 = vunpack.c.h.b16 %v3194
    %v3816 = vunpack.c.l.b16 %v3195
    %v3817 = vunpack.c.l.b16 %v3196
    %v3818 = vunpack.c.h.b16 %v3196
    %v3819 = vunpack.c.l.b16 %v3197
    %v3820 = vunpack.c.h.b16 %v3197
    %v3821 = vunpack.c.l.b16 %v3198
    %v3822 = vunpack.c.h.b16 %v3198
    %v3823 = vunpack.c.l.b16 %v3199
    %v3824 = vunpack.c.l.b16 %v3200
    %v3825 = vunpack.c.h.b16 %v3200
    %v3826 = vunpack.c.l.b16 %v3201
    %v3827 = vunpack.c.h.b16 %v3201
    %v3828 = vunpack.c.l.b16 %v3202
    %v3829 = vunpack.c.h.b16 %v3202
    %v3830 = vunpack.c.l.b16 %v3203
    %v3831 = vunpack.c.l.b16 %v3204
    %v3832 = vunpack.c.h.b16 %v3204
    %v3833 = vunpack.c.l.b16 %v3205
    %v3834 = vunpack.c.h.b16 %v3205
    %v3835 = vunpack.c.l.b16 %v3206
    %v3836 = vunpack.c.h.b16 %v3206
    %v3837 = vunpack.c.l.b16 %v3207
    %v3838 = vunpack.c.l.b16 %v3208
    %v3839 = vunpack.c.h.b16 %v3208
    %v3840 = vunpack.c.l.b16 %v3209
    %v3841 = vunpack.c.h.b16 %v3209
    %v3842 = vunpack.c.l.b16 %v3210
    %v3843 = vunpack.c.h.b16 %v3210
    %v3844 = vunpack.c.l.b16 %v3211
    %v3845 = vunpack.c.l.b16 %v3212
    %v3846 = vunpack.c.h.b16 %v3212
    %v3847 = vunpack.c.l.b16 %v3213
    %v3848 = vunpack.c.h.b16 %v3213
    %v3849 = vunpack.c.l.b16 %v3214
    %v3850 = vunpack.c.h.b16 %v3214
    %v3851 = vunpack.c.l.b16 %v3215
    %v3852 = vunpack.c.l.b16 %v3216
    %v3853 = vunpack.c.h.b16 %v3216
    %v3854 = vunpack.c.l.b16 %v3217
    %v3855 = vunpack.c.h.b16 %v3217
    %v3856 = vunpack.c.l.b16 %v3218
    %v3857 = vunpack.c.h.b16 %v3218
    %v3858 = vunpack.c.l.b16 %v3219
    %v3859 = vunpack.c.l.b16 %v3220
    %v3860 = vunpack.c.h.b16 %v3220
    %v3861 = vunpack.c.l.b16 %v3221
    %v3862 = vunpack.c.h.b16 %v3221
    %v3863 = vunpack.c.l.b16 %v3222
    %v3864 = vunpack.c.h.b16 %v3222
    %v3865 = vunpack.c.l.b16 %v3223
    %v3866 = vunpack.c.l.b16 %v3224
    %v3867 = vunpack.c.h.b16 %v3224
    %v3868 = vunpack.c.l.b16 %v3225
    %v3869 = vunpack.c.h.b16 %v3225
    %v3870 = vunpack.c.l.b16 %v3226
    %v3871 = vunpack.c.h.b16 %v3226
    %v3872 = vunpack.c.l.b16 %v3227
    %v3873 = vunpack.c.l.b16 %v3228
    %v3874 = vunpack.c.h.b16 %v3228
    %v3875 = vunpack.c.l.b16 %v3229
    %v3876 = vunpack.c.h.b16 %v3229
    %v3877 = vunpack.c.l.b16 %v3230
    %v3878 = vunpack.c.h.b16 %v3230
    %v3879 = vunpack.c.l.b16 %v3231
    %v3880 = vunpack.c.l.b16 %v3232
    %v3881 = vunpack.c.h.b16 %v3232
    %v3882 = vunpack.c.l.b16 %v3233
    %v3883 = vunpack.c.h.b16 %v3233
    %v3884 = vunpack.c.l.b16 %v3234
    %v3885 = vunpack.c.h.b16 %v3234
    %v3886 = vunpack.c.l.b16 %v3235
    %v3887 = vunpack.c.l.b16 %v3236
    %v3888 = vunpack.c.h.b16 %v3236
    %v3889 = vunpack.c.l.b16 %v3237
    %v3890 = vunpack.c.h.b16 %v3237
    %v3891 = vunpack.c.l.b16 %v3238
    %v3892 = vunpack.c.h.b16 %v3238
    %v3893 = vunpack.c.l.b16 %v3239
    %v3894 = vunpack.c.l.b16 %v3240
    %v3895 = vunpack.c.h.b16 %v3240
    %v3896 = vunpack.c.l.b16 %v3241
    %v3897 = vunpack.c.h.b16 %v3241
    %v3898 = vunpack.c.l.b16 %v3242
    %v3899 = vunpack.c.h.b16 %v3242
    %v3900 = vunpack.c.l.b16 %v3243
    %v3901 = vunpack.c.l.b16 %v3244
    %v3902 = vunpack.c.h.b16 %v3244
    %v3903 = vunpack.c.l.b16 %v3245
    %v3904 = vunpack.c.h.b16 %v3245
    %v3905 = vunpack.c.l.b16 %v3246
    %v3906 = vunpack.c.h.b16 %v3246
    %v3907 = vunpack.c.l.b16 %v3247
    %v3908 = vunpack.c.l.b16 %v3248
    %v3909 = vunpack.c.h.b16 %v3248
    %v3910 = vunpack.c.l.b16 %v3249
    %v3911 = vunpack.c.h.b16 %v3249
    %v3912 = vunpack.c.l.b16 %v3250
    %v3913 = vunpack.c.h.b16 %v3250
    %v3914 = vunpack.c.l.b16 %v3251
    %v3915 = vunpack.c.l.b16 %v3252
    %v3916 = vunpack.c.h.b16 %v3252
    %v3917 = vunpack.c.l.b16 %v3253
    %v3918 = vunpack.c.h.b16 %v3253
    %v3919 = vunpack.c.l.b16 %v3254
    %v3920 = vunpack.c.h.b16 %v3254
    %v3921 = vunpack.c.l.b16 %v3255
    %v3922 = vunpack.c.l.b16 %v3256
    %v3923 = vunpack.c.h.b16 %v3256
    %v3924 = vunpack.c.l.b16 %v3257
    %v3925 = vunpack.c.h.b16 %v3257
    %v3926 = vunpack.c.l.b16 %v3258
    %v3927 = vunpack.c.h.b16 %v3258
    %v3928 = vunpack.c.l.b16 %v3259
    %v3929 = vunpack.c.l.b16 %v3260
    %v3930 = vunpack.c.h.b16 %v3260
    %v3931 = vunpack.c.l.b16 %v3261
    %v3932 = vunpack.c.h.b16 %v3261
    %v3933 = vunpack.c.l.b16 %v3262
    %v3934 = vunpack.c.h.b16 %v3262
    %v3935 = vunpack.c.l.b16 %v3263
    %v3936 = vunpack.c.l.b16 %v3264
    %v3937 = vunpack.c.h.b16 %v3264
    %v3938 = vunpack.c.l.b16 %v3265
    %v3939 = vunpack.c.h.b16 %v3265
    %v3940 = vunpack.c.l.b16 %v3266
    %v3941 = vunpack.c.h.b16 %v3266
    %v3942 = vunpack.c.l.b16 %v3267
    %v3943 = vunpack.c.l.b16 %v3268
    %v3944 = vunpack.c.h.b16 %v3268
    %v3945 = vunpack.c.l.b16 %v3269
    %v3946 = vunpack.c.h.b16 %v3269
    %v3947 = vunpack.c.l.b16 %v3270
    %v3948 = vunpack.c.h.b16 %v3270
    %v3949 = vunpack.c.l.b16 %v3271
    %v3950 = vunpack.c.l.b16 %v3272
    %v3951 = vunpack.c.h.b16 %v3272
    %v3952 = vunpack.c.l.b16 %v3273
    %v3953 = vunpack.c.h.b16 %v3273
    %v3954 = vunpack.c.l.b16 %v3274
    %v3955 = vunpack.c.h.b16 %v3274
    %v3956 = vunpack.c.l.b16 %v3275
    %v3957 = vunpack.c.l.b16 %v3276
    %v3958 = vunpack.c.h.b16 %v3276
    %v3959 = vunpack.c.l.b16 %v3277
    %v3960 = vunpack.c.h.b16 %v3277
    %v3961 = vunpack.c.l.b16 %v3278
    %v3962 = vunpack.c.h.b16 %v3278
    %v3963 = vunpack.c.l.b16 %v3279
    %v3964 = vunpack.c.l.b16 %v3280
    %v3965 = vunpack.c.h.b16 %v3280
    %v3966 = vunpack.c.l.b16 %v3281
    %v3967 = vunpack.c.h.b16 %v3281
    %v3968 = vunpack.c.l.b16 %v3282
    %v3969 = vunpack.c.h.b16 %v3282
    %v3970 = vunpack.c.l.b16 %v3283
    %v3971 = vunpack.c.l.b16 %v3284
    %v3972 = vunpack.c.h.b16 %v3284
    %v3973 = vunpack.c.l.b16 %v3285
    %v3974 = vunpack.c.h.b16 %v3285
    %v3975 = vunpack.c.l.b16 %v3286
    %v3976 = vunpack.c.h.b16 %v3286
    %v3977 = vunpack.c.l.b16 %v3287
    %v3978 = vunpack.c.l.b16 %v3288
    %v3979 = vunpack.c.h.b16 %v3288
    %v3980 = vunpack.c.l.b16 %v3289
    %v3981 = vunpack.c.h.b16 %v3289
    %v3982 = vunpack.c.l.b16 %v3290
    %v3983 = vunpack.c.h.b16 %v3290
    %v3984 = vunpack.c.l.b16 %v3291
    %v3985 = vunpack.c.l.b16 %v3292
    %v3986 = vunpack.c.h.b16 %v3292
    %v3987 = vunpack.c.l.b16 %v3293
    %v3988 = vunpack.c.h.b16 %v3293
    %v3989 = vunpack.c.l.b16 %v3294
    %v3990 = vunpack.c.h.b16 %v3294
    %v3991 = vunpack.c.l.b16 %v3295
    %v3992 = vunpack.c.l.b16 %v3296
    %v3993 = vunpack.c.h.b16 %v3296
    %v3994 = vunpack.c.l.b16 %v3297
    %v3995 = vunpack.c.h.b16 %v3297
    %v3996 = vunpack.c.l.b16 %v3298
    %v3997 = vunpack.c.h.b16 %v3298
    %v3998 = vunpack.c.l.b16 %v3299
    %v3999 = vunpack.c.l.b16 %v3300
    %v4000 = vunpack.c.h.b16 %v3300
    %v4001 = vunpack.c.l.b16 %v3301
    %v4002 = vunpack.c.h.b16 %v3301
    %v4003 = vunpack.c.l.b16 %v3302
    %v4004 = vunpack.c.h.b16 %v3302
    %v4005 = vunpack.c.l.b16 %v3303
    %v4006 = vunpack.c.l.b16 %v3304
    %v4007 = vunpack.c.h.b16 %v3304
    %v4008 = vunpack.c.l.b16 %v3305
    %v4009 = vunpack.c.h.b16 %v3305
    %v4010 = vunpack.c.l.b16 %v3306
    %v4011 = vunpack.c.h.b16 %v3306
    %v4012 = vunpack.c.l.b16 %v3307
    %v4013 = vunpack.c.l.b16 %v3308
    %v4014 = vunpack.c.h.b16 %v3308
    %v4015 = vunpack.c.l.b16 %v3309
    %v4016 = vunpack.c.h.b16 %v3309
    %v4017 = vunpack.c.l.b16 %v3310
    %v4018 = vunpack.c.h.b16 %v3310
    %v4019 = vunpack.c.l.b16 %v3311
    %v4020 = vunpack.c.l.b16 %v3312
    %v4021 = vunpack.c.h.b16 %v3312
    %v4022 = vunpack.c.l.b16 %v3313
    %v4023 = vunpack.c.h.b16 %v3313
    %v4024 = vunpack.c.l.b16 %v3314
    %v4025 = vunpack.c.h.b16 %v3314
    %v4026 = vunpack.c.l.b16 %v3315
    %v4027 = vunpack.c.l.b16 %v3316
    %v4028 = vunpack.c.h.b16 %v3316
    %v4029 = vunpack.c.l.b16 %v3317
    %v4030 = vunpack.c.h.b16 %v3317
    %v4031 = vunpack.c.l.b16 %v3318
    %v4032 = vunpack.c.h.b16 %v3318
    %v4033 = vunpack.c.l.b16 %v3319
    %v4034 = vunpack.c.l.b16 %v3320
    %v4035 = vunpack.c.h.b16 %v3320
    %v4036 = vunpack.c.l.b16 %v3321
    %v4037 = vunpack.c.h.b16 %v3321
    %v4038 = vunpack.c.l.b16 %v3322
    %v4039 = vunpack.c.h.b16 %v3322
    %v4040 = vunpack.c.l.b16 %v3323
    %v4041 = vunpack.c.l.b16 %v3324
    %v4042 = vunpack.c.h.b16 %v3324
    %v4043 = vunpack.c.l.b16 %v3325
    %v4044 = vunpack.c.h.b16 %v3325
    %v4045 = vunpack.c.l.b16 %v3326
    %v4046 = vunpack.c.h.b16 %v3326
    %v4047 = vunpack.c.l.b16 %v3327
    %v4048 = vunpack.c.l.b16 %v3328
    %v4049 = vunpack.c.h.b16 %v3328
    %v4050 = vunpack.c.l.b16 %v3329
    %v4051 = vunpack.c.h.b16 %v3329
    %v4052 = vunpack.c.l.b16 %v3330
    %v4053 = vunpack.c.h.b16 %v3330
    %v4054 = vunpack.c.l.b16 %v3331
    %v4055 = vunpack.c.l.b16 %v3332
    %v4056 = vunpack.c.h.b16 %v3332
    %v4057 = vunpack.c.l.b16 %v3333
    %v4058 = vunpack.c.h.b16 %v3333
    %v4059 = vunpack.c.l.b16 %v3334
    %v4060 = vunpack.c.h.b16 %v3334
    %v4061 = vunpack.c.l.b16 %v3335
    %v4062 = vunpack.c.l.b16 %v3336
    %v4063 = vunpack.c.h.b16 %v3336
    %v4064 = vunpack.c.l.b16 %v3337
    %v4065 = vunpack.c.h.b16 %v3337
    %v4066 = vunpack.c.l.b16 %v3338
    %v4067 = vunpack.c.h.b16 %v3338
    %v4068 = vunpack.c.l.b16 %v3339
    %v4069 = vunpack.c.l.b16 %v3340
    %v4070 = vunpack.c.h.b16 %v3340
    %v4071 = vunpack.c.l.b16 %v3341
    %v4072 = vunpack.c.h.b16 %v3341
    %v4073 = vunpack.c.l.b16 %v3342
    %v4074 = vunpack.c.h.b16 %v3342
    %v4075 = vunpack.c.l.b16 %v3343
    %v4076 = vunpack.c.l.b16 %v3344
    %v4077 = vunpack.c.h.b16 %v3344
    %v4078 = vunpack.c.l.b16 %v3345
    %v4079 = vunpack.c.h.b16 %v3345
    %v4080 = vunpack.c.l.b16 %v3346
    %v4081 = vunpack.c.h.b16 %v3346
    %v4082 = vunpack.c.l.b16 %v3347
    %v4083 = vunpack.c.l.b16 %v3348
    %v4084 = vunpack.c.h.b16 %v3348
    %v4085 = vunpack.c.l.b16 %v3349
    %v4086 = vunpack.c.h.b16 %v3349
    %v4087 = vunpack.c.l.b16 %v3350
    %v4088 = vunpack.c.h.b16 %v3350
    %v4089 = vunpack.c.l.b16 %v3351
    %v4090 = vunpack.c.l.b16 %v3352
    %v4091 = vunpack.c.h.b16 %v3352
    %v4092 = vunpack.c.l.b16 %v3353
    %v4093 = vunpack.c.h.b16 %v3353
    %v4094 = vunpack.c.l.b16 %v3354
    %v4095 = vunpack.c.h.b16 %v3354
    %v4096 = vunpack.c.l.b16 %v3355
    %v4097 = vpack.c.b16 %v3656, %v3649
    %v4098 = vpack.c.b16 %v3657, %v3650
    %v4099 = vpack.c.b16 %v3658, %v3651
    %v4100 = vpack.c.b16 %v3659, %v3652
    %v4101 = vpack.c.b16 %v3660, %v3653
    %v4102 = vpack.c.b16 %v3661, %v3654
    %v4103 = vpack.c.b16 %v3662, %v3655
    %v4104 = vpack.c.b16 %v3670, %v3663
    %v4105 = vpack.c.b16 %v3671, %v3664
    %v4106 = vpack.c.b16 %v3672, %v3665
    %v4107 = vpack.c.b16 %v3673, %v3666
    %v4108 = vpack.c.b16 %v3674, %v3667
    %v4109 = vpack.c.b16 %v3675, %v3668
    %v4110 = vpack.c.b16 %v3676, %v3669
    %v4111 = vpack.c.b16 %v3684, %v3677
    %v4112 = vpack.c.b16 %v3685, %v3678
    %v4113 = vpack.c.b16 %v3686, %v3679
    %v4114 = vpack.c.b16 %v3687, %v3680
    %v4115 = vpack.c.b16 %v3688, %v3681
    %v4116 = vpack.c.b16 %v3689, %v3682
    %v4117 = vpack.c.b16 %v3690, %v3683
    %v4118 = vpack.c.b16 %v3698, %v3691
    %v4119 = vpack.c.b16 %v3699, %v3692
    %v4120 = vpack.c.b16 %v3700, %v3693
    %v4121 = vpack.c.b16 %v3701, %v3694
    %v4122 = vpack.c.b16 %v3702, %v3695
    %v4123 = vpack.c.b16 %v3703, %v3696
    %v4124 = vpack.c.b16 %v3704, %v3697
    %v4125 = vpack.c.b16 %v3712, %v3705
    %v4126 = vpack.c.b16 %v3713, %v3706
    %v4127 = vpack.c.b16 %v3714, %v3707
    %v4128 = vpack.c.b16 %v3715, %v3708
    %v4129 = vpack.c.b16 %v3716, %v3709
    %v4130 = vpack.c.b16 %v3717, %v3710
    %v4131 = vpack.c.b16 %v3718, %v3711
    %v4132 = vpack.c.b16 %v3726, %v3719
    %v4133 = vpack.c.b16 %v3727, %v3720
    %v4134 = vpack.c.b16 %v3728, %v3721
    %v4135 = vpack.c.b16 %v3729, %v3722
    %v4136 = vpack.c.b16 %v3730, %v3723
    %v4137 = vpack.c.b16 %v3731, %v3724
    %v4138 = vpack.c.b16 %v3732, %v3725
    %v4139 = vpack.c.b16 %v3740, %v3733
    %v4140 = vpack.c.b16 %v3741, %v3734
    %v4141 = vpack.c.b16 %v3742, %v3735
    %v4142 = vpack.c.b16 %v3743, %v3736
    %v4143 = vpack.c.b16 %v3744, %v3737
    %v4144 = vpack.c.b16 %v3745, %v3738
    %v4145 = vpack.c.b16 %v3746, %v3739
    %v4146 = vpack.c.b16 %v3754, %v3747
    %v4147 = vpack.c.b16 %v3755, %v3748
    %v4148 = vpack.c.b16 %v3756, %v3749
    %v4149 = vpack.c.b16 %v3757, %v3750
    %v4150 = vpack.c.b16 %v3758, %v3751
    %v4151 = vpack.c.b16 %v3759, %v3752
    %v4152 = vpack.c.b16 %v3760, %v3753
    %v4153 = vpack.c.b16 %v3768, %v3761
    %v4154 = vpack.c.b16 %v3769, %v3762
    %v4155 = vpack.c.b16 %v3770, %v3763
    %v4156 = vpack.c.b16 %v3771, %v3764
    %v4157 = vpack.c.b16 %v3772, %v3765
    %v4158 = vpack.c.b16 %v3773, %v3766
    %v4159 = vpack.c.b16 %v3774, %v3767
    %v4160 = vpack.c.b16 %v3782, %v3775
    %v4161 = vpack.c.b16 %v3783, %v3776
    %v4162 = vpack.c.b16 %v3784, %v3777
    %v4163 = vpack.c.b16 %v3785, %v3778
    %v4164 = vpack.c.b16 %v3786, %v3779
    %v4165 = vpack.c.b16 %v3787, %v3780
    %v4166 = vpack.c.b16 %v3788, %v3781
    %v4167 = vpack.c.b16 %v3796, %v3789
    %v4168 = vpack.c.b16 %v3797, %v3790
    %v4169 = vpack.c.b16 %v3798, %v3791
    %v4170 = vpack.c.b16 %v3799, %v3792
    %v4171 = vpack.c.b16 %v3800, %v3793
    %v4172 = vpack.c.b16 %v3801, %v3794
    %v4173 = vpack.c.b16 %v3802, %v3795
    %v4174 = vpack.c.b16 %v3810, %v3803
    %v4175 = vpack.c.b16 %v3811, %v3804
    %v4176 = vpack.c.b16 %v3812, %v3805
    %v4177 = vpack.c.b16 %v3813, %v3806
    %v4178 = vpack.c.b16 %v3814, %v3807
    %v4179 = vpack.c.b16 %v3815, %v3808
    %v4180 = vpack.c.b16 %v3816, %v3809
    %v4181 = vpack.c.b16 %v3824, %v3817
    %v4182 = vpack.c.b16 %v3825, %v3818
    %v4183 = vpack.c.b16 %v3826, %v3819
    %v4184 = vpack.c.b16 %v3827, %v3820
    %v4185 = vpack.c.b16 %v3828, %v3821
    %v4186 = vpack.c.b16 %v3829, %v3822
    %v4187 = vpack.c.b16 %v3830, %v3823
    %v4188 = vpack.c.b16 %v3838, %v3831
    %v4189 = vpack.c.b16 %v3839, %v3832
    %v4190 = vpack.c.b16 %v3840, %v3833
    %v4191 = vpack.c.b16 %v3841, %v3834
    %v4192 = vpack.c.b16 %v3842, %v3835
    %v4193 = vpack.c.b16 %v3843, %v3836
    %v4194 = vpack.c.b16 %v3844, %v3837
    %v4195 = vpack.c.b16 %v3852, %v3845
    %v4196 = vpack.c.b16 %v3853, %v3846
    %v4197 = vpack.c.b16 %v3854, %v3847
    %v4198 = vpack.c.b16 %v3855, %v3848
    %v4199 = vpack.c.b16 %v3856, %v3849
    %v4200 = vpack.c.b16 %v3857, %v3850
    %v4201 = vpack.c.b16 %v3858, %v3851
    %v4202 = vpack.c.b16 %v3866, %v3859
    %v4203 = vpack.c.b16 %v3867, %v3860
    %v4204 = vpack.c.b16 %v3868, %v3861
    %v4205 = vpack.c.b16 %v3869, %v3862
    %v4206 = vpack.c.b16 %v3870, %v3863
    %v4207 = vpack.c.b16 %v3871, %v3864
    %v4208 = vpack.c.b16 %v3872, %v3865
    %v4209 = vpack.c.b16 %v3880, %v3873
    %v4210 = vpack.c.b16 %v3881, %v3874
    %v4211 = vpack.c.b16 %v3882, %v3875
    %v4212 = vpack.c.b16 %v3883, %v3876
    %v4213 = vpack.c.b16 %v3884, %v3877
    %v4214 = vpack.c.b16 %v3885, %v3878
    %v4215 = vpack.c.b16 %v3886, %v3879
    %v4216 = vpack.c.b16 %v3894, %v3887
    %v4217 = vpack.c.b16 %v3895, %v3888
    %v4218 = vpack.c.b16 %v3896, %v3889
    %v4219 = vpack.c.b16 %v3897, %v3890
    %v4220 = vpack.c.b16 %v3898, %v3891
    %v4221 = vpack.c.b16 %v3899, %v3892
    %v4222 = vpack.c.b16 %v3900, %v3893
    %v4223 = vpack.c.b16 %v3908, %v3901
    %v4224 = vpack.c.b16 %v3909, %v3902
    %v4225 = vpack.c.b16 %v3910, %v3903
    %v4226 = vpack.c.b16 %v3911, %v3904
    %v4227 = vpack.c.b16 %v3912, %v3905
    %v4228 = vpack.c.b16 %v3913, %v3906
    %v4229 = vpack.c.b16 %v3914, %v3907
    %v4230 = vpack.c.b16 %v3922, %v3915
    %v4231 = vpack.c.b16 %v3923, %v3916
    %v4232 = vpack.c.b16 %v3924, %v3917
    %v4233 = vpack.c.b16 %v3925, %v3918
    %v4234 = vpack.c.b16 %v3926, %v3919
    %v4235 = vpack.c.b16 %v3927, %v3920
    %v4236 = vpack.c.b16 %v3928, %v3921
    %v4237 = vpack.c.b16 %v3936, %v3929
    %v4238 = vpack.c.b16 %v3937, %v3930
    %v4239 = vpack.c.b16 %v3938, %v3931
    %v4240 = vpack.c.b16 %v3939, %v3932
    %v4241 = vpack.c.b16 %v3940, %v3933
    %v4242 = vpack.c.b16 %v3941, %v3934
    %v4243 = vpack.c.b16 %v3942, %v3935
    %v4244 = vpack.c.b16 %v3950, %v3943
    %v4245 = vpack.c.b16 %v3951, %v3944
    %v4246 = vpack.c.b16 %v3952, %v3945
    %v4247 = vpack.c.b16 %v3953, %v3946
    %v4248 = vpack.c.b16 %v3954, %v3947
    %v4249 = vpack.c.b16 %v3955, %v3948
    %v4250 = vpack.c.b16 %v3956, %v3949
    %v4251 = vpack.c.b16 %v3964, %v3957
    %v4252 = vpack.c.b16 %v3965, %v3958
    %v4253 = vpack.c.b16 %v3966, %v3959
    %v4254 = vpack.c.b16 %v3967, %v3960
    %v4255 = vpack.c.b16 %v3968, %v3961
    %v4256 = vpack.c.b16 %v3969, %v3962
    %v4257 = vpack.c.b16 %v3970, %v3963
    %v4258 = vpack.c.b16 %v3978, %v3971
    %v4259 = vpack.c.b16 %v3979, %v3972
    %v4260 = vpack.c.b16 %v3980, %v3973
    %v4261 = vpack.c.b16 %v3981, %v3974
    %v4262 = vpack.c.b16 %v3982, %v3975
    %v4263 = vpack.c.b16 %v3983, %v3976
    %v4264 = vpack.c.b16 %v3984, %v3977
    %v4265 = vpack.c.b16 %v3992, %v3985
    %v4266 = vpack.c.b16 %v3993, %v3986
    %v4267 = vpack.c.b16 %v3994, %v3987
    %v4268 = vpack.c.b16 %v3995, %v3988
    %v4269 = vpack.c.b16 %v3996, %v3989
    %v4270 = vpack.c.b16 %v3997, %v3990
    %v4271 = vpack.c.b16 %v3998, %v3991
    %v4272 = vpack.c.b16 %v4006, %v3999
    %v4273 = vpack.c.b16 %v4007, %v4000
    %v4274 = vpack.c.b16 %v4008, %v4001
    %v4275 = vpack.c.b16 %v4009, %v4002
    %v4276 = vpack.c.b16 %v4010, %v4003
    %v4277 = vpack.c.b16 %v4011, %v4004
    %v4278 = vpack.c.b16 %v4012, %v4005
    %v4279 = vpack.c.b16 %v4020, %v4013
    %v4280 = vpack.c.b16 %v4021, %v4014
    %v4281 = vpack.c.b16 %v4022, %v4015
    %v4282 = vpack.c.b16 %v4023, %v4016
    %v4283 = vpack.c.b16 %v4024, %v4017
    %v4284 = vpack.c.b16 %v4025, %v4018
    %v4285 = vpack.c.b16 %v4026, %v4019
    %v4286 = vpack.c.b16 %v4034, %v4027
    %v4287 = vpack.c.b16 %v4035, %v4028
    %v4288 = vpack.c.b16 %v4036, %v4029
    %v4289 = vpack.c.b16 %v4037, %v4030
    %v4290 = vpack.c.b16 %v4038, %v4031
    %v4291 = vpack.c.b16 %v4039, %v4032
    %v4292 = vpack.c.b16 %v4040, %v4033
    %v4293 = vpack.c.b16 %v4048, %v4041
    %v4294 = vpack.c.b16 %v4049, %v4042
    %v4295 = vpack.c.b16 %v4050, %v4043
    %v4296 = vpack.c.b16 %v4051, %v4044
    %v4297 = vpack.c.b16 %v4052, %v4045
    %v4298 = vpack.c.b16 %v4053, %v4046
    %v4299 = vpack.c.b16 %v4054, %v4047
    %v4300 = vpack.c.b16 %v4062, %v4055
    %v4301 = vpack.c.b16 %v4063, %v4056
    %v4302 = vpack.c.b16 %v4064, %v4057
    %v4303 = vpack.c.b16 %v4065, %v4058
    %v4304 = vpack.c.b16 %v4066, %v4059
    %v4305 = vpack.c.b16 %v4067, %v4060
    %v4306 = vpack.c.b16 %v4068, %v4061
    %v4307 = vpack.c.b16 %v4076, %v4069
    %v4308 = vpack.c.b16 %v4077, %v4070
    %v4309 = vpack.c.b16 %v4078, %v4071
    %v4310 = vpack.c.b16 %v4079, %v4072
    %v4311 = vpack.c.b16 %v4080, %v4073
    %v4312 = vpack.c.b16 %v4081, %v4074
    %v4313 = vpack.c.b16 %v4082, %v4075
    %v4314 = vpack.c.b16 %v4090, %v4083
    %v4315 = vpack.c.b16 %v4091, %v4084
    %v4316 = vpack.c.b16 %v4092, %v4085
    %v4317 = vpack.c.b16 %v4093, %v4086
    %v4318 = vpack.c.b16 %v4094, %v4087
    %v4319 = vpack.c.b16 %v4095, %v4088
    %v4320 = vpack.c.b16 %v4096, %v4089
    %4545 = vmatprep.subr.bf16.mxu0 %v4147
    %4546 = vmatpush1.bf16.msra.mxu0 %v4146
    %4547 = vmatprep.subr.bf16.mxu0 %v4140
    %4548 = vmatpush1.bf16.msra.mxu0 %v4139
    %4549 = vmatprep.subr.bf16.mxu0 %v4133
    %4550 = vmatpush1.bf16.msra.mxu0 %v4132
    %4551 = vmatprep.subr.bf16.mxu0 %v4126
    %4552 = vmatpush1.bf16.msra.mxu0 %v4125
    %4553 = vmatprep.subr.bf16.mxu0 %v4119
    %4554 = vmatpush1.bf16.msra.mxu0 %v4118
    %4555 = vmatprep.subr.bf16.mxu0 %v4112
    %4556 = vmatpush1.bf16.msra.mxu0 %v4111
    %4557 = vmatprep.subr.bf16.mxu0 %v4105
    %4558 = vmatpush1.bf16.msra.mxu0 %v4104
    %4559 = vmatprep.subr.bf16.mxu0 %v4098
    %4560 = vmatpush1.bf16.msra.mxu0 %v4097
    %4561 = vmatprep.subr.bf16.mxu0 %v4203
    %4562 = vmatpush2.bf16.msra.mxu0 %v4202
    %4563 = vmatprep.subr.bf16.mxu0 %v4196
    %4564 = vmatpush2.bf16.msra.mxu0 %v4195
    %4565 = vmatprep.subr.bf16.mxu0 %v4189
    %4566 = vmatpush2.bf16.msra.mxu0 %v4188
    %4567 = vmatprep.subr.bf16.mxu0 %v4182
    %4568 = vmatpush2.bf16.msra.mxu0 %v4181
    %4569 = vmatprep.subr.bf16.mxu0 %v4175
    %4570 = vmatpush2.bf16.msra.mxu0 %v4174
    %4571 = vmatprep.subr.bf16.mxu0 %v4168
    %4572 = vmatpush2.bf16.msra.mxu0 %v4167
    %4573 = vmatprep.subr.bf16.mxu0 %v4161
    %4574 = vmatpush2.bf16.msra.mxu0 %v4160
    %4575 = vmatprep.subr.bf16.mxu0 %v4154
    %4576 = vmatpush2.bf16.msra.mxu0 %v4153
    %4577 = vmatprep.mubr.bf16.mxu0 %v3097
    %4578 = vmatmul.mubr.bf16.gmra.mxu0 %v3096
    %v4579 = vpop.f32.mrf.mxu0
    %v4580 = vadd.f32 %v3361, %v4579
    %v4581 = vpop.f32.mrf.mxu0
    %v4582 = vadd.f32 %v3365, %v4581
    %v4583 = vpop.f32.mrf.mxu0
    %v4584 = vpop.f32.mrf.mxu0
    %4585 = vdwg.mxu0
    %4586 = vmatprep.subr.bf16.mxu0 %v4259
    %4587 = vmatpush1.bf16.msra.mxu0 %v4258
    %4588 = vmatprep.subr.bf16.mxu0 %v4252
    %4589 = vmatpush1.bf16.msra.mxu0 %v4251
    %4590 = vmatprep.subr.bf16.mxu0 %v4245
    %4591 = vmatpush1.bf16.msra.mxu0 %v4244
    %4592 = vmatprep.subr.bf16.mxu0 %v4238
    %4593 = vmatpush1.bf16.msra.mxu0 %v4237
    %4594 = vmatprep.subr.bf16.mxu0 %v4231
    %4595 = vmatpush1.bf16.msra.mxu0 %v4230
    %4596 = vmatprep.subr.bf16.mxu0 %v4224
    %4597 = vmatpush1.bf16.msra.mxu0 %v4223
    %4598 = vmatprep.subr.bf16.mxu0 %v4217
    %4599 = vmatpush1.bf16.msra.mxu0 %v4216
    %4600 = vmatprep.subr.bf16.mxu0 %v4210
    %4601 = vmatpush1.bf16.msra.mxu0 %v4209
    %4602 = vmatprep.subr.bf16.mxu0 %v4315
    %4603 = vmatpush2.bf16.msra.mxu0 %v4314
    %4604 = vmatprep.subr.bf16.mxu0 %v4308
    %4605 = vmatpush2.bf16.msra.mxu0 %v4307
    %4606 = vmatprep.subr.bf16.mxu0 %v4301
    %4607 = vmatpush2.bf16.msra.mxu0 %v4300
    %4608 = vmatprep.subr.bf16.mxu0 %v4294
    %4609 = vmatpush2.bf16.msra.mxu0 %v4293
    %4610 = vmatprep.subr.bf16.mxu0 %v4287
    %4611 = vmatpush2.bf16.msra.mxu0 %v4286
    %4612 = vmatprep.subr.bf16.mxu0 %v4280
    %4613 = vmatpush2.bf16.msra.mxu0 %v4279
    %4614 = vmatprep.subr.bf16.mxu0 %v4273
    %4615 = vmatpush2.bf16.msra.mxu0 %v4272
    %4616 = vmatprep.subr.bf16.mxu0 %v4266
    %4617 = vmatpush2.bf16.msra.mxu0 %v4265
    %4618 = vmatprep.mubr.bf16.mxu0 %v3099
    %4619 = vmatmul.mubr.bf16.gmra.mxu0 %v3098
    %v4620 = vpop.f32.mrf.mxu0
    %v4621 = vadd.f32 %v4580, %v4620
    %v4622 = vpop.f32.mrf.mxu0
    %v4623 = vadd.f32 %v4582, %v4622
    %v4624 = vpop.f32.mrf.mxu0
    %v4625 = vpop.f32.mrf.mxu0
    %4626 = vdwg.mxu0
    %4627 = vmatprep.subr.bf16.mxu0 %v4149
    %4628 = vmatpush1.bf16.msra.mxu0 %v4148
    %4629 = vmatprep.subr.bf16.mxu0 %v4142
    %4630 = vmatpush1.bf16.msra.mxu0 %v4141
    %4631 = vmatprep.subr.bf16.mxu0 %v4135
    %4632 = vmatpush1.bf16.msra.mxu0 %v4134
    %4633 = vmatprep.subr.bf16.mxu0 %v4128
    %4634 = vmatpush1.bf16.msra.mxu0 %v4127
    %4635 = vmatprep.subr.bf16.mxu0 %v4121
    %4636 = vmatpush1.bf16.msra.mxu0 %v4120
    %4637 = vmatprep.subr.bf16.mxu0 %v4114
    %4638 = vmatpush1.bf16.msra.mxu0 %v4113
    %4639 = vmatprep.subr.bf16.mxu0 %v4107
    %4640 = vmatpush1.bf16.msra.mxu0 %v4106
    %4641 = vmatprep.subr.bf16.mxu0 %v4100
    %4642 = vmatpush1.bf16.msra.mxu0 %v4099
    %4643 = vmatprep.subr.bf16.mxu0 %v4205
    %4644 = vmatpush2.bf16.msra.mxu0 %v4204
    %4645 = vmatprep.subr.bf16.mxu0 %v4198
    %4646 = vmatpush2.bf16.msra.mxu0 %v4197
    %4647 = vmatprep.subr.bf16.mxu0 %v4191
    %4648 = vmatpush2.bf16.msra.mxu0 %v4190
    %4649 = vmatprep.subr.bf16.mxu0 %v4184
    %4650 = vmatpush2.bf16.msra.mxu0 %v4183
    %4651 = vmatprep.subr.bf16.mxu0 %v4177
    %4652 = vmatpush2.bf16.msra.mxu0 %v4176
    %4653 = vmatprep.subr.bf16.mxu0 %v4170
    %4654 = vmatpush2.bf16.msra.mxu0 %v4169
    %4655 = vmatprep.subr.bf16.mxu0 %v4163
    %4656 = vmatpush2.bf16.msra.mxu0 %v4162
    %4657 = vmatprep.subr.bf16.mxu0 %v4156
    %4658 = vmatpush2.bf16.msra.mxu0 %v4155
    %4659 = vmatprep.mubr.bf16.mxu0 %v3097
    %4660 = vmatmul.mubr.bf16.gmra.mxu0 %v3096
    %v4661 = vpop.f32.mrf.mxu0
    %v4662 = vadd.f32 %v3369, %v4661
    %v4663 = vpop.f32.mrf.mxu0
    %v4664 = vadd.f32 %v3373, %v4663
    %v4665 = vpop.f32.mrf.mxu0
    %v4666 = vpop.f32.mrf.mxu0
    %4667 = vdwg.mxu0
    %4668 = vmatprep.subr.bf16.mxu0 %v4261
    %4669 = vmatpush1.bf16.msra.mxu0 %v4260
    %4670 = vmatprep.subr.bf16.mxu0 %v4254
    %4671 = vmatpush1.bf16.msra.mxu0 %v4253
    %4672 = vmatprep.subr.bf16.mxu0 %v4247
    %4673 = vmatpush1.bf16.msra.mxu0 %v4246
    %4674 = vmatprep.subr.bf16.mxu0 %v4240
    %4675 = vmatpush1.bf16.msra.mxu0 %v4239
    %4676 = vmatprep.subr.bf16.mxu0 %v4233
    %4677 = vmatpush1.bf16.msra.mxu0 %v4232
    %4678 = vmatprep.subr.bf16.mxu0 %v4226
    %4679 = vmatpush1.bf16.msra.mxu0 %v4225
    %4680 = vmatprep.subr.bf16.mxu0 %v4219
    %4681 = vmatpush1.bf16.msra.mxu0 %v4218
    %4682 = vmatprep.subr.bf16.mxu0 %v4212
    %4683 = vmatpush1.bf16.msra.mxu0 %v4211
    %4684 = vmatprep.subr.bf16.mxu0 %v4317
    %4685 = vmatpush2.bf16.msra.mxu0 %v4316
    %4686 = vmatprep.subr.bf16.mxu0 %v4310
    %4687 = vmatpush2.bf16.msra.mxu0 %v4309
    %4688 = vmatprep.subr.bf16.mxu0 %v4303
    %4689 = vmatpush2.bf16.msra.mxu0 %v4302
    %4690 = vmatprep.subr.bf16.mxu0 %v4296
    %4691 = vmatpush2.bf16.msra.mxu0 %v4295
    %4692 = vmatprep.subr.bf16.mxu0 %v4289
    %4693 = vmatpush2.bf16.msra.mxu0 %v4288
    %4694 = vmatprep.subr.bf16.mxu0 %v4282
    %4695 = vmatpush2.bf16.msra.mxu0 %v4281
    %4696 = vmatprep.subr.bf16.mxu0 %v4275
    %4697 = vmatpush2.bf16.msra.mxu0 %v4274
    %4698 = vmatprep.subr.bf16.mxu0 %v4268
    %4699 = vmatpush2.bf16.msra.mxu0 %v4267
    %4700 = vmatprep.mubr.bf16.mxu0 %v3099
    %4701 = vmatmul.mubr.bf16.gmra.mxu0 %v3098
    %v4702 = vpop.f32.mrf.mxu0
    %v4703 = vadd.f32 %v4662, %v4702
    %v4704 = vpop.f32.mrf.mxu0
    %v4705 = vadd.f32 %v4664, %v4704
    %v4706 = vpop.f32.mrf.mxu0
    %v4707 = vpop.f32.mrf.mxu0
    %4708 = vdwg.mxu0
    %4709 = vmatprep.subr.bf16.mxu0 %v4151
    %4710 = vmatpush1.bf16.msra.mxu0 %v4150
    %4711 = vmatprep.subr.bf16.mxu0 %v4144
    %4712 = vmatpush1.bf16.msra.mxu0 %v4143
    %4713 = vmatprep.subr.bf16.mxu0 %v4137
    %4714 = vmatpush1.bf16.msra.mxu0 %v4136
    %4715 = vmatprep.subr.bf16.mxu0 %v4130
    %4716 = vmatpush1.bf16.msra.mxu0 %v4129
    %4717 = vmatprep.subr.bf16.mxu0 %v4123
    %4718 = vmatpush1.bf16.msra.mxu0 %v4122
    %4719 = vmatprep.subr.bf16.mxu0 %v4116
    %4720 = vmatpush1.bf16.msra.mxu0 %v4115
    %4721 = vmatprep.subr.bf16.mxu0 %v4109
    %4722 = vmatpush1.bf16.msra.mxu0 %v4108
    %4723 = vmatprep.subr.bf16.mxu0 %v4102
    %4724 = vmatpush1.bf16.msra.mxu0 %v4101
    %4725 = vmatprep.subr.bf16.mxu0 %v4207
    %4726 = vmatpush2.bf16.msra.mxu0 %v4206
    %4727 = vmatprep.subr.bf16.mxu0 %v4200
    %4728 = vmatpush2.bf16.msra.mxu0 %v4199
    %4729 = vmatprep.subr.bf16.mxu0 %v4193
    %4730 = vmatpush2.bf16.msra.mxu0 %v4192
    %4731 = vmatprep.subr.bf16.mxu0 %v4186
    %4732 = vmatpush2.bf16.msra.mxu0 %v4185
    %4733 = vmatprep.subr.bf16.mxu0 %v4179
    %4734 = vmatpush2.bf16.msra.mxu0 %v4178
    %4735 = vmatprep.subr.bf16.mxu0 %v4172
    %4736 = vmatpush2.bf16.msra.mxu0 %v4171
    %4737 = vmatprep.subr.bf16.mxu0 %v4165
    %4738 = vmatpush2.bf16.msra.mxu0 %v4164
    %4739 = vmatprep.subr.bf16.mxu0 %v4158
    %4740 = vmatpush2.bf16.msra.mxu0 %v4157
    %4741 = vmatprep.mubr.bf16.mxu0 %v3097
    %4742 = vmatmul.mubr.bf16.gmra.mxu0 %v3096
    %v4743 = vpop.f32.mrf.mxu0
    %v4744 = vadd.f32 %v3377, %v4743
    %v4745 = vpop.f32.mrf.mxu0
    %v4746 = vadd.f32 %v3381, %v4745
    %v4747 = vpop.f32.mrf.mxu0
    %v4748 = vpop.f32.mrf.mxu0
    %4749 = vdwg.mxu0
    %4750 = vmatprep.subr.bf16.mxu0 %v4263
    %4751 = vmatpush1.bf16.msra.mxu0 %v4262
    %4752 = vmatprep.subr.bf16.mxu0 %v4256
    %4753 = vmatpush1.bf16.msra.mxu0 %v4255
    %4754 = vmatprep.subr.bf16.mxu0 %v4249
    %4755 = vmatpush1.bf16.msra.mxu0 %v4248
    %4756 = vmatprep.subr.bf16.mxu0 %v4242
    %4757 = vmatpush1.bf16.msra.mxu0 %v4241
    %4758 = vmatprep.subr.bf16.mxu0 %v4235
    %4759 = vmatpush1.bf16.msra.mxu0 %v4234
    %4760 = vmatprep.subr.bf16.mxu0 %v4228
    %4761 = vmatpush1.bf16.msra.mxu0 %v4227
    %4762 = vmatprep.subr.bf16.mxu0 %v4221
    %4763 = vmatpush1.bf16.msra.mxu0 %v4220
    %4764 = vmatprep.subr.bf16.mxu0 %v4214
    %4765 = vmatpush1.bf16.msra.mxu0 %v4213
    %4766 = vmatprep.subr.bf16.mxu0 %v4319
    %4767 = vmatpush2.bf16.msra.mxu0 %v4318
    %4768 = vmatprep.subr.bf16.mxu0 %v4312
    %4769 = vmatpush2.bf16.msra.mxu0 %v4311
    %4770 = vmatprep.subr.bf16.mxu0 %v4305
    %4771 = vmatpush2.bf16.msra.mxu0 %v4304
    %4772 = vmatprep.subr.bf16.mxu0 %v4298
    %4773 = vmatpush2.bf16.msra.mxu0 %v4297
    %4774 = vmatprep.subr.bf16.mxu0 %v4291
    %4775 = vmatpush2.bf16.msra.mxu0 %v4290
    %4776 = vmatprep.subr.bf16.mxu0 %v4284
    %4777 = vmatpush2.bf16.msra.mxu0 %v4283
    %4778 = vmatprep.subr.bf16.mxu0 %v4277
    %4779 = vmatpush2.bf16.msra.mxu0 %v4276
    %4780 = vmatprep.subr.bf16.mxu0 %v4270
    %4781 = vmatpush2.bf16.msra.mxu0 %v4269
    %4782 = vmatprep.mubr.bf16.mxu0 %v3099
    %4783 = vmatmul.mubr.bf16.gmra.mxu0 %v3098
    %v4784 = vpop.f32.mrf.mxu0
    %v4785 = vadd.f32 %v4744, %v4784
    %v4786 = vpop.f32.mrf.mxu0
    %v4787 = vadd.f32 %v4746, %v4786
    %v4788 = vpop.f32.mrf.mxu0
    %v4789 = vpop.f32.mrf.mxu0
    %4790 = vdwg.mxu0
    %4791 = vmatprep.subr.bf16.mxu0 0
    %4792 = vmatpush1.bf16.msra.mxu0 %v4152
    %4793 = vmatprep.subr.bf16.mxu0 0
    %4794 = vmatpush1.bf16.msra.mxu0 %v4145
    %4795 = vmatprep.subr.bf16.mxu0 0
    %4796 = vmatpush1.bf16.msra.mxu0 %v4138
    %4797 = vmatprep.subr.bf16.mxu0 0
    %4798 = vmatpush1.bf16.msra.mxu0 %v4131
    %4799 = vmatprep.subr.bf16.mxu0 0
    %4800 = vmatpush1.bf16.msra.mxu0 %v4124
    %4801 = vmatprep.subr.bf16.mxu0 0
    %4802 = vmatpush1.bf16.msra.mxu0 %v4117
    %4803 = vmatprep.subr.bf16.mxu0 0
    %4804 = vmatpush1.bf16.msra.mxu0 %v4110
    %4805 = vmatprep.subr.bf16.mxu0 0
    %4806 = vmatpush1.bf16.msra.mxu0 %v4103
    %4807 = vmatprep.subr.bf16.mxu0 0
    %4808 = vmatpush2.bf16.msra.mxu0 %v4208
    %4809 = vmatprep.subr.bf16.mxu0 0
    %4810 = vmatpush2.bf16.msra.mxu0 %v4201
    %4811 = vmatprep.subr.bf16.mxu0 0
    %4812 = vmatpush2.bf16.msra.mxu0 %v4194
    %4813 = vmatprep.subr.bf16.mxu0 0
    %4814 = vmatpush2.bf16.msra.mxu0 %v4187
    %4815 = vmatprep.subr.bf16.mxu0 0
    %4816 = vmatpush2.bf16.msra.mxu0 %v4180
    %4817 = vmatprep.subr.bf16.mxu0 0
    %4818 = vmatpush2.bf16.msra.mxu0 %v4173
    %4819 = vmatprep.subr.bf16.mxu0 0
    %4820 = vmatpush2.bf16.msra.mxu0 %v4166
    %4821 = vmatprep.subr.bf16.mxu0 0
    %4822 = vmatpush2.bf16.msra.mxu0 %v4159
    %4823 = vmatprep.mubr.bf16.mxu0 %v3097
    %4824 = vmatmul.mubr.bf16.gmra.mxu0 %v3096
    %v4825 = vpop.f32.mrf.mxu0
    %v4826 = vadd.f32 %v3385, %v4825
    %v4827 = vpop.f32.mrf.mxu0
    %v4828 = vpop.f32.mrf.mxu0
    %v4829 = vpop.f32.mrf.mxu0
    %4830 = vdwg.mxu0
    %4831 = vmatprep.subr.bf16.mxu0 0
    %4832 = vmatpush1.bf16.msra.mxu0 %v4264
    %4833 = vmatprep.subr.bf16.mxu0 0
    %4834 = vmatpush1.bf16.msra.mxu0 %v4257
    %4835 = vmatprep.subr.bf16.mxu0 0
    %4836 = vmatpush1.bf16.msra.mxu0 %v4250
    %4837 = vmatprep.subr.bf16.mxu0 0
    %4838 = vmatpush1.bf16.msra.mxu0 %v4243
    %4839 = vmatprep.subr.bf16.mxu0 0
    %4840 = vmatpush1.bf16.msra.mxu0 %v4236
    %4841 = vmatprep.subr.bf16.mxu0 0
    %4842 = vmatpush1.bf16.msra.mxu0 %v4229
    %4843 = vmatprep.subr.bf16.mxu0 0
    %4844 = vmatpush1.bf16.msra.mxu0 %v4222
    %4845 = vmatprep.subr.bf16.mxu0 0
    %4846 = vmatpush1.bf16.msra.mxu0 %v4215
    %4847 = vmatprep.subr.bf16.mxu0 0
    %4848 = vmatpush2.bf16.msra.mxu0 %v4320
    %4849 = vmatprep.subr.bf16.mxu0 0
    %4850 = vmatpush2.bf16.msra.mxu0 %v4313
    %4851 = vmatprep.subr.bf16.mxu0 0
    %4852 = vmatpush2.bf16.msra.mxu0 %v4306
    %4853 = vmatprep.subr.bf16.mxu0 0
    %4854 = vmatpush2.bf16.msra.mxu0 %v4299
    %4855 = vmatprep.subr.bf16.mxu0 0
    %4856 = vmatpush2.bf16.msra.mxu0 %v4292
    %4857 = vmatprep.subr.bf16.mxu0 0
    %4858 = vmatpush2.bf16.msra.mxu0 %v4285
    %4859 = vmatprep.subr.bf16.mxu0 0
    %4860 = vmatpush2.bf16.msra.mxu0 %v4278
    %4861 = vmatprep.subr.bf16.mxu0 0
    %4862 = vmatpush2.bf16.msra.mxu0 %v4271
    %4863 = vmatprep.mubr.bf16.mxu0 %v3099
    %4864 = vmatmul.mubr.bf16.gmra.mxu0 %v3098
    %v4865 = vpop.f32.mrf.mxu0
    %v4866 = vadd.f32 %v4826, %v4865
    %v4867 = vpop.f32.mrf.mxu0
    %v4868 = vpop.f32.mrf.mxu0
    %v4869 = vpop.f32.mrf.mxu0
    %4870 = vdwg.mxu0
    %v4871 = vxor.u32 %v4621, 2147483648
    %v4872 = vxor.u32 %v4623, 2147483648
    %v4873 = vxor.u32 %v4703, 2147483648
    %v4874 = vxor.u32 %v4705, 2147483648
    %v4875 = vxor.u32 %v4785, 2147483648
    %v4876 = vxor.u32 %v4787, 2147483648
    %v4877 = vxor.u32 %v4866, 2147483648
    %v4878 = vmul.f32 %v4871, 1.442695
    %v4879 = vpow.pop %v4878
    %v4880 = vmul.f32 %v4872, 1.442695
    %v4881 = vpow.pop %v4880
    %v4882 = vmul.f32 %v4873, 1.442695
    %v4883 = vpow.pop %v4882
    %v4884 = vmul.f32 %v4874, 1.442695
    %v4885 = vpow.pop %v4884
    %v4886 = vmul.f32 %v4875, 1.442695
    %v4887 = vpow.pop %v4886
    %v4888 = vmul.f32 %v4876, 1.442695
    %v4889 = vpow.pop %v4888
    %v4890 = vmul.f32 %v4877, 1.442695
    %v4891 = vpow.pop %v4890
    %v4892 = vadd.f32 %v4879, 1.0
    %v4893 = vadd.f32 %v4881, 1.0
    %v4894 = vadd.f32 %v4883, 1.0
    %v4895 = vadd.f32 %v4885, 1.0
    %v4896 = vadd.f32 %v4887, 1.0
    %v4897 = vadd.f32 %v4889, 1.0
    %v4898 = vadd.f32 %v4891, 1.0
    %v4899 = vrcp.pop %v4892
    %v4900 = vmul.f32 1.0, %v4899
    %v4901 = vrcp.pop %v4893
    %v4902 = vmul.f32 1.0, %v4901
    %v4903 = vrcp.pop %v4894
    %v4904 = vmul.f32 1.0, %v4903
    %v4905 = vrcp.pop %v4895
    %v4906 = vmul.f32 1.0, %v4905
    %v4907 = vrcp.pop %v4896
    %v4908 = vmul.f32 1.0, %v4907
    %v4909 = vrcp.pop %v4897
    %v4910 = vmul.f32 1.0, %v4909
    %v4911 = vrcp.pop %v4898
    %v4912 = vmul.f32 1.0, %v4911
    %4913 = vst [vmem:[%s17] sm:$0xff] %v4900
    %4914 = vst [vmem:[%s17 + $0x8] sm:$0xff] %v4902
    %4915 = vst [vmem:[%s17 + $0x10] sm:$0xff] %v4904
    %4916 = vst [vmem:[%s17 + $0x18] sm:$0xff] %v4906
    %4917 = vst [vmem:[%s17 + $0x20] sm:$0xff] %v4908
    %4918 = vst [vmem:[%s17 + $0x28] sm:$0xff] %v4910
    %4919 = vst.msk [vmem:[%s17 + $0x30] sm:$0xff] %vm1425, %v4912
    %vm4920 = vcmask 326656
    %4921 = vst.msk [vmem:[%s18] sm:$0xff] %vm4920, %v2443
    // Predicated region
    $region86: #{cvae_forward.1} parent=1 // pred_check
      _
    $region87: #{cvae_forward.1} parent=1 // pred_check_branch
      %4923 = sbr.rel (0) target = $region89
    $region88: #{cvae_forward.1} parent=1 // pred_region
      _
    $region89: #{cvae_forward.1} parent=1 // pred_fallthru
      _
    // Predicated region
    $region90: #{cvae_forward.1} parent=1 // pred_check
      _
    $region91: #{cvae_forward.1} parent=1 // pred_check_branch
      %4925 = sbr.rel (0) target = $region93
    $region92: #{cvae_forward.1} parent=1 // pred_region
      _
    $region93: #{cvae_forward.1} parent=1 // pred_fallthru
      _
    // Predicated region
    $region94: #{cvae_forward.1} parent=1 // pred_check
      _
    $region95: #{cvae_forward.1} parent=1 // pred_check_branch
      %4927 = sbr.rel (0) target = $region97
    $region96: #{cvae_forward.1} parent=1 // pred_region
      _
    $region97: #{cvae_forward.1} parent=1 // pred_fallthru
      _
    // Predicated region
    $region98: #{cvae_forward.1} parent=1 // pred_check
      _
    $region99: #{cvae_forward.1} parent=1 // pred_check_branch
      %4929 = sbr.rel (0) target = $region101
    $region100: #{cvae_forward.1} parent=1 // pred_region
      _
    $region101: #{cvae_forward.1} parent=1 // pred_fallthru
      _
    %4930 = vsyncpa [#allocation3], 1
    %4931 = vsyncpa [#allocation5], 1
    %4932 = vsyncpa [#allocation8], 1

</llo_original>
